<compile_context>
chip_gen: v7x
topology: tpu7x:2x2x1
jax: 0.10.0
libtpu: 0.0.40
codegen_flags: <defaults>
</compile_context>

<pallas_src>
import functools

import jax
import jax.numpy as jnp
from jax.experimental import pallas as pl
from jax.experimental.pallas import tpu as pltpu


def _lrelu(v, slope):
    return jnp.where(v >= 0, v, slope * v)


# --------------------------- fused RCAB kernel ---------------------------
def _rcab_kernel(x_ref, w1_ref, b1_ref, w2_ref, b2_ref,
                 caw1_ref, cab1_ref, caw2_ref, cab2_ref,
                 o_ref, xpad_ref, *, H, W, C):
    """One batch element per grid step; all intermediates live in VMEM."""
    HW = H * W

    def conv3x3_bias_lrelu(w_ref, b_ref):
        # xpad_ref holds the zero-padded (H+2, W+2, C) input of this conv.
        # Per-kh im2col: concat the 3 kw taps along channels -> (HW, 3C)
        # patch, then one MXU matmul (HW, 3C) x (3C, C) per kh.
        acc = jnp.zeros((HW, C), jnp.float32)
        for kh in range(3):
            slab = xpad_ref[pl.ds(kh, H), :, :]               # (H, W+2, C)
            patch = jnp.concatenate(
                [slab[:, kw:kw + W, :] for kw in range(3)], axis=-1)
            patch = patch.reshape(HW, 3 * C)                   # K = 3*C
            acc = acc + jnp.dot(patch, w_ref[kh, :, :],
                                preferred_element_type=jnp.float32)
        return _lrelu(acc + b_ref[...], 0.2)   # Conv block's LeakyReLU(0.2)

    x = x_ref[...].reshape(H, W, C)

    # ---- pad input into the VMEM halo scratch (halo zeroed every step) ----
    xpad_ref[...] = jnp.zeros_like(xpad_ref)
    xpad_ref[pl.ds(1, H), pl.ds(1, W), :] = x

    # ---- body conv 1: Conv+LReLU(0.2), then the RCAB act LeakyReLU(0.01) ----
    y1 = _lrelu(conv3x3_bias_lrelu(w1_ref, b1_ref), 0.01)      # (HW, C)

    # ---- body conv 2: reuse the same halo scratch (halo is still zero) ----
    xpad_ref[pl.ds(1, H), pl.ds(1, W), :] = y1.reshape(H, W, C)
    y2 = conv3x3_bias_lrelu(w2_ref, b2_ref)                    # (HW, C)

    # ---- CALayer: GAP -> 1x1 (C->C/r) -> ReLU -> 1x1 (C/r->C) -> sigmoid ----
    pooled = jnp.mean(y2, axis=0, keepdims=True)               # (1, C)
    hh = jnp.dot(pooled, caw1_ref[...], preferred_element_type=jnp.float32)
    hh = jnp.maximum(hh + cab1_ref[...], 0.0)                  # (1, C//r)
    ss = jnp.dot(hh, caw2_ref[...], preferred_element_type=jnp.float32)
    ss = jax.nn.sigmoid(ss + cab2_ref[...])                    # (1, C)

    # ---- channel scale + residual add, single output store ----
    out = y2 * ss + x.reshape(HW, C)
    o_ref[...] = out.reshape(1, H, W, C)


# --------------------------- public wrapper (NCHW) ---------------------------
def rcab_forward(x_nchw, params):
    x = jnp.transpose(x_nchw, (0, 2, 3, 1)).astype(jnp.float32)   # NHWC
    N, H, W, C = x.shape
    Cr = params["ca_w1"].shape[-1]

    grid_spec = pltpu.PrefetchScalarGridSpec(
        num_scalar_prefetch=0,
        grid=(N,),
        in_specs=[
            pl.BlockSpec((1, H, W, C), lambda n: (n, 0, 0, 0)),    # x
            pl.BlockSpec((3, 3 * C, C), lambda n: (0, 0, 0)),      # w1
            pl.BlockSpec((1, C), lambda n: (0, 0)),                # b1
            pl.BlockSpec((3, 3 * C, C), lambda n: (0, 0, 0)),      # w2
            pl.BlockSpec((1, C), lambda n: (0, 0)),                # b2
            pl.BlockSpec((C, Cr), lambda n: (0, 0)),               # ca_w1
            pl.BlockSpec((1, Cr), lambda n: (0, 0)),               # ca_b1
            pl.BlockSpec((Cr, C), lambda n: (0, 0)),               # ca_w2
            pl.BlockSpec((1, C), lambda n: (0, 0)),                # ca_b2
        ],
        out_specs=pl.BlockSpec((1, H, W, C), lambda n: (n, 0, 0, 0)),
        scratch_shapes=[pltpu.VMEM((H + 2, W + 2, C), jnp.float32)],
    )

    out = pl.pallas_call(
        functools.partial(_rcab_kernel, H=H, W=W, C=C),
        out_shape=jax.ShapeDtypeStruct((N, H, W, C), jnp.float32),
        grid_spec=grid_spec,
        compiler_params=pltpu.CompilerParams(
            dimension_semantics=("parallel",)),
    )(x, params["w1"], params["b1"], params["w2"], params["b2"],
      params["ca_w1"], params["ca_b1"], params["ca_w2"], params["ca_b2"])
    return jnp.transpose(out, (0, 3, 1, 2))                        # back to NCHW


# --------------------------- params & reference ---------------------------
def init_params(key, C, reduction=16):
    Cr = C // reduction
    ks = jax.random.split(key, 8)

    def he(k, shape, fan_in):
        return (2.0 / fan_in) ** 0.5 * jax.random.normal(k, shape, jnp.float32)

    p = {}
    # conv weights generated as (KH, KW, Cin, Cout) -> reshaped (KH, KW*Cin, Cout)
    p["w1"] = he(ks[0], (3, 3, C, C), 9 * C).reshape(3, 3 * C, C)
    p["b1"] = 0.1 * jax.random.normal(ks[1], (1, C), jnp.float32)
    p["w2"] = he(ks[2], (3, 3, C, C), 9 * C).reshape(3, 3 * C, C)
    p["b2"] = 0.1 * jax.random.normal(ks[3], (1, C), jnp.float32)
    p["ca_w1"] = he(ks[4], (C, Cr), C)
    p["ca_b1"] = 0.1 * jax.random.normal(ks[5], (1, Cr), jnp.float32)
    p["ca_w2"] = he(ks[6], (Cr, C), Cr)
    p["ca_b2"] = 0.1 * jax.random.normal(ks[7], (1, C), jnp.float32)
    return p


def rcab_reference(x_nchw, p):
    """Pure-JAX reference of the same forward (numeric self-check)."""
    x = jnp.transpose(x_nchw, (0, 2, 3, 1)).astype(jnp.float32)
    C = x.shape[-1]

    def conv(h, w, b):
        w4 = w.reshape(3, 3, C, C)                 # (KH, KW, Cin, Cout) == HWIO
        y = jax.lax.conv_general_dilated(
            h, w4, window_strides=(1, 1), padding="SAME",
            dimension_numbers=("NHWC", "HWIO", "NHWC"),
            precision=jax.lax.Precision.HIGHEST)
        return y + b.reshape(1, 1, 1, C)

    y1 = _lrelu(_lrelu(conv(x, p["w1"], p["b1"]), 0.2), 0.01)
    y2 = _lrelu(conv(y1, p["w2"], p["b2"]), 0.2)
    pooled = jnp.mean(y2, axis=(1, 2))                              # (N, C)
    hh = jnp.maximum(pooled @ p["ca_w1"] + p["ca_b1"], 0.0)
    ss = jax.nn.sigmoid(hh @ p["ca_w2"] + p["ca_b2"])
    out = y2 * ss[:, None, None, :] + x
    return jnp.transpose(out, (0, 3, 1, 2))


if __name__ == "__main__":
    # channels must be a multiple of reduction=16 (CALayer bottleneck C//16)
    N, C, H, W = 2, 64, 16, 16
    key = jax.random.PRNGKey(0)
    kp, kx = jax.random.split(key)
    params = init_params(kp, C)
    x = jax.random.normal(kx, (N, C, H, W), jnp.float32)

    out = jax.jit(rcab_forward)(x, params)
    jax.block_until_ready(out)
    assert out.shape == (N, C, H, W), out.shape
    assert bool(jnp.all(jnp.isfinite(out)))

    ref = rcab_reference(x, params)
    assert bool(jnp.allclose(out, ref, rtol=2e-2, atol=2e-2)), \
        float(jnp.max(jnp.abs(out - ref)))
    print("KERNEL_OK")
</pallas_src>

<mosaic_0001>
module attributes {stable_mosaic.version = 11 : i64} {
  func.func @_rcab_kernel(%arg0: i32, %arg1: memref<1x16x16x64xf32, #tpu.memory_space<vmem>>, %arg2: memref<3x192x64xf32, #tpu.memory_space<vmem>>, %arg3: memref<1x64xf32, #tpu.memory_space<vmem>>, %arg4: memref<3x192x64xf32, #tpu.memory_space<vmem>>, %arg5: memref<1x64xf32, #tpu.memory_space<vmem>>, %arg6: memref<64x4xf32, #tpu.memory_space<vmem>>, %arg7: memref<1x4xf32, #tpu.memory_space<vmem>>, %arg8: memref<4x64xf32, #tpu.memory_space<vmem>>, %arg9: memref<1x64xf32, #tpu.memory_space<vmem>>, %arg10: memref<1x16x16x64xf32, #tpu.memory_space<vmem>>, %arg11: memref<18x18x64xf32, #tpu.memory_space<vmem>>) attributes {dimension_semantics = [#tpu.dimension_semantics<parallel>], iteration_bounds = array<i64: 2>, scalar_prefetch = 0 : i64, scratch_operands = 1 : i64, tpu.core_type = #tpu.core_type<tc>, window_params = [{transform_indices = @transform_0, window_bounds = array<i64: 1, 16, 16, 64>}, {pipeline_mode = #tpu.pipeline_mode<synchronous>, transform_indices = @transform_1, window_bounds = array<i64: 3, 192, 64>}, {pipeline_mode = #tpu.pipeline_mode<synchronous>, transform_indices = @transform_2, window_bounds = array<i64: 1, 64>}, {pipeline_mode = #tpu.pipeline_mode<synchronous>, transform_indices = @transform_3, window_bounds = array<i64: 3, 192, 64>}, {pipeline_mode = #tpu.pipeline_mode<synchronous>, transform_indices = @transform_4, window_bounds = array<i64: 1, 64>}, {pipeline_mode = #tpu.pipeline_mode<synchronous>, transform_indices = @transform_5, window_bounds = array<i64: 64, 4>}, {pipeline_mode = #tpu.pipeline_mode<synchronous>, transform_indices = @transform_6, window_bounds = array<i64: 1, 4>}, {pipeline_mode = #tpu.pipeline_mode<synchronous>, transform_indices = @transform_7, window_bounds = array<i64: 4, 64>}, {pipeline_mode = #tpu.pipeline_mode<synchronous>, transform_indices = @transform_8, window_bounds = array<i64: 1, 64>}, {transform_indices = @transform_9, window_bounds = array<i64: 1, 16, 16, 64>}]} {
    %c0 = arith.constant 0 : index
    %c0_0 = arith.constant 0 : index
    %c0_1 = arith.constant 0 : index
    %c0_2 = arith.constant 0 : index
    %0 = vector.load %arg1[%c0, %c0_0, %c0_1, %c0_2] : memref<1x16x16x64xf32, #tpu.memory_space<vmem>>, vector<1x16x16x64xf32>
    %1 = vector.shape_cast %0 : vector<1x16x16x64xf32> to vector<16x16x64xf32>
    %cst = arith.constant 0.000000e+00 : f32
    %2 = vector.broadcast %cst : f32 to vector<18x18x64xf32>
    %c0_3 = arith.constant 0 : index
    %c0_4 = arith.constant 0 : index
    %c0_5 = arith.constant 0 : index
    %3 = vector.load %arg11[%c0_3, %c0_4, %c0_5] : memref<18x18x64xf32, #tpu.memory_space<vmem>>, vector<18x18x64xf32>
    tpu.vector_store %arg11[%c0_3, %c0_4, %c0_5], %2 {strides = array<i32>} : memref<18x18x64xf32, #tpu.memory_space<vmem>>, vector<18x18x64xf32>,
    %c1 = arith.constant 1 : index
    %c1_6 = arith.constant 1 : index
    %c0_7 = arith.constant 0 : index
    %4 = vector.load %arg11[%c1, %c1_6, %c0_7] : memref<18x18x64xf32, #tpu.memory_space<vmem>>, vector<16x16x64xf32>
    tpu.vector_store %arg11[%c1, %c1_6, %c0_7], %1 {strides = array<i32>} : memref<18x18x64xf32, #tpu.memory_space<vmem>>, vector<16x16x64xf32>,
    %cst_8 = arith.constant 0.000000e+00 : f32
    %5 = vector.broadcast %cst_8 : f32 to vector<256x64xf32>
    %c0_9 = arith.constant 0 : index
    %c0_10 = arith.constant 0 : index
    %c0_11 = arith.constant 0 : index
    %6 = vector.load %arg11[%c0_9, %c0_10, %c0_11] : memref<18x18x64xf32, #tpu.memory_space<vmem>>, vector<16x18x64xf32>
    %7 = vector.extract_strided_slice %6 {offsets = [0, 0, 0], sizes = [16, 16, 64], strides = [1, 1, 1]} : vector<16x18x64xf32> to vector<16x16x64xf32>
    %8 = vector.extract_strided_slice %6 {offsets = [0, 1, 0], sizes = [16, 16, 64], strides = [1, 1, 1]} : vector<16x18x64xf32> to vector<16x16x64xf32>
    %9 = vector.extract_strided_slice %6 {offsets = [0, 2, 0], sizes = [16, 16, 64], strides = [1, 1, 1]} : vector<16x18x64xf32> to vector<16x16x64xf32>
    %10 = tpu.concatenate %7, %8, %9 in 2 : vector<16x16x64xf32>, vector<16x16x64xf32>, vector<16x16x64xf32> -> vector<16x16x192xf32>
    %11 = vector.shape_cast %10 : vector<16x16x192xf32> to vector<256x192xf32>
    %c0_12 = arith.constant 0 : index
    %c0_13 = arith.constant 0 : index
    %c0_14 = arith.constant 0 : index
    %12 = vector.load %arg2[%c0_12, %c0_13, %c0_14] : memref<3x192x64xf32, #tpu.memory_space<vmem>>, vector<1x192x64xf32>
    %13 = vector.shape_cast %12 : vector<1x192x64xf32> to vector<192x64xf32>
    %cst_15 = arith.constant dense<0.000000e+00> : vector<256x64xf32>
    %14 = tpu.matmul %11, %13, %cst_15 {dimension_numbers = #tpu.dot_dimension_numbers<[1], [0], [0], [1], [0, 0, 1, 1], [], []>} : vector<256x192xf32>, vector<192x64xf32>, vector<256x64xf32> -> vector<256x64xf32>
    %15 = arith.addf %5, %14 : vector<256x64xf32>
    %c1_16 = arith.constant 1 : index
    %c0_17 = arith.constant 0 : index
    %c0_18 = arith.constant 0 : index
    %16 = vector.load %arg11[%c1_16, %c0_17, %c0_18] : memref<18x18x64xf32, #tpu.memory_space<vmem>>, vector<16x18x64xf32>
    %17 = vector.extract_strided_slice %16 {offsets = [0, 0, 0], sizes = [16, 16, 64], strides = [1, 1, 1]} : vector<16x18x64xf32> to vector<16x16x64xf32>
    %18 = vector.extract_strided_slice %16 {offsets = [0, 1, 0], sizes = [16, 16, 64], strides = [1, 1, 1]} : vector<16x18x64xf32> to vector<16x16x64xf32>
    %19 = vector.extract_strided_slice %16 {offsets = [0, 2, 0], sizes = [16, 16, 64], strides = [1, 1, 1]} : vector<16x18x64xf32> to vector<16x16x64xf32>
    %20 = tpu.concatenate %17, %18, %19 in 2 : vector<16x16x64xf32>, vector<16x16x64xf32>, vector<16x16x64xf32> -> vector<16x16x192xf32>
    %21 = vector.shape_cast %20 : vector<16x16x192xf32> to vector<256x192xf32>
    %c1_19 = arith.constant 1 : index
    %c0_20 = arith.constant 0 : index
    %c0_21 = arith.constant 0 : index
    %22 = vector.load %arg2[%c1_19, %c0_20, %c0_21] : memref<3x192x64xf32, #tpu.memory_space<vmem>>, vector<1x192x64xf32>
    %23 = vector.shape_cast %22 : vector<1x192x64xf32> to vector<192x64xf32>
    %cst_22 = arith.constant dense<0.000000e+00> : vector<256x64xf32>
    %24 = tpu.matmul %21, %23, %cst_22 {dimension_numbers = #tpu.dot_dimension_numbers<[1], [0], [0], [1], [0, 0, 1, 1], [], []>} : vector<256x192xf32>, vector<192x64xf32>, vector<256x64xf32> -> vector<256x64xf32>
    %25 = arith.addf %15, %24 : vector<256x64xf32>
    %c2 = arith.constant 2 : index
    %c0_23 = arith.constant 0 : index
    %c0_24 = arith.constant 0 : index
    %26 = vector.load %arg11[%c2, %c0_23, %c0_24] : memref<18x18x64xf32, #tpu.memory_space<vmem>>, vector<16x18x64xf32>
    %27 = vector.extract_strided_slice %26 {offsets = [0, 0, 0], sizes = [16, 16, 64], strides = [1, 1, 1]} : vector<16x18x64xf32> to vector<16x16x64xf32>
    %28 = vector.extract_strided_slice %26 {offsets = [0, 1, 0], sizes = [16, 16, 64], strides = [1, 1, 1]} : vector<16x18x64xf32> to vector<16x16x64xf32>
    %29 = vector.extract_strided_slice %26 {offsets = [0, 2, 0], sizes = [16, 16, 64], strides = [1, 1, 1]} : vector<16x18x64xf32> to vector<16x16x64xf32>
    %30 = tpu.concatenate %27, %28, %29 in 2 : vector<16x16x64xf32>, vector<16x16x64xf32>, vector<16x16x64xf32> -> vector<16x16x192xf32>
    %31 = vector.shape_cast %30 : vector<16x16x192xf32> to vector<256x192xf32>
    %c2_25 = arith.constant 2 : index
    %c0_26 = arith.constant 0 : index
    %c0_27 = arith.constant 0 : index
    %32 = vector.load %arg2[%c2_25, %c0_26, %c0_27] : memref<3x192x64xf32, #tpu.memory_space<vmem>>, vector<1x192x64xf32>
    %33 = vector.shape_cast %32 : vector<1x192x64xf32> to vector<192x64xf32>
    %cst_28 = arith.constant dense<0.000000e+00> : vector<256x64xf32>
    %34 = tpu.matmul %31, %33, %cst_28 {dimension_numbers = #tpu.dot_dimension_numbers<[1], [0], [0], [1], [0, 0, 1, 1], [], []>} : vector<256x192xf32>, vector<192x64xf32>, vector<256x64xf32> -> vector<256x64xf32>
    %35 = arith.addf %25, %34 : vector<256x64xf32>
    %c0_29 = arith.constant 0 : index
    %c0_30 = arith.constant 0 : index
    %36 = vector.load %arg3[%c0_29, %c0_30] : memref<1x64xf32, #tpu.memory_space<vmem>>, vector<1x64xf32>
    %37 = vector.broadcast %36 : vector<1x64xf32> to vector<256x64xf32>
    %38 = arith.addf %35, %37 : vector<256x64xf32>
    %cst_31 = arith.constant 0.000000e+00 : f32
    %39 = vector.broadcast %cst_31 : f32 to vector<256x64xf32>
    %40 = arith.cmpf oge, %38, %39 : vector<256x64xf32>
    %cst_32 = arith.constant 2.000000e-01 : f32
    %41 = vector.broadcast %cst_32 : f32 to vector<256x64xf32>
    %42 = arith.mulf %41, %38 : vector<256x64xf32>
    %43 = arith.select %40, %38, %42 : vector<256x64xi1>, vector<256x64xf32>
    %cst_33 = arith.constant 0.000000e+00 : f32
    %44 = vector.broadcast %cst_33 : f32 to vector<256x64xf32>
    %45 = arith.cmpf oge, %43, %44 : vector<256x64xf32>
    %cst_34 = arith.constant 0.00999999977 : f32
    %46 = vector.broadcast %cst_34 : f32 to vector<256x64xf32>
    %47 = arith.mulf %46, %43 : vector<256x64xf32>
    %48 = arith.select %45, %43, %47 : vector<256x64xi1>, vector<256x64xf32>
    %49 = vector.shape_cast %48 : vector<256x64xf32> to vector<16x16x64xf32>
    %c1_35 = arith.constant 1 : index
    %c1_36 = arith.constant 1 : index
    %c0_37 = arith.constant 0 : index
    %50 = vector.load %arg11[%c1_35, %c1_36, %c0_37] : memref<18x18x64xf32, #tpu.memory_space<vmem>>, vector<16x16x64xf32>
    tpu.vector_store %arg11[%c1_35, %c1_36, %c0_37], %49 {strides = array<i32>} : memref<18x18x64xf32, #tpu.memory_space<vmem>>, vector<16x16x64xf32>,
    %cst_38 = arith.constant 0.000000e+00 : f32
    %51 = vector.broadcast %cst_38 : f32 to vector<256x64xf32>
    %c0_39 = arith.constant 0 : index
    %c0_40 = arith.constant 0 : index
    %c0_41 = arith.constant 0 : index
    %52 = vector.load %arg11[%c0_39, %c0_40, %c0_41] : memref<18x18x64xf32, #tpu.memory_space<vmem>>, vector<16x18x64xf32>
    %53 = vector.extract_strided_slice %52 {offsets = [0, 0, 0], sizes = [16, 16, 64], strides = [1, 1, 1]} : vector<16x18x64xf32> to vector<16x16x64xf32>
    %54 = vector.extract_strided_slice %52 {offsets = [0, 1, 0], sizes = [16, 16, 64], strides = [1, 1, 1]} : vector<16x18x64xf32> to vector<16x16x64xf32>
    %55 = vector.extract_strided_slice %52 {offsets = [0, 2, 0], sizes = [16, 16, 64], strides = [1, 1, 1]} : vector<16x18x64xf32> to vector<16x16x64xf32>
    %56 = tpu.concatenate %53, %54, %55 in 2 : vector<16x16x64xf32>, vector<16x16x64xf32>, vector<16x16x64xf32> -> vector<16x16x192xf32>
    %57 = vector.shape_cast %56 : vector<16x16x192xf32> to vector<256x192xf32>
    %c0_42 = arith.constant 0 : index
    %c0_43 = arith.constant 0 : index
    %c0_44 = arith.constant 0 : index
    %58 = vector.load %arg4[%c0_42, %c0_43, %c0_44] : memref<3x192x64xf32, #tpu.memory_space<vmem>>, vector<1x192x64xf32>
    %59 = vector.shape_cast %58 : vector<1x192x64xf32> to vector<192x64xf32>
    %cst_45 = arith.constant dense<0.000000e+00> : vector<256x64xf32>
    %60 = tpu.matmul %57, %59, %cst_45 {dimension_numbers = #tpu.dot_dimension_numbers<[1], [0], [0], [1], [0, 0, 1, 1], [], []>} : vector<256x192xf32>, vector<192x64xf32>, vector<256x64xf32> -> vector<256x64xf32>
    %61 = arith.addf %51, %60 : vector<256x64xf32>
    %c1_46 = arith.constant 1 : index
    %c0_47 = arith.constant 0 : index
    %c0_48 = arith.constant 0 : index
    %62 = vector.load %arg11[%c1_46, %c0_47, %c0_48] : memref<18x18x64xf32, #tpu.memory_space<vmem>>, vector<16x18x64xf32>
    %63 = vector.extract_strided_slice %62 {offsets = [0, 0, 0], sizes = [16, 16, 64], strides = [1, 1, 1]} : vector<16x18x64xf32> to vector<16x16x64xf32>
    %64 = vector.extract_strided_slice %62 {offsets = [0, 1, 0], sizes = [16, 16, 64], strides = [1, 1, 1]} : vector<16x18x64xf32> to vector<16x16x64xf32>
    %65 = vector.extract_strided_slice %62 {offsets = [0, 2, 0], sizes = [16, 16, 64], strides = [1, 1, 1]} : vector<16x18x64xf32> to vector<16x16x64xf32>
    %66 = tpu.concatenate %63, %64, %65 in 2 : vector<16x16x64xf32>, vector<16x16x64xf32>, vector<16x16x64xf32> -> vector<16x16x192xf32>
    %67 = vector.shape_cast %66 : vector<16x16x192xf32> to vector<256x192xf32>
    %c1_49 = arith.constant 1 : index
    %c0_50 = arith.constant 0 : index
    %c0_51 = arith.constant 0 : index
    %68 = vector.load %arg4[%c1_49, %c0_50, %c0_51] : memref<3x192x64xf32, #tpu.memory_space<vmem>>, vector<1x192x64xf32>
    %69 = vector.shape_cast %68 : vector<1x192x64xf32> to vector<192x64xf32>
    %cst_52 = arith.constant dense<0.000000e+00> : vector<256x64xf32>
    %70 = tpu.matmul %67, %69, %cst_52 {dimension_numbers = #tpu.dot_dimension_numbers<[1], [0], [0], [1], [0, 0, 1, 1], [], []>} : vector<256x192xf32>, vector<192x64xf32>, vector<256x64xf32> -> vector<256x64xf32>
    %71 = arith.addf %61, %70 : vector<256x64xf32>
    %c2_53 = arith.constant 2 : index
    %c0_54 = arith.constant 0 : index
    %c0_55 = arith.constant 0 : index
    %72 = vector.load %arg11[%c2_53, %c0_54, %c0_55] : memref<18x18x64xf32, #tpu.memory_space<vmem>>, vector<16x18x64xf32>
    %73 = vector.extract_strided_slice %72 {offsets = [0, 0, 0], sizes = [16, 16, 64], strides = [1, 1, 1]} : vector<16x18x64xf32> to vector<16x16x64xf32>
    %74 = vector.extract_strided_slice %72 {offsets = [0, 1, 0], sizes = [16, 16, 64], strides = [1, 1, 1]} : vector<16x18x64xf32> to vector<16x16x64xf32>
    %75 = vector.extract_strided_slice %72 {offsets = [0, 2, 0], sizes = [16, 16, 64], strides = [1, 1, 1]} : vector<16x18x64xf32> to vector<16x16x64xf32>
    %76 = tpu.concatenate %73, %74, %75 in 2 : vector<16x16x64xf32>, vector<16x16x64xf32>, vector<16x16x64xf32> -> vector<16x16x192xf32>
    %77 = vector.shape_cast %76 : vector<16x16x192xf32> to vector<256x192xf32>
    %c2_56 = arith.constant 2 : index
    %c0_57 = arith.constant 0 : index
    %c0_58 = arith.constant 0 : index
    %78 = vector.load %arg4[%c2_56, %c0_57, %c0_58] : memref<3x192x64xf32, #tpu.memory_space<vmem>>, vector<1x192x64xf32>
    %79 = vector.shape_cast %78 : vector<1x192x64xf32> to vector<192x64xf32>
    %cst_59 = arith.constant dense<0.000000e+00> : vector<256x64xf32>
    %80 = tpu.matmul %77, %79, %cst_59 {dimension_numbers = #tpu.dot_dimension_numbers<[1], [0], [0], [1], [0, 0, 1, 1], [], []>} : vector<256x192xf32>, vector<192x64xf32>, vector<256x64xf32> -> vector<256x64xf32>
    %81 = arith.addf %71, %80 : vector<256x64xf32>
    %c0_60 = arith.constant 0 : index
    %c0_61 = arith.constant 0 : index
    %82 = vector.load %arg5[%c0_60, %c0_61] : memref<1x64xf32, #tpu.memory_space<vmem>>, vector<1x64xf32>
    %83 = vector.broadcast %82 : vector<1x64xf32> to vector<256x64xf32>
    %84 = arith.addf %81, %83 : vector<256x64xf32>
    %cst_62 = arith.constant 0.000000e+00 : f32
    %85 = vector.broadcast %cst_62 : f32 to vector<256x64xf32>
    %86 = arith.cmpf oge, %84, %85 : vector<256x64xf32>
    %cst_63 = arith.constant 2.000000e-01 : f32
    %87 = vector.broadcast %cst_63 : f32 to vector<256x64xf32>
    %88 = arith.mulf %87, %84 : vector<256x64xf32>
    %89 = arith.select %86, %84, %88 : vector<256x64xi1>, vector<256x64xf32>
    %cst_64 = arith.constant dense<0.000000e+00> : vector<64xf32>
    %90 = vector.multi_reduction <add>, %89, %cst_64 [0] : vector<256x64xf32> to vector<64xf32>
    %91 = vector.shape_cast %90 : vector<64xf32> to vector<1x64xf32>
    %cst_65 = arith.constant 2.560000e+02 : f32
    %92 = vector.broadcast %cst_65 : f32 to vector<1x64xf32>
    %93 = arith.divf %91, %92 : vector<1x64xf32>
    %c0_66 = arith.constant 0 : index
    %c0_67 = arith.constant 0 : index
    %94 = vector.load %arg6[%c0_66, %c0_67] : memref<64x4xf32, #tpu.memory_space<vmem>>, vector<64x4xf32>
    %cst_68 = arith.constant dense<0.000000e+00> : vector<1x4xf32>
    %95 = tpu.matmul %93, %94, %cst_68 {dimension_numbers = #tpu.dot_dimension_numbers<[1], [0], [0], [1], [0, 0, 1, 1], [], []>} : vector<1x64xf32>, vector<64x4xf32>, vector<1x4xf32> -> vector<1x4xf32>
    %c0_69 = arith.constant 0 : index
    %c0_70 = arith.constant 0 : index
    %96 = vector.load %arg7[%c0_69, %c0_70] : memref<1x4xf32, #tpu.memory_space<vmem>>, vector<1x4xf32>
    %97 = arith.addf %95, %96 : vector<1x4xf32>
    %cst_71 = arith.constant 0.000000e+00 : f32
    %98 = vector.broadcast %cst_71 : f32 to vector<1x4xf32>
    %99 = arith.maximumf %97, %98 : vector<1x4xf32>
    %c0_72 = arith.constant 0 : index
    %c0_73 = arith.constant 0 : index
    %100 = vector.load %arg8[%c0_72, %c0_73] : memref<4x64xf32, #tpu.memory_space<vmem>>, vector<4x64xf32>
    %cst_74 = arith.constant dense<0.000000e+00> : vector<1x64xf32>
    %101 = tpu.matmul %99, %100, %cst_74 {dimension_numbers = #tpu.dot_dimension_numbers<[1], [0], [0], [1], [0, 0, 1, 1], [], []>} : vector<1x4xf32>, vector<4x64xf32>, vector<1x64xf32> -> vector<1x64xf32>
    %c0_75 = arith.constant 0 : index
    %c0_76 = arith.constant 0 : index
    %102 = vector.load %arg9[%c0_75, %c0_76] : memref<1x64xf32, #tpu.memory_space<vmem>>, vector<1x64xf32>
    %103 = arith.addf %101, %102 : vector<1x64xf32>
    %104 = arith.negf %103 : vector<1x64xf32>
    %105 = math.exp %104 : vector<1x64xf32>
    %cst_77 = arith.constant 1.000000e+00 : f32
    %106 = vector.broadcast %cst_77 : f32 to vector<1x64xf32>
    %107 = arith.addf %106, %105 : vector<1x64xf32>
    %108 = arith.divf %106, %107 : vector<1x64xf32>
    %109 = vector.broadcast %108 : vector<1x64xf32> to vector<256x64xf32>
    %110 = arith.mulf %89, %109 : vector<256x64xf32>
    %111 = vector.shape_cast %1 : vector<16x16x64xf32> to vector<256x64xf32>
    %112 = arith.addf %110, %111 : vector<256x64xf32>
    %113 = vector.shape_cast %112 : vector<256x64xf32> to vector<1x16x16x64xf32>
    %c0_78 = arith.constant 0 : index
    %c0_79 = arith.constant 0 : index
    %c0_80 = arith.constant 0 : index
    %c0_81 = arith.constant 0 : index
    %114 = vector.load %arg10[%c0_78, %c0_79, %c0_80, %c0_81] : memref<1x16x16x64xf32, #tpu.memory_space<vmem>>, vector<1x16x16x64xf32>
    tpu.vector_store %arg10[%c0_78, %c0_79, %c0_80, %c0_81], %113 {strides = array<i32>} : memref<1x16x16x64xf32, #tpu.memory_space<vmem>>, vector<1x16x16x64xf32>,
    return
  }
  func.func @transform_0(%arg0: i32) -> (i32, i32, i32, i32) {
    %c0_i32 = arith.constant 0 : i32
    %c0_i32_0 = arith.constant 0 : i32
    %c0_i32_1 = arith.constant 0 : i32
    %c0_i32_2 = arith.constant 0 : i32
    return %arg0, %c0_i32, %c0_i32_0, %c0_i32_1 : i32, i32, i32, i32
  }
  func.func @transform_1(%arg0: i32) -> (i32, i32, i32) {
    %c0_i32 = arith.constant 0 : i32
    %c0_i32_0 = arith.constant 0 : i32
    %c0_i32_1 = arith.constant 0 : i32
    %c0_i32_2 = arith.constant 0 : i32
    return %c0_i32, %c0_i32_0, %c0_i32_1 : i32, i32, i32
  }
  func.func @transform_2(%arg0: i32) -> (i32, i32) {
    %c0_i32 = arith.constant 0 : i32
    %c0_i32_0 = arith.constant 0 : i32
    %c0_i32_1 = arith.constant 0 : i32
    return %c0_i32, %c0_i32_0 : i32, i32
  }
  func.func @transform_3(%arg0: i32) -> (i32, i32, i32) {
    %c0_i32 = arith.constant 0 : i32
    %c0_i32_0 = arith.constant 0 : i32
    %c0_i32_1 = arith.constant 0 : i32
    %c0_i32_2 = arith.constant 0 : i32
    return %c0_i32, %c0_i32_0, %c0_i32_1 : i32, i32, i32
  }
  func.func @transform_4(%arg0: i32) -> (i32, i32) {
    %c0_i32 = arith.constant 0 : i32
    %c0_i32_0 = arith.constant 0 : i32
    %c0_i32_1 = arith.constant 0 : i32
    return %c0_i32, %c0_i32_0 : i32, i32
  }
  func.func @transform_5(%arg0: i32) -> (i32, i32) {
    %c0_i32 = arith.constant 0 : i32
    %c0_i32_0 = arith.constant 0 : i32
    %c0_i32_1 = arith.constant 0 : i32
    return %c0_i32, %c0_i32_0 : i32, i32
  }
  func.func @transform_6(%arg0: i32) -> (i32, i32) {
    %c0_i32 = arith.constant 0 : i32
    %c0_i32_0 = arith.constant 0 : i32
    %c0_i32_1 = arith.constant 0 : i32
    return %c0_i32, %c0_i32_0 : i32, i32
  }
  func.func @transform_7(%arg0: i32) -> (i32, i32) {
    %c0_i32 = arith.constant 0 : i32
    %c0_i32_0 = arith.constant 0 : i32
    %c0_i32_1 = arith.constant 0 : i32
    return %c0_i32, %c0_i32_0 : i32, i32
  }
  func.func @transform_8(%arg0: i32) -> (i32, i32) {
    %c0_i32 = arith.constant 0 : i32
    %c0_i32_0 = arith.constant 0 : i32
    %c0_i32_1 = arith.constant 0 : i32
    return %c0_i32, %c0_i32_0 : i32, i32
  }
  func.func @transform_9(%arg0: i32) -> (i32, i32, i32, i32) {
    %c0_i32 = arith.constant 0 : i32
    %c0_i32_0 = arith.constant 0 : i32
    %c0_i32_1 = arith.constant 0 : i32
    %c0_i32_2 = arith.constant 0 : i32
    return %arg0, %c0_i32, %c0_i32_0, %c0_i32_1 : i32, i32, i32, i32
  }
}

</mosaic_0001>

<llo_original>
// kernel: rcab_forward.1
$region0: #{rcab_forward.1}
  #allocation0 [shape = 'u32[]', space=smem, size = 0x4, offset = 0x4, fixed_abs, tag = 'smem constant byte address 0x4 - core index']
  #allocation1 [shape = 'u32[144,128]{1,0:T(1,128)}', space=vmem, size = 0x12000, scoped, tag = 'internal scratch']
  #allocation2 [shape = 'f32[18,18,64]{2,1,0:T(8,128)}', space=vmem, size = 0x36000, scoped, tag = 'scratch operand']
  %s0 = inlined_call_operand.vmem [shape: f32[2,16,16,64], index: 0, kind: input, shape index: {}]
  %s1 = inlined_call_operand.vmem [shape: f32[3,192,64], index: 1, kind: input, shape index: {}]
  %s2 = inlined_call_operand.vmem [shape: f32[1,64], index: 2, kind: input, shape index: {}]
  %s3 = inlined_call_operand.vmem [shape: f32[3,192,64], index: 3, kind: input, shape index: {}]
  %s4 = inlined_call_operand.vmem [shape: f32[1,64], index: 4, kind: input, shape index: {}]
  %s5 = inlined_call_operand.vmem [shape: f32[64,4], index: 5, kind: input, shape index: {}]
  %s6 = inlined_call_operand.vmem [shape: f32[1,4], index: 6, kind: input, shape index: {}]
  %s7 = inlined_call_operand.vmem [shape: f32[4,64], index: 7, kind: input, shape index: {}]
  %s8 = inlined_call_operand.vmem [shape: f32[1,64], index: 8, kind: input, shape index: {}]
  %s9 = inlined_call_operand.hbm [shape: f32[2,16,16,64], index: 9, kind: output, shape index: {}]
  %s10 = sld [smem:[#allocation0]]
  $region69: #{rcab_forward.1} parent=0
    _
  %s12 = ssub.s32 1, %s10
  %s13 = scalar_select 0, %s12, %s10
  $region1: #{rcab_forward.1} parent=0
    #allocation3 [shape = 'u8[262144]{0}', space=vmem, size = 0x40000, scoped, tag = 'output window, operand 0']
    #allocation4 [shape = 's32[2]{0}', space=sflag, size = 0x8, scoped, tag = 'scoped memory for rcab_forward.1']
    %14 = vsyncpa [#allocation4], 0
    %s15 = scalar_lea.sflag [#allocation4], 1
    %16 = vsyncpa %s15, 0
    loop: start=0, step=1, limit=4
    $region2: #{rcab_forward.1} parent=1 // loop_pre_header
      _
    $region3: #{rcab_forward.1} parent=1 // loop_header
      %s18 = sphi 0, %s22
      %p19 = scmp.ge.s32.totalorder %s18, 4
      %s28 = sphi 0, %s30
      %s31 = sphi 0, %s28
      %s32 = sphi 0, %s31
      %s48 = sphi 0, %s32
      %s52 = sphi 0, %s52
      %s54 = sphi 0, %s52
      %s55 = sphi 0, %s54
      %s69 = sphi 0, %s55
      %s73 = sphi 0, %s73
      %s75 = sphi 0, %s73
      %s76 = sphi 0, %s75
      %s90 = sphi 0, %s76
      %s94 = sphi 0, %s94
      %s96 = sphi 0, %s94
      %s97 = sphi 0, %s96
      %s111 = sphi 0, %s97
      %s115 = sphi 0, %s115
      %s117 = sphi 0, %s115
      %s118 = sphi 0, %s117
      %s132 = sphi 0, %s118
      %s136 = sphi 0, %s136
      %s138 = sphi 0, %s136
      %s139 = sphi 0, %s138
      %s153 = sphi 0, %s139
      %s157 = sphi 0, %s157
      %s159 = sphi 0, %s157
      %s160 = sphi 0, %s159
      %s174 = sphi 0, %s160
      %s178 = sphi 0, %s178
      %s180 = sphi 0, %s178
      %s181 = sphi 0, %s180
      %s195 = sphi 0, %s181
      %s199 = sphi 0, %s199
      %s201 = sphi 0, %s199
      %s202 = sphi 0, %s201
      %s216 = sphi 0, %s202
      %s222 = sphi 0, %s224
      %s225 = sphi 0, %s222
      %s226 = sphi 0, %s225
      %s242 = sphi 0, %s226
    $region4: #{rcab_forward.1} parent=1 // loop_header_branch
      %21 = sbr.rel (%p19) target = $region8
    $region5: #{rcab_forward.1} parent=1 // loop_body
      %s23 = ssub.s32 %s18, 1
      %s24 = ssub.s32 %s18, 2
      %s25 = sadd.s32 %s18, 1
      %s26 = ssub.s32 %s18, %s25
      %p27 = scmp.eq.s32.totalorder %s26, 0
      %s29 = sadd.s32 %s28, 1
      %s30 = scalar_select %p27, %s28, %s29
      %p33 = pneg %p27
      %p34 = scmp.eq.s32.totalorder %s18, 1
      %p35 = por %p33, %p34
      %p36 = scmp.ne.s32.totalorder %s28, %s31
      %p37 = scmp.eq.s32.totalorder %s18, 0
      %p38 = por %p36, %p37
      %p39 = scmp.ne.s32.totalorder %s28, %s31
      %p40 = scmp.eq.s32.totalorder %s23, 1
      %p41 = por %p39, %p40
      %p42 = scmp.ne.s32.totalorder %s31, %s32
      %p43 = scmp.eq.s32.totalorder %s23, 0
      %p44 = por %p42, %p43
      %p45 = scmp.ne.s32.totalorder %s31, %s32
      %p46 = scmp.eq.s32.totalorder %s24, 1
      %p47 = por %p45, %p46
      %p49 = scmp.ne.s32.totalorder %s32, %s48
      %p50 = scmp.eq.s32.totalorder %s24, 0
      %p51 = por %p49, %p50
      %s53 = sadd.s32 %s52, 1
      %p56 = scmp.eq.s32.totalorder %s18, 1
      %p57 = scmp.ne.s32.totalorder %s52, %s54
      %p58 = scmp.eq.s32.totalorder %s18, 0
      %p59 = por %p57, %p58
      %p60 = scmp.ne.s32.totalorder %s52, %s54
      %p61 = scmp.eq.s32.totalorder %s23, 1
      %p62 = por %p60, %p61
      %p63 = scmp.ne.s32.totalorder %s54, %s55
      %p64 = scmp.eq.s32.totalorder %s23, 0
      %p65 = por %p63, %p64
      %p66 = scmp.ne.s32.totalorder %s54, %s55
      %p67 = scmp.eq.s32.totalorder %s24, 1
      %p68 = por %p66, %p67
      %p70 = scmp.ne.s32.totalorder %s55, %s69
      %p71 = scmp.eq.s32.totalorder %s24, 0
      %p72 = por %p70, %p71
      %s74 = sadd.s32 %s73, 1
      %p77 = scmp.eq.s32.totalorder %s18, 1
      %p78 = scmp.ne.s32.totalorder %s73, %s75
      %p79 = scmp.eq.s32.totalorder %s18, 0
      %p80 = por %p78, %p79
      %p81 = scmp.ne.s32.totalorder %s73, %s75
      %p82 = scmp.eq.s32.totalorder %s23, 1
      %p83 = por %p81, %p82
      %p84 = scmp.ne.s32.totalorder %s75, %s76
      %p85 = scmp.eq.s32.totalorder %s23, 0
      %p86 = por %p84, %p85
      %p87 = scmp.ne.s32.totalorder %s75, %s76
      %p88 = scmp.eq.s32.totalorder %s24, 1
      %p89 = por %p87, %p88
      %p91 = scmp.ne.s32.totalorder %s76, %s90
      %p92 = scmp.eq.s32.totalorder %s24, 0
      %p93 = por %p91, %p92
      %s95 = sadd.s32 %s94, 1
      %p98 = scmp.eq.s32.totalorder %s18, 1
      %p99 = scmp.ne.s32.totalorder %s94, %s96
      %p100 = scmp.eq.s32.totalorder %s18, 0
      %p101 = por %p99, %p100
      %p102 = scmp.ne.s32.totalorder %s94, %s96
      %p103 = scmp.eq.s32.totalorder %s23, 1
      %p104 = por %p102, %p103
      %p105 = scmp.ne.s32.totalorder %s96, %s97
      %p106 = scmp.eq.s32.totalorder %s23, 0
      %p107 = por %p105, %p106
      %p108 = scmp.ne.s32.totalorder %s96, %s97
      %p109 = scmp.eq.s32.totalorder %s24, 1
      %p110 = por %p108, %p109
      %p112 = scmp.ne.s32.totalorder %s97, %s111
      %p113 = scmp.eq.s32.totalorder %s24, 0
      %p114 = por %p112, %p113
      %s116 = sadd.s32 %s115, 1
      %p119 = scmp.eq.s32.totalorder %s18, 1
      %p120 = scmp.ne.s32.totalorder %s115, %s117
      %p121 = scmp.eq.s32.totalorder %s18, 0
      %p122 = por %p120, %p121
      %p123 = scmp.ne.s32.totalorder %s115, %s117
      %p124 = scmp.eq.s32.totalorder %s23, 1
      %p125 = por %p123, %p124
      %p126 = scmp.ne.s32.totalorder %s117, %s118
      %p127 = scmp.eq.s32.totalorder %s23, 0
      %p128 = por %p126, %p127
      %p129 = scmp.ne.s32.totalorder %s117, %s118
      %p130 = scmp.eq.s32.totalorder %s24, 1
      %p131 = por %p129, %p130
      %p133 = scmp.ne.s32.totalorder %s118, %s132
      %p134 = scmp.eq.s32.totalorder %s24, 0
      %p135 = por %p133, %p134
      %s137 = sadd.s32 %s136, 1
      %p140 = scmp.eq.s32.totalorder %s18, 1
      %p141 = scmp.ne.s32.totalorder %s136, %s138
      %p142 = scmp.eq.s32.totalorder %s18, 0
      %p143 = por %p141, %p142
      %p144 = scmp.ne.s32.totalorder %s136, %s138
      %p145 = scmp.eq.s32.totalorder %s23, 1
      %p146 = por %p144, %p145
      %p147 = scmp.ne.s32.totalorder %s138, %s139
      %p148 = scmp.eq.s32.totalorder %s23, 0
      %p149 = por %p147, %p148
      %p150 = scmp.ne.s32.totalorder %s138, %s139
      %p151 = scmp.eq.s32.totalorder %s24, 1
      %p152 = por %p150, %p151
      %p154 = scmp.ne.s32.totalorder %s139, %s153
      %p155 = scmp.eq.s32.totalorder %s24, 0
      %p156 = por %p154, %p155
      %s158 = sadd.s32 %s157, 1
      %p161 = scmp.eq.s32.totalorder %s18, 1
      %p162 = scmp.ne.s32.totalorder %s157, %s159
      %p163 = scmp.eq.s32.totalorder %s18, 0
      %p164 = por %p162, %p163
      %p165 = scmp.ne.s32.totalorder %s157, %s159
      %p166 = scmp.eq.s32.totalorder %s23, 1
      %p167 = por %p165, %p166
      %p168 = scmp.ne.s32.totalorder %s159, %s160
      %p169 = scmp.eq.s32.totalorder %s23, 0
      %p170 = por %p168, %p169
      %p171 = scmp.ne.s32.totalorder %s159, %s160
      %p172 = scmp.eq.s32.totalorder %s24, 1
      %p173 = por %p171, %p172
      %p175 = scmp.ne.s32.totalorder %s160, %s174
      %p176 = scmp.eq.s32.totalorder %s24, 0
      %p177 = por %p175, %p176
      %s179 = sadd.s32 %s178, 1
      %p182 = scmp.eq.s32.totalorder %s18, 1
      %p183 = scmp.ne.s32.totalorder %s178, %s180
      %p184 = scmp.eq.s32.totalorder %s18, 0
      %p185 = por %p183, %p184
      %p186 = scmp.ne.s32.totalorder %s178, %s180
      %p187 = scmp.eq.s32.totalorder %s23, 1
      %p188 = por %p186, %p187
      %p189 = scmp.ne.s32.totalorder %s180, %s181
      %p190 = scmp.eq.s32.totalorder %s23, 0
      %p191 = por %p189, %p190
      %p192 = scmp.ne.s32.totalorder %s180, %s181
      %p193 = scmp.eq.s32.totalorder %s24, 1
      %p194 = por %p192, %p193
      %p196 = scmp.ne.s32.totalorder %s181, %s195
      %p197 = scmp.eq.s32.totalorder %s24, 0
      %p198 = por %p196, %p197
      %s200 = sadd.s32 %s199, 1
      %p203 = scmp.eq.s32.totalorder %s18, 1
      %p204 = scmp.ne.s32.totalorder %s199, %s201
      %p205 = scmp.eq.s32.totalorder %s18, 0
      %p206 = por %p204, %p205
      %p207 = scmp.ne.s32.totalorder %s199, %s201
      %p208 = scmp.eq.s32.totalorder %s23, 1
      %p209 = por %p207, %p208
      %p210 = scmp.ne.s32.totalorder %s201, %s202
      %p211 = scmp.eq.s32.totalorder %s23, 0
      %p212 = por %p210, %p211
      %p213 = scmp.ne.s32.totalorder %s201, %s202
      %p214 = scmp.eq.s32.totalorder %s24, 1
      %p215 = por %p213, %p214
      %p217 = scmp.ne.s32.totalorder %s202, %s216
      %p218 = scmp.eq.s32.totalorder %s24, 0
      %p219 = por %p217, %p218
      %s220 = ssub.s32 %s18, %s25
      %p221 = scmp.eq.s32.totalorder %s220, 0
      %s223 = sadd.s32 %s222, 1
      %s224 = scalar_select %p221, %s222, %s223
      %p227 = pneg %p221
      %p228 = scmp.eq.s32.totalorder %s18, 1
      %p229 = por %p227, %p228
      %p230 = scmp.ne.s32.totalorder %s222, %s225
      %p231 = scmp.eq.s32.totalorder %s18, 0
      %p232 = por %p230, %p231
      %p233 = scmp.ne.s32.totalorder %s222, %s225
      %p234 = scmp.eq.s32.totalorder %s23, 1
      %p235 = por %p233, %p234
      %p236 = scmp.ne.s32.totalorder %s225, %s226
      %p237 = scmp.eq.s32.totalorder %s23, 0
      %p238 = por %p236, %p237
      %p239 = scmp.ne.s32.totalorder %s225, %s226
      %p240 = scmp.eq.s32.totalorder %s24, 1
      %p241 = por %p239, %p240
      %p243 = scmp.ne.s32.totalorder %s226, %s242
      %p244 = scmp.eq.s32.totalorder %s24, 0
      %p245 = por %p243, %p244
      %p246 = scmp.le.s32.totalorder 1, %s18
      %p247 = scmp.lt.s32.totalorder %s18, 3
      %p248 = pnand %p246, %p247
      %p249 = pneg %p248
      // Predicated region
      $region9: #{rcab_forward.1} parent=5 // pred_check
        _
      $region10: #{rcab_forward.1} parent=5 // pred_check_branch
        %251 = sbr.rel (%p248) target = $region12
      $region11: #{rcab_forward.1} parent=5 // pred_region
        %s252 = ssub.s32 %s18, 1
        // Predicated region
        $region13: #{rcab_forward.1} parent=11 // pred_check
          %p253 = pneg %p65
        $region14: #{rcab_forward.1} parent=11 // pred_check_branch
          %255 = sbr.rel (%p253) target = $region16
        $region15: #{rcab_forward.1} parent=11 // pred_region
          _
        $region16: #{rcab_forward.1} parent=11 // pred_fallthru
          _
        // Predicated region
        $region17: #{rcab_forward.1} parent=11 // pred_check
          %p256 = pneg %p86
        $region18: #{rcab_forward.1} parent=11 // pred_check_branch
          %258 = sbr.rel (%p256) target = $region20
        $region19: #{rcab_forward.1} parent=11 // pred_region
          _
        $region20: #{rcab_forward.1} parent=11 // pred_fallthru
          _
        // Predicated region
        $region21: #{rcab_forward.1} parent=11 // pred_check
          %p259 = pneg %p107
        $region22: #{rcab_forward.1} parent=11 // pred_check_branch
          %261 = sbr.rel (%p259) target = $region24
        $region23: #{rcab_forward.1} parent=11 // pred_region
          _
        $region24: #{rcab_forward.1} parent=11 // pred_fallthru
          _
        // Predicated region
        $region25: #{rcab_forward.1} parent=11 // pred_check
          %p262 = pneg %p128
        $region26: #{rcab_forward.1} parent=11 // pred_check_branch
          %264 = sbr.rel (%p262) target = $region28
        $region27: #{rcab_forward.1} parent=11 // pred_region
          _
        $region28: #{rcab_forward.1} parent=11 // pred_fallthru
          _
        // Predicated region
        $region29: #{rcab_forward.1} parent=11 // pred_check
          %p265 = pneg %p149
        $region30: #{rcab_forward.1} parent=11 // pred_check_branch
          %267 = sbr.rel (%p265) target = $region32
        $region31: #{rcab_forward.1} parent=11 // pred_region
          _
        $region32: #{rcab_forward.1} parent=11 // pred_fallthru
          _
        // Predicated region
        $region33: #{rcab_forward.1} parent=11 // pred_check
          %p268 = pneg %p170
        $region34: #{rcab_forward.1} parent=11 // pred_check_branch
          %270 = sbr.rel (%p268) target = $region36
        $region35: #{rcab_forward.1} parent=11 // pred_region
          _
        $region36: #{rcab_forward.1} parent=11 // pred_fallthru
          _
        // Predicated region
        $region37: #{rcab_forward.1} parent=11 // pred_check
          %p271 = pneg %p191
        $region38: #{rcab_forward.1} parent=11 // pred_check_branch
          %273 = sbr.rel (%p271) target = $region40
        $region39: #{rcab_forward.1} parent=11 // pred_region
          _
        $region40: #{rcab_forward.1} parent=11 // pred_fallthru
          _
        // Predicated region
        $region41: #{rcab_forward.1} parent=11 // pred_check
          %p274 = pneg %p212
        $region42: #{rcab_forward.1} parent=11 // pred_check_branch
          %276 = sbr.rel (%p274) target = $region44
        $region43: #{rcab_forward.1} parent=11 // pred_region
          _
        $region44: #{rcab_forward.1} parent=11 // pred_fallthru
          _
      $region12: #{rcab_forward.1} parent=5 // pred_fallthru
        _
      %p277 = scmp.lt.s32.totalorder %s18, 2
      // Predicated region
      $region45: #{rcab_forward.1} parent=5 // pred_check
        %p278 = pneg %p277
      $region46: #{rcab_forward.1} parent=5 // pred_check_branch
        %280 = sbr.rel (%p278) target = $region48
      $region47: #{rcab_forward.1} parent=5 // pred_region
        // Predicated region
        $region49: #{rcab_forward.1} parent=47 // pred_check
          %p281 = pneg %p38
        $region50: #{rcab_forward.1} parent=47 // pred_check_branch
          %283 = sbr.rel (%p281) target = $region52
        $region51: #{rcab_forward.1} parent=47 // pred_region
          %p284 = scmp.lt.s32.totalorder %s18, 1
          %s285 = scalar_select %p284, %s18, 1
          %s286 = smul.addr %s285, 32
          %s287 = smul.addr %s286, 8
          %s288 = scalar_lea.vmem %s0, %s287
        $region52: #{rcab_forward.1} parent=47 // pred_fallthru
          _
      $region48: #{rcab_forward.1} parent=5 // pred_fallthru
        _
      %p289 = scmp.le.s32.totalorder 1, %s18
      %p290 = scmp.lt.s32.totalorder %s18, 3
      %p291 = pnand %p289, %p290
      %p292 = pneg %p291
      // Predicated region
      $region53: #{rcab_forward.1} parent=5 // pred_check
        _
      $region54: #{rcab_forward.1} parent=5 // pred_check_branch
        %294 = sbr.rel (%p291) target = $region56
      $region55: #{rcab_forward.1} parent=5 // pred_region
        %s295 = ssub.s32 %s18, 1
        %p296 = scmp.lt.s32.totalorder %s23, 1
        %s297 = scalar_select %p296, %s23, 1
        %s298 = smul.addr %s297, 32
        %s299 = smul.addr %s298, 8
        %s300 = scalar_lea.vmem %s0, %s299
        %p301 = pneg %p44
        %p302 = pneg %p41
        %p303 = pneg %p65
        %p304 = pneg %p62
        %p305 = pneg %p86
        %p306 = pneg %p83
        %p307 = pneg %p107
        %p308 = pneg %p104
        %p309 = pneg %p128
        %p310 = pneg %p125
        %p311 = pneg %p149
        %p312 = pneg %p146
        %p313 = pneg %p170
        %p314 = pneg %p167
        %p315 = pneg %p191
        %p316 = pneg %p188
        %p317 = pneg %p212
        %p318 = pneg %p209
        %p319 = pneg %p238
        %p320 = pneg %p235
        %s321 = sand.u32 %s225, 1
        %s322 = scalar_lea.sflag [#allocation4], %s321
        %s323 = sand.u32 %s225, 1
        %s324 = smul.addr %s323, 256
        %s325 = scalar_lea.vmem [#allocation3], %s324
        %p326 = scmp.lt.s32.totalorder %s23, 1
        %s327 = scalar_select %p326, %s23, 1
        %s328 = smul.addr %s327, 32
        %s329 = smul.addr %s328, 8
        %s330 = scalar_lea.vmem %s0, %s329
        %v331 = vld [vmem:[%s330] sm:$0xff]
        %v332 = vld [vmem:[%s330 + $0x8] sm:$0xff]
        %v333 = vld [vmem:[%s330 + $0x10] sm:$0xff]
        %v334 = vld [vmem:[%s330 + $0x18] sm:$0xff]
        %v335 = vld [vmem:[%s330 + $0x20] sm:$0xff]
        %v336 = vld [vmem:[%s330 + $0x28] sm:$0xff]
        %v337 = vld [vmem:[%s330 + $0x30] sm:$0xff]
        %v338 = vld [vmem:[%s330 + $0x38] sm:$0xff]
        %v339 = vld [vmem:[%s330 + $0x40] sm:$0xff]
        %v340 = vld [vmem:[%s330 + $0x48] sm:$0xff]
        %v341 = vld [vmem:[%s330 + $0x50] sm:$0xff]
        %v342 = vld [vmem:[%s330 + $0x58] sm:$0xff]
        %v343 = vld [vmem:[%s330 + $0x60] sm:$0xff]
        %v344 = vld [vmem:[%s330 + $0x68] sm:$0xff]
        %v345 = vld [vmem:[%s330 + $0x70] sm:$0xff]
        %v346 = vld [vmem:[%s330 + $0x78] sm:$0xff]
        %v347 = vld [vmem:[%s330 + $0x80] sm:$0xff]
        %v348 = vld [vmem:[%s330 + $0x88] sm:$0xff]
        %v349 = vld [vmem:[%s330 + $0x90] sm:$0xff]
        %v350 = vld [vmem:[%s330 + $0x98] sm:$0xff]
        %v351 = vld [vmem:[%s330 + $0xa0] sm:$0xff]
        %v352 = vld [vmem:[%s330 + $0xa8] sm:$0xff]
        %v353 = vld [vmem:[%s330 + $0xb0] sm:$0xff]
        %v354 = vld [vmem:[%s330 + $0xb8] sm:$0xff]
        %v355 = vld [vmem:[%s330 + $0xc0] sm:$0xff]
        %v356 = vld [vmem:[%s330 + $0xc8] sm:$0xff]
        %v357 = vld [vmem:[%s330 + $0xd0] sm:$0xff]
        %v358 = vld [vmem:[%s330 + $0xd8] sm:$0xff]
        %v359 = vld [vmem:[%s330 + $0xe0] sm:$0xff]
        %v360 = vld [vmem:[%s330 + $0xe8] sm:$0xff]
        %v361 = vld [vmem:[%s330 + $0xf0] sm:$0xff]
        %v362 = vld [vmem:[%s330 + $0xf8] sm:$0xff]
        %vm363 = vcmask 523264
        %364 = vst.msk [vmem:[#allocation2] sm:$0xff] %vm363, 0.0
        %365 = vst.msk [vmem:[#allocation2 + $0x8] sm:$0xff] %vm363, 0.0
        %vm366 = vcmask 517120
        %367 = vst.msk [vmem:[#allocation2 + $0x10] sm:$0x3] %vm366, 0.0
        %368 = vst.msk [vmem:[#allocation2 + $0x18] sm:$0xff] %vm363, 0.0
        %369 = vst.msk [vmem:[#allocation2 + $0x20] sm:$0xff] %vm363, 0.0
        %370 = vst.msk [vmem:[#allocation2 + $0x28] sm:$0x3] %vm366, 0.0
        %371 = vst.msk [vmem:[#allocation2 + $0x30] sm:$0xff] %vm363, 0.0
        %372 = vst.msk [vmem:[#allocation2 + $0x38] sm:$0xff] %vm363, 0.0
        %373 = vst.msk [vmem:[#allocation2 + $0x40] sm:$0x3] %vm366, 0.0
        %374 = vst.msk [vmem:[#allocation2 + $0x48] sm:$0xff] %vm363, 0.0
        %375 = vst.msk [vmem:[#allocation2 + $0x50] sm:$0xff] %vm363, 0.0
        %376 = vst.msk [vmem:[#allocation2 + $0x58] sm:$0x3] %vm366, 0.0
        %377 = vst.msk [vmem:[#allocation2 + $0x60] sm:$0xff] %vm363, 0.0
        %378 = vst.msk [vmem:[#allocation2 + $0x68] sm:$0xff] %vm363, 0.0
        %379 = vst.msk [vmem:[#allocation2 + $0x70] sm:$0x3] %vm366, 0.0
        %380 = vst.msk [vmem:[#allocation2 + $0x78] sm:$0xff] %vm363, 0.0
        %381 = vst.msk [vmem:[#allocation2 + $0x80] sm:$0xff] %vm363, 0.0
        %382 = vst.msk [vmem:[#allocation2 + $0x88] sm:$0x3] %vm366, 0.0
        %383 = vst.msk [vmem:[#allocation2 + $0x90] sm:$0xff] %vm363, 0.0
        %384 = vst.msk [vmem:[#allocation2 + $0x98] sm:$0xff] %vm363, 0.0
        %385 = vst.msk [vmem:[#allocation2 + $0xa0] sm:$0x3] %vm366, 0.0
        %386 = vst.msk [vmem:[#allocation2 + $0xa8] sm:$0xff] %vm363, 0.0
        %387 = vst.msk [vmem:[#allocation2 + $0xb0] sm:$0xff] %vm363, 0.0
        %388 = vst.msk [vmem:[#allocation2 + $0xb8] sm:$0x3] %vm366, 0.0
        %389 = vst.msk [vmem:[#allocation2 + $0xc0] sm:$0xff] %vm363, 0.0
        %390 = vst.msk [vmem:[#allocation2 + $0xc8] sm:$0xff] %vm363, 0.0
        %391 = vst.msk [vmem:[#allocation2 + $0xd0] sm:$0x3] %vm366, 0.0
        %392 = vst.msk [vmem:[#allocation2 + $0xd8] sm:$0xff] %vm363, 0.0
        %393 = vst.msk [vmem:[#allocation2 + $0xe0] sm:$0xff] %vm363, 0.0
        %394 = vst.msk [vmem:[#allocation2 + $0xe8] sm:$0x3] %vm366, 0.0
        %395 = vst.msk [vmem:[#allocation2 + $0xf0] sm:$0xff] %vm363, 0.0
        %396 = vst.msk [vmem:[#allocation2 + $0xf8] sm:$0xff] %vm363, 0.0
        %397 = vst.msk [vmem:[#allocation2 + $0x100] sm:$0x3] %vm366, 0.0
        %398 = vst.msk [vmem:[#allocation2 + $0x108] sm:$0xff] %vm363, 0.0
        %399 = vst.msk [vmem:[#allocation2 + $0x110] sm:$0xff] %vm363, 0.0
        %400 = vst.msk [vmem:[#allocation2 + $0x118] sm:$0x3] %vm366, 0.0
        %401 = vst.msk [vmem:[#allocation2 + $0x120] sm:$0xff] %vm363, 0.0
        %402 = vst.msk [vmem:[#allocation2 + $0x128] sm:$0xff] %vm363, 0.0
        %403 = vst.msk [vmem:[#allocation2 + $0x130] sm:$0x3] %vm366, 0.0
        %404 = vst.msk [vmem:[#allocation2 + $0x138] sm:$0xff] %vm363, 0.0
        %405 = vst.msk [vmem:[#allocation2 + $0x140] sm:$0xff] %vm363, 0.0
        %406 = vst.msk [vmem:[#allocation2 + $0x148] sm:$0x3] %vm366, 0.0
        %407 = vst.msk [vmem:[#allocation2 + $0x150] sm:$0xff] %vm363, 0.0
        %408 = vst.msk [vmem:[#allocation2 + $0x158] sm:$0xff] %vm363, 0.0
        %409 = vst.msk [vmem:[#allocation2 + $0x160] sm:$0x3] %vm366, 0.0
        %410 = vst.msk [vmem:[#allocation2 + $0x168] sm:$0xff] %vm363, 0.0
        %411 = vst.msk [vmem:[#allocation2 + $0x170] sm:$0xff] %vm363, 0.0
        %412 = vst.msk [vmem:[#allocation2 + $0x178] sm:$0x3] %vm366, 0.0
        %413 = vst.msk [vmem:[#allocation2 + $0x180] sm:$0xff] %vm363, 0.0
        %414 = vst.msk [vmem:[#allocation2 + $0x188] sm:$0xff] %vm363, 0.0
        %415 = vst.msk [vmem:[#allocation2 + $0x190] sm:$0x3] %vm366, 0.0
        %416 = vst.msk [vmem:[#allocation2 + $0x198] sm:$0xff] %vm363, 0.0
        %417 = vst.msk [vmem:[#allocation2 + $0x1a0] sm:$0xff] %vm363, 0.0
        %418 = vst.msk [vmem:[#allocation2 + $0x1a8] sm:$0x3] %vm366, 0.0
        %s419 = scalar_lea.vmem [#allocation2], 24
        %420 = vst.msk [vmem:[%s419 + $0x1] sm:$0xff] %vm363, %v331
        %421 = vst.msk [vmem:[%s419 + $0x9] sm:$0xff] %vm363, %v332
        %422 = vst.msk [vmem:[%s419 + $0x19] sm:$0xff] %vm363, %v333
        %423 = vst.msk [vmem:[%s419 + $0x21] sm:$0xff] %vm363, %v334
        %424 = vst.msk [vmem:[%s419 + $0x31] sm:$0xff] %vm363, %v335
        %425 = vst.msk [vmem:[%s419 + $0x39] sm:$0xff] %vm363, %v336
        %426 = vst.msk [vmem:[%s419 + $0x49] sm:$0xff] %vm363, %v337
        %427 = vst.msk [vmem:[%s419 + $0x51] sm:$0xff] %vm363, %v338
        %428 = vst.msk [vmem:[%s419 + $0x61] sm:$0xff] %vm363, %v339
        %429 = vst.msk [vmem:[%s419 + $0x69] sm:$0xff] %vm363, %v340
        %430 = vst.msk [vmem:[%s419 + $0x79] sm:$0xff] %vm363, %v341
        %431 = vst.msk [vmem:[%s419 + $0x81] sm:$0xff] %vm363, %v342
        %432 = vst.msk [vmem:[%s419 + $0x91] sm:$0xff] %vm363, %v343
        %433 = vst.msk [vmem:[%s419 + $0x99] sm:$0xff] %vm363, %v344
        %434 = vst.msk [vmem:[%s419 + $0xa9] sm:$0xff] %vm363, %v345
        %435 = vst.msk [vmem:[%s419 + $0xb1] sm:$0xff] %vm363, %v346
        %436 = vst.msk [vmem:[%s419 + $0xc1] sm:$0xff] %vm363, %v347
        %437 = vst.msk [vmem:[%s419 + $0xc9] sm:$0xff] %vm363, %v348
        %438 = vst.msk [vmem:[%s419 + $0xd9] sm:$0xff] %vm363, %v349
        %439 = vst.msk [vmem:[%s419 + $0xe1] sm:$0xff] %vm363, %v350
        %440 = vst.msk [vmem:[%s419 + $0xf1] sm:$0xff] %vm363, %v351
        %441 = vst.msk [vmem:[%s419 + $0xf9] sm:$0xff] %vm363, %v352
        %442 = vst.msk [vmem:[%s419 + $0x109] sm:$0xff] %vm363, %v353
        %443 = vst.msk [vmem:[%s419 + $0x111] sm:$0xff] %vm363, %v354
        %444 = vst.msk [vmem:[%s419 + $0x121] sm:$0xff] %vm363, %v355
        %445 = vst.msk [vmem:[%s419 + $0x129] sm:$0xff] %vm363, %v356
        %446 = vst.msk [vmem:[%s419 + $0x139] sm:$0xff] %vm363, %v357
        %447 = vst.msk [vmem:[%s419 + $0x141] sm:$0xff] %vm363, %v358
        %448 = vst.msk [vmem:[%s419 + $0x151] sm:$0xff] %vm363, %v359
        %449 = vst.msk [vmem:[%s419 + $0x159] sm:$0xff] %vm363, %v360
        %450 = vst.msk [vmem:[%s419 + $0x169] sm:$0xff] %vm363, %v361
        %451 = vst.msk [vmem:[%s419 + $0x171] sm:$0xff] %vm363, %v362
        %v452 = vld [vmem:[#allocation2] sm:$0xff]
        %v453 = vld [vmem:[#allocation2 + $0x8] sm:$0xff]
        %v454 = vld [vmem:[#allocation2 + $0x10] sm:$0x3]
        %v455 = vld [vmem:[#allocation2 + $0x18] sm:$0xff]
        %v456 = vld [vmem:[#allocation2 + $0x20] sm:$0xff]
        %v457 = vld [vmem:[#allocation2 + $0x28] sm:$0x3]
        %v458 = vld [vmem:[#allocation2 + $0x30] sm:$0xff]
        %v459 = vld [vmem:[#allocation2 + $0x38] sm:$0xff]
        %v460 = vld [vmem:[#allocation2 + $0x40] sm:$0x3]
        %v461 = vld [vmem:[#allocation2 + $0x48] sm:$0xff]
        %v462 = vld [vmem:[#allocation2 + $0x50] sm:$0xff]
        %v463 = vld [vmem:[#allocation2 + $0x58] sm:$0x3]
        %v464 = vld [vmem:[#allocation2 + $0x60] sm:$0xff]
        %v465 = vld [vmem:[#allocation2 + $0x68] sm:$0xff]
        %v466 = vld [vmem:[#allocation2 + $0x70] sm:$0x3]
        %v467 = vld [vmem:[#allocation2 + $0x78] sm:$0xff]
        %v468 = vld [vmem:[#allocation2 + $0x80] sm:$0xff]
        %v469 = vld [vmem:[#allocation2 + $0x88] sm:$0x3]
        %v470 = vld [vmem:[#allocation2 + $0x90] sm:$0xff]
        %v471 = vld [vmem:[#allocation2 + $0x98] sm:$0xff]
        %v472 = vld [vmem:[#allocation2 + $0xa0] sm:$0x3]
        %v473 = vld [vmem:[#allocation2 + $0xa8] sm:$0xff]
        %v474 = vld [vmem:[#allocation2 + $0xb0] sm:$0xff]
        %v475 = vld [vmem:[#allocation2 + $0xb8] sm:$0x3]
        %v476 = vld [vmem:[#allocation2 + $0xc0] sm:$0xff]
        %v477 = vld [vmem:[#allocation2 + $0xc8] sm:$0xff]
        %v478 = vld [vmem:[#allocation2 + $0xd0] sm:$0x3]
        %v479 = vld [vmem:[#allocation2 + $0xd8] sm:$0xff]
        %v480 = vld [vmem:[#allocation2 + $0xe0] sm:$0xff]
        %v481 = vld [vmem:[#allocation2 + $0xe8] sm:$0x3]
        %v482 = vld [vmem:[#allocation2 + $0xf0] sm:$0xff]
        %v483 = vld [vmem:[#allocation2 + $0xf8] sm:$0xff]
        %v484 = vld [vmem:[#allocation2 + $0x100] sm:$0x3]
        %v485 = vld [vmem:[#allocation2 + $0x108] sm:$0xff]
        %v486 = vld [vmem:[#allocation2 + $0x110] sm:$0xff]
        %v487 = vld [vmem:[#allocation2 + $0x118] sm:$0x3]
        %v488 = vld [vmem:[#allocation2 + $0x120] sm:$0xff]
        %v489 = vld [vmem:[#allocation2 + $0x128] sm:$0xff]
        %v490 = vld [vmem:[#allocation2 + $0x130] sm:$0x3]
        %v491 = vld [vmem:[#allocation2 + $0x138] sm:$0xff]
        %v492 = vld [vmem:[#allocation2 + $0x140] sm:$0xff]
        %v493 = vld [vmem:[#allocation2 + $0x148] sm:$0x3]
        %v494 = vld [vmem:[#allocation2 + $0x150] sm:$0xff]
        %v495 = vld [vmem:[#allocation2 + $0x158] sm:$0xff]
        %v496 = vld [vmem:[#allocation2 + $0x160] sm:$0x3]
        %v497 = vld [vmem:[#allocation2 + $0x168] sm:$0xff]
        %v498 = vld [vmem:[#allocation2 + $0x170] sm:$0xff]
        %v499 = vld [vmem:[#allocation2 + $0x178] sm:$0x3]
        %vm548 = vcmask 1046528
        %v549 = vrot.slane %v452, 1
        %v550 = vrot.slane %v453, 1
        %v551 = vsel %vm548, %v549, %v550
        %v552 = vrot.slane %v454, 1
        %v553 = vsel %vm548, %v550, %v552
        %v554 = vrot.slane %v455, 1
        %v555 = vrot.slane %v456, 1
        %v556 = vsel %vm548, %v554, %v555
        %v557 = vrot.slane %v457, 1
        %v558 = vsel %vm548, %v555, %v557
        %v559 = vrot.slane %v458, 1
        %v560 = vrot.slane %v459, 1
        %v561 = vsel %vm548, %v559, %v560
        %v562 = vrot.slane %v460, 1
        %v563 = vsel %vm548, %v560, %v562
        %v564 = vrot.slane %v461, 1
        %v565 = vrot.slane %v462, 1
        %v566 = vsel %vm548, %v564, %v565
        %v567 = vrot.slane %v463, 1
        %v568 = vsel %vm548, %v565, %v567
        %v569 = vrot.slane %v464, 1
        %v570 = vrot.slane %v465, 1
        %v571 = vsel %vm548, %v569, %v570
        %v572 = vrot.slane %v466, 1
        %v573 = vsel %vm548, %v570, %v572
        %v574 = vrot.slane %v467, 1
        %v575 = vrot.slane %v468, 1
        %v576 = vsel %vm548, %v574, %v575
        %v577 = vrot.slane %v469, 1
        %v578 = vsel %vm548, %v575, %v577
        %v579 = vrot.slane %v470, 1
        %v580 = vrot.slane %v471, 1
        %v581 = vsel %vm548, %v579, %v580
        %v582 = vrot.slane %v472, 1
        %v583 = vsel %vm548, %v580, %v582
        %v584 = vrot.slane %v473, 1
        %v585 = vrot.slane %v474, 1
        %v586 = vsel %vm548, %v584, %v585
        %v587 = vrot.slane %v475, 1
        %v588 = vsel %vm548, %v585, %v587
        %v589 = vrot.slane %v476, 1
        %v590 = vrot.slane %v477, 1
        %v591 = vsel %vm548, %v589, %v590
        %v592 = vrot.slane %v478, 1
        %v593 = vsel %vm548, %v590, %v592
        %v594 = vrot.slane %v479, 1
        %v595 = vrot.slane %v480, 1
        %v596 = vsel %vm548, %v594, %v595
        %v597 = vrot.slane %v481, 1
        %v598 = vsel %vm548, %v595, %v597
        %v599 = vrot.slane %v482, 1
        %v600 = vrot.slane %v483, 1
        %v601 = vsel %vm548, %v599, %v600
        %v602 = vrot.slane %v484, 1
        %v603 = vsel %vm548, %v600, %v602
        %v604 = vrot.slane %v485, 1
        %v605 = vrot.slane %v486, 1
        %v606 = vsel %vm548, %v604, %v605
        %v607 = vrot.slane %v487, 1
        %v608 = vsel %vm548, %v605, %v607
        %v609 = vrot.slane %v488, 1
        %v610 = vrot.slane %v489, 1
        %v611 = vsel %vm548, %v609, %v610
        %v612 = vrot.slane %v490, 1
        %v613 = vsel %vm548, %v610, %v612
        %v614 = vrot.slane %v491, 1
        %v615 = vrot.slane %v492, 1
        %v616 = vsel %vm548, %v614, %v615
        %v617 = vrot.slane %v493, 1
        %v618 = vsel %vm548, %v615, %v617
        %v619 = vrot.slane %v494, 1
        %v620 = vrot.slane %v495, 1
        %v621 = vsel %vm548, %v619, %v620
        %v622 = vrot.slane %v496, 1
        %v623 = vsel %vm548, %v620, %v622
        %v624 = vrot.slane %v497, 1
        %v625 = vrot.slane %v498, 1
        %v626 = vsel %vm548, %v624, %v625
        %v627 = vrot.slane %v499, 1
        %v628 = vsel %vm548, %v625, %v627
        %629 = vrot.lane.b32.xlu0 %v551, 64
        %v630 = vpop.permute.xlu0 %629
        %631 = vrot.lane.b32.xlu0 %v553, 64
        %v632 = vpop.permute.xlu0 %631
        %633 = vrot.lane.b32.xlu0 %v556, 64
        %v634 = vpop.permute.xlu0 %633
        %635 = vrot.lane.b32.xlu0 %v558, 64
        %v636 = vpop.permute.xlu0 %635
        %637 = vrot.lane.b32.xlu0 %v561, 64
        %v638 = vpop.permute.xlu0 %637
        %639 = vrot.lane.b32.xlu0 %v563, 64
        %v640 = vpop.permute.xlu0 %639
        %641 = vrot.lane.b32.xlu0 %v566, 64
        %v642 = vpop.permute.xlu0 %641
        %643 = vrot.lane.b32.xlu0 %v568, 64
        %v644 = vpop.permute.xlu0 %643
        %645 = vrot.lane.b32.xlu0 %v571, 64
        %v646 = vpop.permute.xlu0 %645
        %647 = vrot.lane.b32.xlu0 %v573, 64
        %v648 = vpop.permute.xlu0 %647
        %649 = vrot.lane.b32.xlu0 %v576, 64
        %v650 = vpop.permute.xlu0 %649
        %651 = vrot.lane.b32.xlu0 %v578, 64
        %v652 = vpop.permute.xlu0 %651
        %653 = vrot.lane.b32.xlu0 %v581, 64
        %v654 = vpop.permute.xlu0 %653
        %655 = vrot.lane.b32.xlu0 %v583, 64
        %v656 = vpop.permute.xlu0 %655
        %657 = vrot.lane.b32.xlu0 %v586, 64
        %v658 = vpop.permute.xlu0 %657
        %659 = vrot.lane.b32.xlu0 %v588, 64
        %v660 = vpop.permute.xlu0 %659
        %661 = vrot.lane.b32.xlu0 %v591, 64
        %v662 = vpop.permute.xlu0 %661
        %663 = vrot.lane.b32.xlu0 %v593, 64
        %v664 = vpop.permute.xlu0 %663
        %665 = vrot.lane.b32.xlu0 %v596, 64
        %v666 = vpop.permute.xlu0 %665
        %667 = vrot.lane.b32.xlu0 %v598, 64
        %v668 = vpop.permute.xlu0 %667
        %669 = vrot.lane.b32.xlu0 %v601, 64
        %v670 = vpop.permute.xlu0 %669
        %671 = vrot.lane.b32.xlu0 %v603, 64
        %v672 = vpop.permute.xlu0 %671
        %673 = vrot.lane.b32.xlu0 %v606, 64
        %v674 = vpop.permute.xlu0 %673
        %675 = vrot.lane.b32.xlu0 %v608, 64
        %v676 = vpop.permute.xlu0 %675
        %677 = vrot.lane.b32.xlu0 %v611, 64
        %v678 = vpop.permute.xlu0 %677
        %679 = vrot.lane.b32.xlu0 %v613, 64
        %v680 = vpop.permute.xlu0 %679
        %681 = vrot.lane.b32.xlu0 %v616, 64
        %v682 = vpop.permute.xlu0 %681
        %683 = vrot.lane.b32.xlu0 %v618, 64
        %v684 = vpop.permute.xlu0 %683
        %685 = vrot.lane.b32.xlu0 %v621, 64
        %v686 = vpop.permute.xlu0 %685
        %687 = vrot.lane.b32.xlu0 %v623, 64
        %v688 = vpop.permute.xlu0 %687
        %689 = vrot.lane.b32.xlu0 %v626, 64
        %v690 = vpop.permute.xlu0 %689
        %691 = vrot.lane.b32.xlu0 %v628, 64
        %v692 = vpop.permute.xlu0 %691
        %vm725 = vcmask 1045504
        %v726 = vrot.slane %v452, 2
        %v727 = vrot.slane %v453, 2
        %v728 = vsel %vm725, %v726, %v727
        %v729 = vrot.slane %v454, 2
        %v730 = vsel %vm725, %v727, %v729
        %v731 = vrot.slane %v455, 2
        %v732 = vrot.slane %v456, 2
        %v733 = vsel %vm725, %v731, %v732
        %v734 = vrot.slane %v457, 2
        %v735 = vsel %vm725, %v732, %v734
        %v736 = vrot.slane %v458, 2
        %v737 = vrot.slane %v459, 2
        %v738 = vsel %vm725, %v736, %v737
        %v739 = vrot.slane %v460, 2
        %v740 = vsel %vm725, %v737, %v739
        %v741 = vrot.slane %v461, 2
        %v742 = vrot.slane %v462, 2
        %v743 = vsel %vm725, %v741, %v742
        %v744 = vrot.slane %v463, 2
        %v745 = vsel %vm725, %v742, %v744
        %v746 = vrot.slane %v464, 2
        %v747 = vrot.slane %v465, 2
        %v748 = vsel %vm725, %v746, %v747
        %v749 = vrot.slane %v466, 2
        %v750 = vsel %vm725, %v747, %v749
        %v751 = vrot.slane %v467, 2
        %v752 = vrot.slane %v468, 2
        %v753 = vsel %vm725, %v751, %v752
        %v754 = vrot.slane %v469, 2
        %v755 = vsel %vm725, %v752, %v754
        %v756 = vrot.slane %v470, 2
        %v757 = vrot.slane %v471, 2
        %v758 = vsel %vm725, %v756, %v757
        %v759 = vrot.slane %v472, 2
        %v760 = vsel %vm725, %v757, %v759
        %v761 = vrot.slane %v473, 2
        %v762 = vrot.slane %v474, 2
        %v763 = vsel %vm725, %v761, %v762
        %v764 = vrot.slane %v475, 2
        %v765 = vsel %vm725, %v762, %v764
        %v766 = vrot.slane %v476, 2
        %v767 = vrot.slane %v477, 2
        %v768 = vsel %vm725, %v766, %v767
        %v769 = vrot.slane %v478, 2
        %v770 = vsel %vm725, %v767, %v769
        %v771 = vrot.slane %v479, 2
        %v772 = vrot.slane %v480, 2
        %v773 = vsel %vm725, %v771, %v772
        %v774 = vrot.slane %v481, 2
        %v775 = vsel %vm725, %v772, %v774
        %v776 = vrot.slane %v482, 2
        %v777 = vrot.slane %v483, 2
        %v778 = vsel %vm725, %v776, %v777
        %v779 = vrot.slane %v484, 2
        %v780 = vsel %vm725, %v777, %v779
        %v781 = vrot.slane %v485, 2
        %v782 = vrot.slane %v486, 2
        %v783 = vsel %vm725, %v781, %v782
        %v784 = vrot.slane %v487, 2
        %v785 = vsel %vm725, %v782, %v784
        %v786 = vrot.slane %v488, 2
        %v787 = vrot.slane %v489, 2
        %v788 = vsel %vm725, %v786, %v787
        %v789 = vrot.slane %v490, 2
        %v790 = vsel %vm725, %v787, %v789
        %v791 = vrot.slane %v491, 2
        %v792 = vrot.slane %v492, 2
        %v793 = vsel %vm725, %v791, %v792
        %v794 = vrot.slane %v493, 2
        %v795 = vsel %vm725, %v792, %v794
        %v796 = vrot.slane %v494, 2
        %v797 = vrot.slane %v495, 2
        %v798 = vsel %vm725, %v796, %v797
        %v799 = vrot.slane %v496, 2
        %v800 = vsel %vm725, %v797, %v799
        %v801 = vrot.slane %v497, 2
        %v802 = vrot.slane %v498, 2
        %v803 = vsel %vm725, %v801, %v802
        %v804 = vrot.slane %v499, 2
        %v805 = vsel %vm725, %v802, %v804
        %v806 = vsel %vm363, %v452, %v630
        %v807 = vsel %vm363, %v453, %v632
        %v808 = vsel %vm363, %v455, %v634
        %v809 = vsel %vm363, %v456, %v636
        %v810 = vsel %vm363, %v458, %v638
        %v811 = vsel %vm363, %v459, %v640
        %v812 = vsel %vm363, %v461, %v642
        %v813 = vsel %vm363, %v462, %v644
        %v814 = vsel %vm363, %v464, %v646
        %v815 = vsel %vm363, %v465, %v648
        %v816 = vsel %vm363, %v467, %v650
        %v817 = vsel %vm363, %v468, %v652
        %v818 = vsel %vm363, %v470, %v654
        %v819 = vsel %vm363, %v471, %v656
        %v820 = vsel %vm363, %v473, %v658
        %v821 = vsel %vm363, %v474, %v660
        %v822 = vsel %vm363, %v476, %v662
        %v823 = vsel %vm363, %v477, %v664
        %v824 = vsel %vm363, %v479, %v666
        %v825 = vsel %vm363, %v480, %v668
        %v826 = vsel %vm363, %v482, %v670
        %v827 = vsel %vm363, %v483, %v672
        %v828 = vsel %vm363, %v485, %v674
        %v829 = vsel %vm363, %v486, %v676
        %v830 = vsel %vm363, %v488, %v678
        %v831 = vsel %vm363, %v489, %v680
        %v832 = vsel %vm363, %v491, %v682
        %v833 = vsel %vm363, %v492, %v684
        %v834 = vsel %vm363, %v494, %v686
        %v835 = vsel %vm363, %v495, %v688
        %v836 = vsel %vm363, %v497, %v690
        %v837 = vsel %vm363, %v498, %v692
        %v838 = vld [vmem:[%s1] sm:$0xff]
        %v839 = vld [vmem:[%s1 + $0x8] sm:$0xff]
        %v840 = vld [vmem:[%s1 + $0x10] sm:$0xff]
        %v841 = vld [vmem:[%s1 + $0x18] sm:$0xff]
        %v842 = vld [vmem:[%s1 + $0x20] sm:$0xff]
        %v843 = vld [vmem:[%s1 + $0x28] sm:$0xff]
        %v844 = vld [vmem:[%s1 + $0x30] sm:$0xff]
        %v845 = vld [vmem:[%s1 + $0x38] sm:$0xff]
        %v846 = vld [vmem:[%s1 + $0x40] sm:$0xff]
        %v847 = vld [vmem:[%s1 + $0x48] sm:$0xff]
        %v848 = vld [vmem:[%s1 + $0x50] sm:$0xff]
        %v849 = vld [vmem:[%s1 + $0x58] sm:$0xff]
        %v850 = vld [vmem:[%s1 + $0x60] sm:$0xff]
        %v851 = vld [vmem:[%s1 + $0x68] sm:$0xff]
        %v852 = vld [vmem:[%s1 + $0x70] sm:$0xff]
        %v853 = vld [vmem:[%s1 + $0x78] sm:$0xff]
        %v854 = vld [vmem:[%s1 + $0x80] sm:$0xff]
        %v855 = vld [vmem:[%s1 + $0x88] sm:$0xff]
        %v856 = vld [vmem:[%s1 + $0x90] sm:$0xff]
        %v857 = vld [vmem:[%s1 + $0x98] sm:$0xff]
        %v858 = vld [vmem:[%s1 + $0xa0] sm:$0xff]
        %v859 = vld [vmem:[%s1 + $0xa8] sm:$0xff]
        %v860 = vld [vmem:[%s1 + $0xb0] sm:$0xff]
        %v861 = vld [vmem:[%s1 + $0xb8] sm:$0xff]
        %v862 = vld [vmem:[%s419] sm:$0xff]
        %v863 = vld [vmem:[%s419 + $0x8] sm:$0xff]
        %v864 = vld [vmem:[%s419 + $0x10] sm:$0x3]
        %v865 = vld [vmem:[%s419 + $0x18] sm:$0xff]
        %v866 = vld [vmem:[%s419 + $0x20] sm:$0xff]
        %v867 = vld [vmem:[%s419 + $0x28] sm:$0x3]
        %v868 = vld [vmem:[%s419 + $0x30] sm:$0xff]
        %v869 = vld [vmem:[%s419 + $0x38] sm:$0xff]
        %v870 = vld [vmem:[%s419 + $0x40] sm:$0x3]
        %v871 = vld [vmem:[%s419 + $0x48] sm:$0xff]
        %v872 = vld [vmem:[%s419 + $0x50] sm:$0xff]
        %v873 = vld [vmem:[%s419 + $0x58] sm:$0x3]
        %v874 = vld [vmem:[%s419 + $0x60] sm:$0xff]
        %v875 = vld [vmem:[%s419 + $0x68] sm:$0xff]
        %v876 = vld [vmem:[%s419 + $0x70] sm:$0x3]
        %v877 = vld [vmem:[%s419 + $0x78] sm:$0xff]
        %v878 = vld [vmem:[%s419 + $0x80] sm:$0xff]
        %v879 = vld [vmem:[%s419 + $0x88] sm:$0x3]
        %v880 = vld [vmem:[%s419 + $0x90] sm:$0xff]
        %v881 = vld [vmem:[%s419 + $0x98] sm:$0xff]
        %v882 = vld [vmem:[%s419 + $0xa0] sm:$0x3]
        %v883 = vld [vmem:[%s419 + $0xa8] sm:$0xff]
        %v884 = vld [vmem:[%s419 + $0xb0] sm:$0xff]
        %v885 = vld [vmem:[%s419 + $0xb8] sm:$0x3]
        %v886 = vld [vmem:[%s419 + $0xc0] sm:$0xff]
        %v887 = vld [vmem:[%s419 + $0xc8] sm:$0xff]
        %v888 = vld [vmem:[%s419 + $0xd0] sm:$0x3]
        %v889 = vld [vmem:[%s419 + $0xd8] sm:$0xff]
        %v890 = vld [vmem:[%s419 + $0xe0] sm:$0xff]
        %v891 = vld [vmem:[%s419 + $0xe8] sm:$0x3]
        %v892 = vld [vmem:[%s419 + $0xf0] sm:$0xff]
        %v893 = vld [vmem:[%s419 + $0xf8] sm:$0xff]
        %v894 = vld [vmem:[%s419 + $0x100] sm:$0x3]
        %v895 = vld [vmem:[%s419 + $0x108] sm:$0xff]
        %v896 = vld [vmem:[%s419 + $0x110] sm:$0xff]
        %v897 = vld [vmem:[%s419 + $0x118] sm:$0x3]
        %v898 = vld [vmem:[%s419 + $0x120] sm:$0xff]
        %v899 = vld [vmem:[%s419 + $0x128] sm:$0xff]
        %v900 = vld [vmem:[%s419 + $0x130] sm:$0x3]
        %v901 = vld [vmem:[%s419 + $0x138] sm:$0xff]
        %v902 = vld [vmem:[%s419 + $0x140] sm:$0xff]
        %v903 = vld [vmem:[%s419 + $0x148] sm:$0x3]
        %v904 = vld [vmem:[%s419 + $0x150] sm:$0xff]
        %v905 = vld [vmem:[%s419 + $0x158] sm:$0xff]
        %v906 = vld [vmem:[%s419 + $0x160] sm:$0x3]
        %v907 = vld [vmem:[%s419 + $0x168] sm:$0xff]
        %v908 = vld [vmem:[%s419 + $0x170] sm:$0xff]
        %v909 = vld [vmem:[%s419 + $0x178] sm:$0x3]
        %v958 = vrot.slane %v862, 1
        %v959 = vrot.slane %v863, 1
        %v960 = vsel %vm548, %v958, %v959
        %v961 = vrot.slane %v864, 1
        %v962 = vsel %vm548, %v959, %v961
        %v963 = vrot.slane %v865, 1
        %v964 = vrot.slane %v866, 1
        %v965 = vsel %vm548, %v963, %v964
        %v966 = vrot.slane %v867, 1
        %v967 = vsel %vm548, %v964, %v966
        %v968 = vrot.slane %v868, 1
        %v969 = vrot.slane %v869, 1
        %v970 = vsel %vm548, %v968, %v969
        %v971 = vrot.slane %v870, 1
        %v972 = vsel %vm548, %v969, %v971
        %v973 = vrot.slane %v871, 1
        %v974 = vrot.slane %v872, 1
        %v975 = vsel %vm548, %v973, %v974
        %v976 = vrot.slane %v873, 1
        %v977 = vsel %vm548, %v974, %v976
        %v978 = vrot.slane %v874, 1
        %v979 = vrot.slane %v875, 1
        %v980 = vsel %vm548, %v978, %v979
        %v981 = vrot.slane %v876, 1
        %v982 = vsel %vm548, %v979, %v981
        %v983 = vrot.slane %v877, 1
        %v984 = vrot.slane %v878, 1
        %v985 = vsel %vm548, %v983, %v984
        %v986 = vrot.slane %v879, 1
        %v987 = vsel %vm548, %v984, %v986
        %v988 = vrot.slane %v880, 1
        %v989 = vrot.slane %v881, 1
        %v990 = vsel %vm548, %v988, %v989
        %v991 = vrot.slane %v882, 1
        %v992 = vsel %vm548, %v989, %v991
        %v993 = vrot.slane %v883, 1
        %v994 = vrot.slane %v884, 1
        %v995 = vsel %vm548, %v993, %v994
        %v996 = vrot.slane %v885, 1
        %v997 = vsel %vm548, %v994, %v996
        %v998 = vrot.slane %v886, 1
        %v999 = vrot.slane %v887, 1
        %v1000 = vsel %vm548, %v998, %v999
        %v1001 = vrot.slane %v888, 1
        %v1002 = vsel %vm548, %v999, %v1001
        %v1003 = vrot.slane %v889, 1
        %v1004 = vrot.slane %v890, 1
        %v1005 = vsel %vm548, %v1003, %v1004
        %v1006 = vrot.slane %v891, 1
        %v1007 = vsel %vm548, %v1004, %v1006
        %v1008 = vrot.slane %v892, 1
        %v1009 = vrot.slane %v893, 1
        %v1010 = vsel %vm548, %v1008, %v1009
        %v1011 = vrot.slane %v894, 1
        %v1012 = vsel %vm548, %v1009, %v1011
        %v1013 = vrot.slane %v895, 1
        %v1014 = vrot.slane %v896, 1
        %v1015 = vsel %vm548, %v1013, %v1014
        %v1016 = vrot.slane %v897, 1
        %v1017 = vsel %vm548, %v1014, %v1016
        %v1018 = vrot.slane %v898, 1
        %v1019 = vrot.slane %v899, 1
        %v1020 = vsel %vm548, %v1018, %v1019
        %v1021 = vrot.slane %v900, 1
        %v1022 = vsel %vm548, %v1019, %v1021
        %v1023 = vrot.slane %v901, 1
        %v1024 = vrot.slane %v902, 1
        %v1025 = vsel %vm548, %v1023, %v1024
        %v1026 = vrot.slane %v903, 1
        %v1027 = vsel %vm548, %v1024, %v1026
        %v1028 = vrot.slane %v904, 1
        %v1029 = vrot.slane %v905, 1
        %v1030 = vsel %vm548, %v1028, %v1029
        %v1031 = vrot.slane %v906, 1
        %v1032 = vsel %vm548, %v1029, %v1031
        %v1033 = vrot.slane %v907, 1
        %v1034 = vrot.slane %v908, 1
        %v1035 = vsel %vm548, %v1033, %v1034
        %v1036 = vrot.slane %v909, 1
        %v1037 = vsel %vm548, %v1034, %v1036
        %1038 = vrot.lane.b32.xlu0 %v960, 64
        %v1039 = vpop.permute.xlu0 %1038
        %1040 = vrot.lane.b32.xlu0 %v962, 64
        %v1041 = vpop.permute.xlu0 %1040
        %1042 = vrot.lane.b32.xlu0 %v965, 64
        %v1043 = vpop.permute.xlu0 %1042
        %1044 = vrot.lane.b32.xlu0 %v967, 64
        %v1045 = vpop.permute.xlu0 %1044
        %1046 = vrot.lane.b32.xlu0 %v970, 64
        %v1047 = vpop.permute.xlu0 %1046
        %1048 = vrot.lane.b32.xlu0 %v972, 64
        %v1049 = vpop.permute.xlu0 %1048
        %1050 = vrot.lane.b32.xlu0 %v975, 64
        %v1051 = vpop.permute.xlu0 %1050
        %1052 = vrot.lane.b32.xlu0 %v977, 64
        %v1053 = vpop.permute.xlu0 %1052
        %1054 = vrot.lane.b32.xlu0 %v980, 64
        %v1055 = vpop.permute.xlu0 %1054
        %1056 = vrot.lane.b32.xlu0 %v982, 64
        %v1057 = vpop.permute.xlu0 %1056
        %1058 = vrot.lane.b32.xlu0 %v985, 64
        %v1059 = vpop.permute.xlu0 %1058
        %1060 = vrot.lane.b32.xlu0 %v987, 64
        %v1061 = vpop.permute.xlu0 %1060
        %1062 = vrot.lane.b32.xlu0 %v990, 64
        %v1063 = vpop.permute.xlu0 %1062
        %1064 = vrot.lane.b32.xlu0 %v992, 64
        %v1065 = vpop.permute.xlu0 %1064
        %1066 = vrot.lane.b32.xlu0 %v995, 64
        %v1067 = vpop.permute.xlu0 %1066
        %1068 = vrot.lane.b32.xlu0 %v997, 64
        %v1069 = vpop.permute.xlu0 %1068
        %1070 = vrot.lane.b32.xlu0 %v1000, 64
        %v1071 = vpop.permute.xlu0 %1070
        %1072 = vrot.lane.b32.xlu0 %v1002, 64
        %v1073 = vpop.permute.xlu0 %1072
        %1074 = vrot.lane.b32.xlu0 %v1005, 64
        %v1075 = vpop.permute.xlu0 %1074
        %1076 = vrot.lane.b32.xlu0 %v1007, 64
        %v1077 = vpop.permute.xlu0 %1076
        %1078 = vrot.lane.b32.xlu0 %v1010, 64
        %v1079 = vpop.permute.xlu0 %1078
        %1080 = vrot.lane.b32.xlu0 %v1012, 64
        %v1081 = vpop.permute.xlu0 %1080
        %1082 = vrot.lane.b32.xlu0 %v1015, 64
        %v1083 = vpop.permute.xlu0 %1082
        %1084 = vrot.lane.b32.xlu0 %v1017, 64
        %v1085 = vpop.permute.xlu0 %1084
        %1086 = vrot.lane.b32.xlu0 %v1020, 64
        %v1087 = vpop.permute.xlu0 %1086
        %1088 = vrot.lane.b32.xlu0 %v1022, 64
        %v1089 = vpop.permute.xlu0 %1088
        %1090 = vrot.lane.b32.xlu0 %v1025, 64
        %v1091 = vpop.permute.xlu0 %1090
        %1092 = vrot.lane.b32.xlu0 %v1027, 64
        %v1093 = vpop.permute.xlu0 %1092
        %1094 = vrot.lane.b32.xlu0 %v1030, 64
        %v1095 = vpop.permute.xlu0 %1094
        %1096 = vrot.lane.b32.xlu0 %v1032, 64
        %v1097 = vpop.permute.xlu0 %1096
        %1098 = vrot.lane.b32.xlu0 %v1035, 64
        %v1099 = vpop.permute.xlu0 %1098
        %1100 = vrot.lane.b32.xlu0 %v1037, 64
        %v1101 = vpop.permute.xlu0 %1100
        %v1134 = vrot.slane %v862, 2
        %v1135 = vrot.slane %v863, 2
        %v1136 = vsel %vm725, %v1134, %v1135
        %v1137 = vrot.slane %v864, 2
        %v1138 = vsel %vm725, %v1135, %v1137
        %v1139 = vrot.slane %v865, 2
        %v1140 = vrot.slane %v866, 2
        %v1141 = vsel %vm725, %v1139, %v1140
        %v1142 = vrot.slane %v867, 2
        %v1143 = vsel %vm725, %v1140, %v1142
        %v1144 = vrot.slane %v868, 2
        %v1145 = vrot.slane %v869, 2
        %v1146 = vsel %vm725, %v1144, %v1145
        %v1147 = vrot.slane %v870, 2
        %v1148 = vsel %vm725, %v1145, %v1147
        %v1149 = vrot.slane %v871, 2
        %v1150 = vrot.slane %v872, 2
        %v1151 = vsel %vm725, %v1149, %v1150
        %v1152 = vrot.slane %v873, 2
        %v1153 = vsel %vm725, %v1150, %v1152
        %v1154 = vrot.slane %v874, 2
        %v1155 = vrot.slane %v875, 2
        %v1156 = vsel %vm725, %v1154, %v1155
        %v1157 = vrot.slane %v876, 2
        %v1158 = vsel %vm725, %v1155, %v1157
        %v1159 = vrot.slane %v877, 2
        %v1160 = vrot.slane %v878, 2
        %v1161 = vsel %vm725, %v1159, %v1160
        %v1162 = vrot.slane %v879, 2
        %v1163 = vsel %vm725, %v1160, %v1162
        %v1164 = vrot.slane %v880, 2
        %v1165 = vrot.slane %v881, 2
        %v1166 = vsel %vm725, %v1164, %v1165
        %v1167 = vrot.slane %v882, 2
        %v1168 = vsel %vm725, %v1165, %v1167
        %v1169 = vrot.slane %v883, 2
        %v1170 = vrot.slane %v884, 2
        %v1171 = vsel %vm725, %v1169, %v1170
        %v1172 = vrot.slane %v885, 2
        %v1173 = vsel %vm725, %v1170, %v1172
        %v1174 = vrot.slane %v886, 2
        %v1175 = vrot.slane %v887, 2
        %v1176 = vsel %vm725, %v1174, %v1175
        %v1177 = vrot.slane %v888, 2
        %v1178 = vsel %vm725, %v1175, %v1177
        %v1179 = vrot.slane %v889, 2
        %v1180 = vrot.slane %v890, 2
        %v1181 = vsel %vm725, %v1179, %v1180
        %v1182 = vrot.slane %v891, 2
        %v1183 = vsel %vm725, %v1180, %v1182
        %v1184 = vrot.slane %v892, 2
        %v1185 = vrot.slane %v893, 2
        %v1186 = vsel %vm725, %v1184, %v1185
        %v1187 = vrot.slane %v894, 2
        %v1188 = vsel %vm725, %v1185, %v1187
        %v1189 = vrot.slane %v895, 2
        %v1190 = vrot.slane %v896, 2
        %v1191 = vsel %vm725, %v1189, %v1190
        %v1192 = vrot.slane %v897, 2
        %v1193 = vsel %vm725, %v1190, %v1192
        %v1194 = vrot.slane %v898, 2
        %v1195 = vrot.slane %v899, 2
        %v1196 = vsel %vm725, %v1194, %v1195
        %v1197 = vrot.slane %v900, 2
        %v1198 = vsel %vm725, %v1195, %v1197
        %v1199 = vrot.slane %v901, 2
        %v1200 = vrot.slane %v902, 2
        %v1201 = vsel %vm725, %v1199, %v1200
        %v1202 = vrot.slane %v903, 2
        %v1203 = vsel %vm725, %v1200, %v1202
        %v1204 = vrot.slane %v904, 2
        %v1205 = vrot.slane %v905, 2
        %v1206 = vsel %vm725, %v1204, %v1205
        %v1207 = vrot.slane %v906, 2
        %v1208 = vsel %vm725, %v1205, %v1207
        %v1209 = vrot.slane %v907, 2
        %v1210 = vrot.slane %v908, 2
        %v1211 = vsel %vm725, %v1209, %v1210
        %v1212 = vrot.slane %v909, 2
        %v1213 = vsel %vm725, %v1210, %v1212
        %v1214 = vsel %vm363, %v862, %v1039
        %v1215 = vsel %vm363, %v863, %v1041
        %v1216 = vsel %vm363, %v865, %v1043
        %v1217 = vsel %vm363, %v866, %v1045
        %v1218 = vsel %vm363, %v868, %v1047
        %v1219 = vsel %vm363, %v869, %v1049
        %v1220 = vsel %vm363, %v871, %v1051
        %v1221 = vsel %vm363, %v872, %v1053
        %v1222 = vsel %vm363, %v874, %v1055
        %v1223 = vsel %vm363, %v875, %v1057
        %v1224 = vsel %vm363, %v877, %v1059
        %v1225 = vsel %vm363, %v878, %v1061
        %v1226 = vsel %vm363, %v880, %v1063
        %v1227 = vsel %vm363, %v881, %v1065
        %v1228 = vsel %vm363, %v883, %v1067
        %v1229 = vsel %vm363, %v884, %v1069
        %v1230 = vsel %vm363, %v886, %v1071
        %v1231 = vsel %vm363, %v887, %v1073
        %v1232 = vsel %vm363, %v889, %v1075
        %v1233 = vsel %vm363, %v890, %v1077
        %v1234 = vsel %vm363, %v892, %v1079
        %v1235 = vsel %vm363, %v893, %v1081
        %v1236 = vsel %vm363, %v895, %v1083
        %v1237 = vsel %vm363, %v896, %v1085
        %v1238 = vsel %vm363, %v898, %v1087
        %v1239 = vsel %vm363, %v899, %v1089
        %v1240 = vsel %vm363, %v901, %v1091
        %v1241 = vsel %vm363, %v902, %v1093
        %v1242 = vsel %vm363, %v904, %v1095
        %v1243 = vsel %vm363, %v905, %v1097
        %v1244 = vsel %vm363, %v907, %v1099
        %v1245 = vsel %vm363, %v908, %v1101
        %s1246 = scalar_lea.vmem %s1, 192
        %v1247 = vld [vmem:[%s1246] sm:$0xff]
        %v1248 = vld [vmem:[%s1246 + $0x8] sm:$0xff]
        %v1249 = vld [vmem:[%s1246 + $0x10] sm:$0xff]
        %v1250 = vld [vmem:[%s1246 + $0x18] sm:$0xff]
        %v1251 = vld [vmem:[%s1246 + $0x20] sm:$0xff]
        %v1252 = vld [vmem:[%s1246 + $0x28] sm:$0xff]
        %v1253 = vld [vmem:[%s1246 + $0x30] sm:$0xff]
        %v1254 = vld [vmem:[%s1246 + $0x38] sm:$0xff]
        %v1255 = vld [vmem:[%s1246 + $0x40] sm:$0xff]
        %v1256 = vld [vmem:[%s1246 + $0x48] sm:$0xff]
        %v1257 = vld [vmem:[%s1246 + $0x50] sm:$0xff]
        %v1258 = vld [vmem:[%s1246 + $0x58] sm:$0xff]
        %v1259 = vld [vmem:[%s1246 + $0x60] sm:$0xff]
        %v1260 = vld [vmem:[%s1246 + $0x68] sm:$0xff]
        %v1261 = vld [vmem:[%s1246 + $0x70] sm:$0xff]
        %v1262 = vld [vmem:[%s1246 + $0x78] sm:$0xff]
        %v1263 = vld [vmem:[%s1246 + $0x80] sm:$0xff]
        %v1264 = vld [vmem:[%s1246 + $0x88] sm:$0xff]
        %v1265 = vld [vmem:[%s1246 + $0x90] sm:$0xff]
        %v1266 = vld [vmem:[%s1246 + $0x98] sm:$0xff]
        %v1267 = vld [vmem:[%s1246 + $0xa0] sm:$0xff]
        %v1268 = vld [vmem:[%s1246 + $0xa8] sm:$0xff]
        %v1269 = vld [vmem:[%s1246 + $0xb0] sm:$0xff]
        %v1270 = vld [vmem:[%s1246 + $0xb8] sm:$0xff]
        %v1271 = vsel %vm363, %v1136, 0
        %v1273 = vsel %vm363, %v1138, 0
        %v1275 = vsel %vm363, %v1141, 0
        %v1277 = vsel %vm363, %v1143, 0
        %v1279 = vsel %vm363, %v1146, 0
        %v1281 = vsel %vm363, %v1148, 0
        %v1283 = vsel %vm363, %v1151, 0
        %v1285 = vsel %vm363, %v1153, 0
        %v1287 = vsel %vm363, %v1156, 0
        %v1289 = vsel %vm363, %v1158, 0
        %v1291 = vsel %vm363, %v1161, 0
        %v1293 = vsel %vm363, %v1163, 0
        %v1295 = vsel %vm363, %v1166, 0
        %v1297 = vsel %vm363, %v1168, 0
        %v1299 = vsel %vm363, %v1171, 0
        %v1301 = vsel %vm363, %v1173, 0
        %v1303 = vsel %vm363, %v1176, 0
        %v1305 = vsel %vm363, %v1178, 0
        %v1307 = vsel %vm363, %v1181, 0
        %v1309 = vsel %vm363, %v1183, 0
        %v1311 = vsel %vm363, %v1186, 0
        %v1313 = vsel %vm363, %v1188, 0
        %v1315 = vsel %vm363, %v1191, 0
        %v1317 = vsel %vm363, %v1193, 0
        %v1319 = vsel %vm363, %v1196, 0
        %v1321 = vsel %vm363, %v1198, 0
        %v1323 = vsel %vm363, %v1201, 0
        %v1325 = vsel %vm363, %v1203, 0
        %v1327 = vsel %vm363, %v1206, 0
        %v1329 = vsel %vm363, %v1208, 0
        %v1331 = vsel %vm363, %v1211, 0
        %v1333 = vsel %vm363, %v1213, 0
        %1335 = vmatprep.subr.mxu0 0.0
        %1336 = vmatpush1.msra.mxu0 %v1247
        %1337 = vmatprep.subr.mxu0 0.0
        %1338 = vmatpush1.msra.mxu0 %v1248
        %1339 = vmatprep.subr.mxu0 0.0
        %1340 = vmatpush1.msra.mxu0 %v1249
        %1341 = vmatprep.subr.mxu0 0.0
        %1342 = vmatpush1.msra.mxu0 %v1250
        %1343 = vmatprep.subr.mxu0 0.0
        %1344 = vmatpush1.msra.mxu0 %v1251
        %1345 = vmatprep.subr.mxu0 0.0
        %1346 = vmatpush1.msra.mxu0 %v1252
        %1347 = vmatprep.subr.mxu0 0.0
        %1348 = vmatpush1.msra.mxu0 %v1253
        %1349 = vmatprep.subr.mxu0 0.0
        %1350 = vmatpush1.msra.mxu0 %v1254
        %1351 = vmatprep.subr.mxu0 0.0
        %1352 = vmatpush1.msra.mxu0 %v1255
        %1353 = vmatprep.subr.mxu0 0.0
        %1354 = vmatpush1.msra.mxu0 %v1256
        %1355 = vmatprep.subr.mxu0 0.0
        %1356 = vmatpush1.msra.mxu0 %v1257
        %1357 = vmatprep.subr.mxu0 0.0
        %1358 = vmatpush1.msra.mxu0 %v1258
        %1359 = vmatprep.subr.mxu0 0.0
        %1360 = vmatpush1.msra.mxu0 %v1259
        %1361 = vmatprep.subr.mxu0 0.0
        %1362 = vmatpush1.msra.mxu0 %v1260
        %1363 = vmatprep.subr.mxu0 0.0
        %1364 = vmatpush1.msra.mxu0 %v1261
        %1365 = vmatprep.subr.mxu0 0.0
        %1366 = vmatpush1.msra.mxu0 %v1262
        %1367 = vmatprep.subr.mxu0 0.0
        %1368 = vmatpush1.msra.mxu0 %v1263
        %1369 = vmatprep.subr.mxu0 0.0
        %1370 = vmatpush1.msra.mxu0 %v1264
        %1371 = vmatprep.subr.mxu0 0.0
        %1372 = vmatpush1.msra.mxu0 %v1265
        %1373 = vmatprep.subr.mxu0 0.0
        %1374 = vmatpush1.msra.mxu0 %v1266
        %1375 = vmatprep.subr.mxu0 0.0
        %1376 = vmatpush1.msra.mxu0 %v1267
        %1377 = vmatprep.subr.mxu0 0.0
        %1378 = vmatpush1.msra.mxu0 %v1268
        %1379 = vmatprep.subr.mxu0 0.0
        %1380 = vmatpush1.msra.mxu0 %v1269
        %1381 = vmatprep.subr.mxu0 0.0
        %1382 = vmatpush1.msra.mxu0 %v1270
        %1383 = vmatprep.subr.mxu0 0.0
        %1384 = vmatpush1.msra.mxu0 0.0
        %1385 = vmatprep.subr.mxu0 0.0
        %1386 = vmatpush1.msra.mxu0 0.0
        %1387 = vmatprep.subr.mxu0 0.0
        %1388 = vmatpush1.msra.mxu0 0.0
        %1389 = vmatprep.subr.mxu0 0.0
        %1390 = vmatpush1.msra.mxu0 0.0
        %1391 = vmatprep.subr.mxu0 0.0
        %1392 = vmatpush1.msra.mxu0 0.0
        %1393 = vmatprep.subr.mxu0 0.0
        %1394 = vmatpush1.msra.mxu0 0.0
        %1395 = vmatprep.subr.mxu0 0.0
        %1396 = vmatpush1.msra.mxu0 0.0
        %1397 = vmatprep.subr.mxu0 0.0
        %1398 = vmatpush1.msra.mxu0 0.0
        %1399 = vmatprep.mubr.f32.mxu0 %v1271
        %1400 = vmatmul.mubr.f32.gmra.mrb[0].mxu0 %v1214
        %v1401 = vpop.f32.mrb[0].mxu0
        %v1402 = vadd.f32 0.0, %v1401
        %v1403 = vpop.f32.mrb[0].mxu0
        %1404 = vmatprep.mubr.f32.mxu0 %v1273
        %1405 = vmatmul.mubr.f32.gmra.mrb[0].mxu0 %v1215
        %v1406 = vpop.f32.mrb[0].mxu0
        %v1407 = vadd.f32 0.0, %v1406
        %v1408 = vpop.f32.mrb[0].mxu0
        %1409 = vmatprep.mubr.f32.mxu0 %v1275
        %1410 = vmatmul.mubr.f32.gmra.mrb[0].mxu0 %v1216
        %v1411 = vpop.f32.mrb[0].mxu0
        %v1412 = vadd.f32 0.0, %v1411
        %v1413 = vpop.f32.mrb[0].mxu0
        %1414 = vmatprep.mubr.f32.mxu0 %v1277
        %1415 = vmatmul.mubr.f32.gmra.mrb[0].mxu0 %v1217
        %v1416 = vpop.f32.mrb[0].mxu0
        %v1417 = vadd.f32 0.0, %v1416
        %v1418 = vpop.f32.mrb[0].mxu0
        %1419 = vmatprep.mubr.f32.mxu0 %v1279
        %1420 = vmatmul.mubr.f32.gmra.mrb[0].mxu0 %v1218
        %v1421 = vpop.f32.mrb[0].mxu0
        %v1422 = vadd.f32 0.0, %v1421
        %v1423 = vpop.f32.mrb[0].mxu0
        %1424 = vmatprep.mubr.f32.mxu0 %v1281
        %1425 = vmatmul.mubr.f32.gmra.mrb[0].mxu0 %v1219
        %v1426 = vpop.f32.mrb[0].mxu0
        %v1427 = vadd.f32 0.0, %v1426
        %v1428 = vpop.f32.mrb[0].mxu0
        %1429 = vmatprep.mubr.f32.mxu0 %v1283
        %1430 = vmatmul.mubr.f32.gmra.mrb[0].mxu0 %v1220
        %v1431 = vpop.f32.mrb[0].mxu0
        %v1432 = vadd.f32 0.0, %v1431
        %v1433 = vpop.f32.mrb[0].mxu0
        %1434 = vmatprep.mubr.f32.mxu0 %v1285
        %1435 = vmatmul.mubr.f32.gmra.mrb[0].mxu0 %v1221
        %v1436 = vpop.f32.mrb[0].mxu0
        %v1437 = vadd.f32 0.0, %v1436
        %v1438 = vpop.f32.mrb[0].mxu0
        %1439 = vmatprep.mubr.f32.mxu0 %v1287
        %1440 = vmatmul.mubr.f32.gmra.mrb[0].mxu0 %v1222
        %v1441 = vpop.f32.mrb[0].mxu0
        %v1442 = vadd.f32 0.0, %v1441
        %v1443 = vpop.f32.mrb[0].mxu0
        %1444 = vmatprep.mubr.f32.mxu0 %v1289
        %1445 = vmatmul.mubr.f32.gmra.mrb[0].mxu0 %v1223
        %v1446 = vpop.f32.mrb[0].mxu0
        %v1447 = vadd.f32 0.0, %v1446
        %v1448 = vpop.f32.mrb[0].mxu0
        %1449 = vmatprep.mubr.f32.mxu0 %v1291
        %1450 = vmatmul.mubr.f32.gmra.mrb[0].mxu0 %v1224
        %v1451 = vpop.f32.mrb[0].mxu0
        %v1452 = vadd.f32 0.0, %v1451
        %v1453 = vpop.f32.mrb[0].mxu0
        %1454 = vmatprep.mubr.f32.mxu0 %v1293
        %1455 = vmatmul.mubr.f32.gmra.mrb[0].mxu0 %v1225
        %v1456 = vpop.f32.mrb[0].mxu0
        %v1457 = vadd.f32 0.0, %v1456
        %v1458 = vpop.f32.mrb[0].mxu0
        %1459 = vmatprep.mubr.f32.mxu0 %v1295
        %1460 = vmatmul.mubr.f32.gmra.mrb[0].mxu0 %v1226
        %v1461 = vpop.f32.mrb[0].mxu0
        %v1462 = vadd.f32 0.0, %v1461
        %v1463 = vpop.f32.mrb[0].mxu0
        %1464 = vmatprep.mubr.f32.mxu0 %v1297
        %1465 = vmatmul.mubr.f32.gmra.mrb[0].mxu0 %v1227
        %v1466 = vpop.f32.mrb[0].mxu0
        %v1467 = vadd.f32 0.0, %v1466
        %v1468 = vpop.f32.mrb[0].mxu0
        %1469 = vmatprep.mubr.f32.mxu0 %v1299
        %1470 = vmatmul.mubr.f32.gmra.mrb[0].mxu0 %v1228
        %v1471 = vpop.f32.mrb[0].mxu0
        %v1472 = vadd.f32 0.0, %v1471
        %v1473 = vpop.f32.mrb[0].mxu0
        %1474 = vmatprep.mubr.f32.mxu0 %v1301
        %1475 = vmatmul.mubr.f32.gmra.mrb[0].mxu0 %v1229
        %v1476 = vpop.f32.mrb[0].mxu0
        %v1477 = vadd.f32 0.0, %v1476
        %v1478 = vpop.f32.mrb[0].mxu0
        %1479 = vmatprep.mubr.f32.mxu0 %v1303
        %1480 = vmatmul.mubr.f32.gmra.mrb[0].mxu0 %v1230
        %v1481 = vpop.f32.mrb[0].mxu0
        %v1482 = vadd.f32 0.0, %v1481
        %v1483 = vpop.f32.mrb[0].mxu0
        %1484 = vmatprep.mubr.f32.mxu0 %v1305
        %1485 = vmatmul.mubr.f32.gmra.mrb[0].mxu0 %v1231
        %v1486 = vpop.f32.mrb[0].mxu0
        %v1487 = vadd.f32 0.0, %v1486
        %v1488 = vpop.f32.mrb[0].mxu0
        %1489 = vmatprep.mubr.f32.mxu0 %v1307
        %1490 = vmatmul.mubr.f32.gmra.mrb[0].mxu0 %v1232
        %v1491 = vpop.f32.mrb[0].mxu0
        %v1492 = vadd.f32 0.0, %v1491
        %v1493 = vpop.f32.mrb[0].mxu0
        %1494 = vmatprep.mubr.f32.mxu0 %v1309
        %1495 = vmatmul.mubr.f32.gmra.mrb[0].mxu0 %v1233
        %v1496 = vpop.f32.mrb[0].mxu0
        %v1497 = vadd.f32 0.0, %v1496
        %v1498 = vpop.f32.mrb[0].mxu0
        %1499 = vmatprep.mubr.f32.mxu0 %v1311
        %1500 = vmatmul.mubr.f32.gmra.mrb[0].mxu0 %v1234
        %v1501 = vpop.f32.mrb[0].mxu0
        %v1502 = vadd.f32 0.0, %v1501
        %v1503 = vpop.f32.mrb[0].mxu0
        %1504 = vmatprep.mubr.f32.mxu0 %v1313
        %1505 = vmatmul.mubr.f32.gmra.mrb[0].mxu0 %v1235
        %v1506 = vpop.f32.mrb[0].mxu0
        %v1507 = vadd.f32 0.0, %v1506
        %v1508 = vpop.f32.mrb[0].mxu0
        %1509 = vmatprep.mubr.f32.mxu0 %v1315
        %1510 = vmatmul.mubr.f32.gmra.mrb[0].mxu0 %v1236
        %v1511 = vpop.f32.mrb[0].mxu0
        %v1512 = vadd.f32 0.0, %v1511
        %v1513 = vpop.f32.mrb[0].mxu0
        %1514 = vmatprep.mubr.f32.mxu0 %v1317
        %1515 = vmatmul.mubr.f32.gmra.mrb[0].mxu0 %v1237
        %v1516 = vpop.f32.mrb[0].mxu0
        %v1517 = vadd.f32 0.0, %v1516
        %v1518 = vpop.f32.mrb[0].mxu0
        %1519 = vmatprep.mubr.f32.mxu0 %v1319
        %1520 = vmatmul.mubr.f32.gmra.mrb[0].mxu0 %v1238
        %v1521 = vpop.f32.mrb[0].mxu0
        %v1522 = vadd.f32 0.0, %v1521
        %v1523 = vpop.f32.mrb[0].mxu0
        %1524 = vmatprep.mubr.f32.mxu0 %v1321
        %1525 = vmatmul.mubr.f32.gmra.mrb[0].mxu0 %v1239
        %v1526 = vpop.f32.mrb[0].mxu0
        %v1527 = vadd.f32 0.0, %v1526
        %v1528 = vpop.f32.mrb[0].mxu0
        %1529 = vmatprep.mubr.f32.mxu0 %v1323
        %1530 = vmatmul.mubr.f32.gmra.mrb[0].mxu0 %v1240
        %v1531 = vpop.f32.mrb[0].mxu0
        %v1532 = vadd.f32 0.0, %v1531
        %v1533 = vpop.f32.mrb[0].mxu0
        %1534 = vmatprep.mubr.f32.mxu0 %v1325
        %1535 = vmatmul.mubr.f32.gmra.mrb[0].mxu0 %v1241
        %v1536 = vpop.f32.mrb[0].mxu0
        %v1537 = vadd.f32 0.0, %v1536
        %v1538 = vpop.f32.mrb[0].mxu0
        %1539 = vmatprep.mubr.f32.mxu0 %v1327
        %1540 = vmatmul.mubr.f32.gmra.mrb[0].mxu0 %v1242
        %v1541 = vpop.f32.mrb[0].mxu0
        %v1542 = vadd.f32 0.0, %v1541
        %v1543 = vpop.f32.mrb[0].mxu0
        %1544 = vmatprep.mubr.f32.mxu0 %v1329
        %1545 = vmatmul.mubr.f32.gmra.mrb[0].mxu0 %v1243
        %v1546 = vpop.f32.mrb[0].mxu0
        %v1547 = vadd.f32 0.0, %v1546
        %v1548 = vpop.f32.mrb[0].mxu0
        %1549 = vmatprep.mubr.f32.mxu0 %v1331
        %1550 = vmatmul.mubr.f32.gmra.mrb[0].mxu0 %v1244
        %v1551 = vpop.f32.mrb[0].mxu0
        %v1552 = vadd.f32 0.0, %v1551
        %v1553 = vpop.f32.mrb[0].mxu0
        %1554 = vmatprep.mubr.f32.mxu0 %v1333
        %1555 = vmatmul.mubr.f32.gmra.mrb[0].mxu0 %v1245
        %v1556 = vpop.f32.mrb[0].mxu0
        %v1557 = vadd.f32 0.0, %v1556
        %v1558 = vpop.f32.mrb[0].mxu0
        %1559 = vdwg.mxu0
        %v1560 = vsel %vm363, %v728, 0
        %v1562 = vsel %vm363, %v730, 0
        %v1564 = vsel %vm363, %v733, 0
        %v1566 = vsel %vm363, %v735, 0
        %v1568 = vsel %vm363, %v738, 0
        %v1570 = vsel %vm363, %v740, 0
        %v1572 = vsel %vm363, %v743, 0
        %v1574 = vsel %vm363, %v745, 0
        %v1576 = vsel %vm363, %v748, 0
        %v1578 = vsel %vm363, %v750, 0
        %v1580 = vsel %vm363, %v753, 0
        %v1582 = vsel %vm363, %v755, 0
        %v1584 = vsel %vm363, %v758, 0
        %v1586 = vsel %vm363, %v760, 0
        %v1588 = vsel %vm363, %v763, 0
        %v1590 = vsel %vm363, %v765, 0
        %v1592 = vsel %vm363, %v768, 0
        %v1594 = vsel %vm363, %v770, 0
        %v1596 = vsel %vm363, %v773, 0
        %v1598 = vsel %vm363, %v775, 0
        %v1600 = vsel %vm363, %v778, 0
        %v1602 = vsel %vm363, %v780, 0
        %v1604 = vsel %vm363, %v783, 0
        %v1606 = vsel %vm363, %v785, 0
        %v1608 = vsel %vm363, %v788, 0
        %v1610 = vsel %vm363, %v790, 0
        %v1612 = vsel %vm363, %v793, 0
        %v1614 = vsel %vm363, %v795, 0
        %v1616 = vsel %vm363, %v798, 0
        %v1618 = vsel %vm363, %v800, 0
        %v1620 = vsel %vm363, %v803, 0
        %v1622 = vsel %vm363, %v805, 0
        %1624 = vmatprep.subr.mxu0 0.0
        %1625 = vmatpush1.msra.mxu0 %v838
        %1626 = vmatprep.subr.mxu0 0.0
        %1627 = vmatpush1.msra.mxu0 %v839
        %1628 = vmatprep.subr.mxu0 0.0
        %1629 = vmatpush1.msra.mxu0 %v840
        %1630 = vmatprep.subr.mxu0 0.0
        %1631 = vmatpush1.msra.mxu0 %v841
        %1632 = vmatprep.subr.mxu0 0.0
        %1633 = vmatpush1.msra.mxu0 %v842
        %1634 = vmatprep.subr.mxu0 0.0
        %1635 = vmatpush1.msra.mxu0 %v843
        %1636 = vmatprep.subr.mxu0 0.0
        %1637 = vmatpush1.msra.mxu0 %v844
        %1638 = vmatprep.subr.mxu0 0.0
        %1639 = vmatpush1.msra.mxu0 %v845
        %1640 = vmatprep.subr.mxu0 0.0
        %1641 = vmatpush1.msra.mxu0 %v846
        %1642 = vmatprep.subr.mxu0 0.0
        %1643 = vmatpush1.msra.mxu0 %v847
        %1644 = vmatprep.subr.mxu0 0.0
        %1645 = vmatpush1.msra.mxu0 %v848
        %1646 = vmatprep.subr.mxu0 0.0
        %1647 = vmatpush1.msra.mxu0 %v849
        %1648 = vmatprep.subr.mxu0 0.0
        %1649 = vmatpush1.msra.mxu0 %v850
        %1650 = vmatprep.subr.mxu0 0.0
        %1651 = vmatpush1.msra.mxu0 %v851
        %1652 = vmatprep.subr.mxu0 0.0
        %1653 = vmatpush1.msra.mxu0 %v852
        %1654 = vmatprep.subr.mxu0 0.0
        %1655 = vmatpush1.msra.mxu0 %v853
        %1656 = vmatprep.subr.mxu0 0.0
        %1657 = vmatpush1.msra.mxu0 %v854
        %1658 = vmatprep.subr.mxu0 0.0
        %1659 = vmatpush1.msra.mxu0 %v855
        %1660 = vmatprep.subr.mxu0 0.0
        %1661 = vmatpush1.msra.mxu0 %v856
        %1662 = vmatprep.subr.mxu0 0.0
        %1663 = vmatpush1.msra.mxu0 %v857
        %1664 = vmatprep.subr.mxu0 0.0
        %1665 = vmatpush1.msra.mxu0 %v858
        %1666 = vmatprep.subr.mxu0 0.0
        %1667 = vmatpush1.msra.mxu0 %v859
        %1668 = vmatprep.subr.mxu0 0.0
        %1669 = vmatpush1.msra.mxu0 %v860
        %1670 = vmatprep.subr.mxu0 0.0
        %1671 = vmatpush1.msra.mxu0 %v861
        %1672 = vmatprep.subr.mxu0 0.0
        %1673 = vmatpush1.msra.mxu0 0.0
        %1674 = vmatprep.subr.mxu0 0.0
        %1675 = vmatpush1.msra.mxu0 0.0
        %1676 = vmatprep.subr.mxu0 0.0
        %1677 = vmatpush1.msra.mxu0 0.0
        %1678 = vmatprep.subr.mxu0 0.0
        %1679 = vmatpush1.msra.mxu0 0.0
        %1680 = vmatprep.subr.mxu0 0.0
        %1681 = vmatpush1.msra.mxu0 0.0
        %1682 = vmatprep.subr.mxu0 0.0
        %1683 = vmatpush1.msra.mxu0 0.0
        %1684 = vmatprep.subr.mxu0 0.0
        %1685 = vmatpush1.msra.mxu0 0.0
        %1686 = vmatprep.subr.mxu0 0.0
        %1687 = vmatpush1.msra.mxu0 0.0
        %1688 = vmatprep.mubr.f32.mxu0 %v1560
        %1689 = vmatmul.mubr.f32.gmra.mrb[0].mxu0 %v806
        %v1690 = vpop.f32.mrb[0].mxu0
        %v1691 = vadd.f32 %v1402, %v1690
        %v1692 = vpop.f32.mrb[0].mxu0
        %1693 = vmatprep.mubr.f32.mxu0 %v1562
        %1694 = vmatmul.mubr.f32.gmra.mrb[0].mxu0 %v807
        %v1695 = vpop.f32.mrb[0].mxu0
        %v1696 = vadd.f32 %v1407, %v1695
        %v1697 = vpop.f32.mrb[0].mxu0
        %1698 = vmatprep.mubr.f32.mxu0 %v1564
        %1699 = vmatmul.mubr.f32.gmra.mrb[0].mxu0 %v808
        %v1700 = vpop.f32.mrb[0].mxu0
        %v1701 = vadd.f32 %v1412, %v1700
        %v1702 = vpop.f32.mrb[0].mxu0
        %1703 = vmatprep.mubr.f32.mxu0 %v1566
        %1704 = vmatmul.mubr.f32.gmra.mrb[0].mxu0 %v809
        %v1705 = vpop.f32.mrb[0].mxu0
        %v1706 = vadd.f32 %v1417, %v1705
        %v1707 = vpop.f32.mrb[0].mxu0
        %1708 = vmatprep.mubr.f32.mxu0 %v1568
        %1709 = vmatmul.mubr.f32.gmra.mrb[0].mxu0 %v810
        %v1710 = vpop.f32.mrb[0].mxu0
        %v1711 = vadd.f32 %v1422, %v1710
        %v1712 = vpop.f32.mrb[0].mxu0
        %1713 = vmatprep.mubr.f32.mxu0 %v1570
        %1714 = vmatmul.mubr.f32.gmra.mrb[0].mxu0 %v811
        %v1715 = vpop.f32.mrb[0].mxu0
        %v1716 = vadd.f32 %v1427, %v1715
        %v1717 = vpop.f32.mrb[0].mxu0
        %1718 = vmatprep.mubr.f32.mxu0 %v1572
        %1719 = vmatmul.mubr.f32.gmra.mrb[0].mxu0 %v812
        %v1720 = vpop.f32.mrb[0].mxu0
        %v1721 = vadd.f32 %v1432, %v1720
        %v1722 = vpop.f32.mrb[0].mxu0
        %1723 = vmatprep.mubr.f32.mxu0 %v1574
        %1724 = vmatmul.mubr.f32.gmra.mrb[0].mxu0 %v813
        %v1725 = vpop.f32.mrb[0].mxu0
        %v1726 = vadd.f32 %v1437, %v1725
        %v1727 = vpop.f32.mrb[0].mxu0
        %1728 = vmatprep.mubr.f32.mxu0 %v1576
        %1729 = vmatmul.mubr.f32.gmra.mrb[0].mxu0 %v814
        %v1730 = vpop.f32.mrb[0].mxu0
        %v1731 = vadd.f32 %v1442, %v1730
        %v1732 = vpop.f32.mrb[0].mxu0
        %1733 = vmatprep.mubr.f32.mxu0 %v1578
        %1734 = vmatmul.mubr.f32.gmra.mrb[0].mxu0 %v815
        %v1735 = vpop.f32.mrb[0].mxu0
        %v1736 = vadd.f32 %v1447, %v1735
        %v1737 = vpop.f32.mrb[0].mxu0
        %1738 = vmatprep.mubr.f32.mxu0 %v1580
        %1739 = vmatmul.mubr.f32.gmra.mrb[0].mxu0 %v816
        %v1740 = vpop.f32.mrb[0].mxu0
        %v1741 = vadd.f32 %v1452, %v1740
        %v1742 = vpop.f32.mrb[0].mxu0
        %1743 = vmatprep.mubr.f32.mxu0 %v1582
        %1744 = vmatmul.mubr.f32.gmra.mrb[0].mxu0 %v817
        %v1745 = vpop.f32.mrb[0].mxu0
        %v1746 = vadd.f32 %v1457, %v1745
        %v1747 = vpop.f32.mrb[0].mxu0
        %1748 = vmatprep.mubr.f32.mxu0 %v1584
        %1749 = vmatmul.mubr.f32.gmra.mrb[0].mxu0 %v818
        %v1750 = vpop.f32.mrb[0].mxu0
        %v1751 = vadd.f32 %v1462, %v1750
        %v1752 = vpop.f32.mrb[0].mxu0
        %1753 = vmatprep.mubr.f32.mxu0 %v1586
        %1754 = vmatmul.mubr.f32.gmra.mrb[0].mxu0 %v819
        %v1755 = vpop.f32.mrb[0].mxu0
        %v1756 = vadd.f32 %v1467, %v1755
        %v1757 = vpop.f32.mrb[0].mxu0
        %1758 = vmatprep.mubr.f32.mxu0 %v1588
        %1759 = vmatmul.mubr.f32.gmra.mrb[0].mxu0 %v820
        %v1760 = vpop.f32.mrb[0].mxu0
        %v1761 = vadd.f32 %v1472, %v1760
        %v1762 = vpop.f32.mrb[0].mxu0
        %1763 = vmatprep.mubr.f32.mxu0 %v1590
        %1764 = vmatmul.mubr.f32.gmra.mrb[0].mxu0 %v821
        %v1765 = vpop.f32.mrb[0].mxu0
        %v1766 = vadd.f32 %v1477, %v1765
        %v1767 = vpop.f32.mrb[0].mxu0
        %1768 = vmatprep.mubr.f32.mxu0 %v1592
        %1769 = vmatmul.mubr.f32.gmra.mrb[0].mxu0 %v822
        %v1770 = vpop.f32.mrb[0].mxu0
        %v1771 = vadd.f32 %v1482, %v1770
        %v1772 = vpop.f32.mrb[0].mxu0
        %1773 = vmatprep.mubr.f32.mxu0 %v1594
        %1774 = vmatmul.mubr.f32.gmra.mrb[0].mxu0 %v823
        %v1775 = vpop.f32.mrb[0].mxu0
        %v1776 = vadd.f32 %v1487, %v1775
        %v1777 = vpop.f32.mrb[0].mxu0
        %1778 = vmatprep.mubr.f32.mxu0 %v1596
        %1779 = vmatmul.mubr.f32.gmra.mrb[0].mxu0 %v824
        %v1780 = vpop.f32.mrb[0].mxu0
        %v1781 = vadd.f32 %v1492, %v1780
        %v1782 = vpop.f32.mrb[0].mxu0
        %1783 = vmatprep.mubr.f32.mxu0 %v1598
        %1784 = vmatmul.mubr.f32.gmra.mrb[0].mxu0 %v825
        %v1785 = vpop.f32.mrb[0].mxu0
        %v1786 = vadd.f32 %v1497, %v1785
        %v1787 = vpop.f32.mrb[0].mxu0
        %1788 = vmatprep.mubr.f32.mxu0 %v1600
        %1789 = vmatmul.mubr.f32.gmra.mrb[0].mxu0 %v826
        %v1790 = vpop.f32.mrb[0].mxu0
        %v1791 = vadd.f32 %v1502, %v1790
        %v1792 = vpop.f32.mrb[0].mxu0
        %1793 = vmatprep.mubr.f32.mxu0 %v1602
        %1794 = vmatmul.mubr.f32.gmra.mrb[0].mxu0 %v827
        %v1795 = vpop.f32.mrb[0].mxu0
        %v1796 = vadd.f32 %v1507, %v1795
        %v1797 = vpop.f32.mrb[0].mxu0
        %1798 = vmatprep.mubr.f32.mxu0 %v1604
        %1799 = vmatmul.mubr.f32.gmra.mrb[0].mxu0 %v828
        %v1800 = vpop.f32.mrb[0].mxu0
        %v1801 = vadd.f32 %v1512, %v1800
        %v1802 = vpop.f32.mrb[0].mxu0
        %1803 = vmatprep.mubr.f32.mxu0 %v1606
        %1804 = vmatmul.mubr.f32.gmra.mrb[0].mxu0 %v829
        %v1805 = vpop.f32.mrb[0].mxu0
        %v1806 = vadd.f32 %v1517, %v1805
        %v1807 = vpop.f32.mrb[0].mxu0
        %1808 = vmatprep.mubr.f32.mxu0 %v1608
        %1809 = vmatmul.mubr.f32.gmra.mrb[0].mxu0 %v830
        %v1810 = vpop.f32.mrb[0].mxu0
        %v1811 = vadd.f32 %v1522, %v1810
        %v1812 = vpop.f32.mrb[0].mxu0
        %1813 = vmatprep.mubr.f32.mxu0 %v1610
        %1814 = vmatmul.mubr.f32.gmra.mrb[0].mxu0 %v831
        %v1815 = vpop.f32.mrb[0].mxu0
        %v1816 = vadd.f32 %v1527, %v1815
        %v1817 = vpop.f32.mrb[0].mxu0
        %1818 = vmatprep.mubr.f32.mxu0 %v1612
        %1819 = vmatmul.mubr.f32.gmra.mrb[0].mxu0 %v832
        %v1820 = vpop.f32.mrb[0].mxu0
        %v1821 = vadd.f32 %v1532, %v1820
        %v1822 = vpop.f32.mrb[0].mxu0
        %1823 = vmatprep.mubr.f32.mxu0 %v1614
        %1824 = vmatmul.mubr.f32.gmra.mrb[0].mxu0 %v833
        %v1825 = vpop.f32.mrb[0].mxu0
        %v1826 = vadd.f32 %v1537, %v1825
        %v1827 = vpop.f32.mrb[0].mxu0
        %1828 = vmatprep.mubr.f32.mxu0 %v1616
        %1829 = vmatmul.mubr.f32.gmra.mrb[0].mxu0 %v834
        %v1830 = vpop.f32.mrb[0].mxu0
        %v1831 = vadd.f32 %v1542, %v1830
        %v1832 = vpop.f32.mrb[0].mxu0
        %1833 = vmatprep.mubr.f32.mxu0 %v1618
        %1834 = vmatmul.mubr.f32.gmra.mrb[0].mxu0 %v835
        %v1835 = vpop.f32.mrb[0].mxu0
        %v1836 = vadd.f32 %v1547, %v1835
        %v1837 = vpop.f32.mrb[0].mxu0
        %1838 = vmatprep.mubr.f32.mxu0 %v1620
        %1839 = vmatmul.mubr.f32.gmra.mrb[0].mxu0 %v836
        %v1840 = vpop.f32.mrb[0].mxu0
        %v1841 = vadd.f32 %v1552, %v1840
        %v1842 = vpop.f32.mrb[0].mxu0
        %1843 = vmatprep.mubr.f32.mxu0 %v1622
        %1844 = vmatmul.mubr.f32.gmra.mrb[0].mxu0 %v837
        %v1845 = vpop.f32.mrb[0].mxu0
        %v1846 = vadd.f32 %v1557, %v1845
        %v1847 = vpop.f32.mrb[0].mxu0
        %1848 = vdwg.mxu0
        %s1849 = scalar_lea.vmem [#allocation2], 48
        %v1850 = vld [vmem:[%s1849] sm:$0xff]
        %v1851 = vld [vmem:[%s1849 + $0x8] sm:$0xff]
        %v1852 = vld [vmem:[%s1849 + $0x10] sm:$0x3]
        %v1853 = vld [vmem:[%s1849 + $0x18] sm:$0xff]
        %v1854 = vld [vmem:[%s1849 + $0x20] sm:$0xff]
        %v1855 = vld [vmem:[%s1849 + $0x28] sm:$0x3]
        %v1856 = vld [vmem:[%s1849 + $0x30] sm:$0xff]
        %v1857 = vld [vmem:[%s1849 + $0x38] sm:$0xff]
        %v1858 = vld [vmem:[%s1849 + $0x40] sm:$0x3]
        %v1859 = vld [vmem:[%s1849 + $0x48] sm:$0xff]
        %v1860 = vld [vmem:[%s1849 + $0x50] sm:$0xff]
        %v1861 = vld [vmem:[%s1849 + $0x58] sm:$0x3]
        %v1862 = vld [vmem:[%s1849 + $0x60] sm:$0xff]
        %v1863 = vld [vmem:[%s1849 + $0x68] sm:$0xff]
        %v1864 = vld [vmem:[%s1849 + $0x70] sm:$0x3]
        %v1865 = vld [vmem:[%s1849 + $0x78] sm:$0xff]
        %v1866 = vld [vmem:[%s1849 + $0x80] sm:$0xff]
        %v1867 = vld [vmem:[%s1849 + $0x88] sm:$0x3]
        %v1868 = vld [vmem:[%s1849 + $0x90] sm:$0xff]
        %v1869 = vld [vmem:[%s1849 + $0x98] sm:$0xff]
        %v1870 = vld [vmem:[%s1849 + $0xa0] sm:$0x3]
        %v1871 = vld [vmem:[%s1849 + $0xa8] sm:$0xff]
        %v1872 = vld [vmem:[%s1849 + $0xb0] sm:$0xff]
        %v1873 = vld [vmem:[%s1849 + $0xb8] sm:$0x3]
        %v1874 = vld [vmem:[%s1849 + $0xc0] sm:$0xff]
        %v1875 = vld [vmem:[%s1849 + $0xc8] sm:$0xff]
        %v1876 = vld [vmem:[%s1849 + $0xd0] sm:$0x3]
        %v1877 = vld [vmem:[%s1849 + $0xd8] sm:$0xff]
        %v1878 = vld [vmem:[%s1849 + $0xe0] sm:$0xff]
        %v1879 = vld [vmem:[%s1849 + $0xe8] sm:$0x3]
        %v1880 = vld [vmem:[%s1849 + $0xf0] sm:$0xff]
        %v1881 = vld [vmem:[%s1849 + $0xf8] sm:$0xff]
        %v1882 = vld [vmem:[%s1849 + $0x100] sm:$0x3]
        %v1883 = vld [vmem:[%s1849 + $0x108] sm:$0xff]
        %v1884 = vld [vmem:[%s1849 + $0x110] sm:$0xff]
        %v1885 = vld [vmem:[%s1849 + $0x118] sm:$0x3]
        %v1886 = vld [vmem:[%s1849 + $0x120] sm:$0xff]
        %v1887 = vld [vmem:[%s1849 + $0x128] sm:$0xff]
        %v1888 = vld [vmem:[%s1849 + $0x130] sm:$0x3]
        %v1889 = vld [vmem:[%s1849 + $0x138] sm:$0xff]
        %v1890 = vld [vmem:[%s1849 + $0x140] sm:$0xff]
        %v1891 = vld [vmem:[%s1849 + $0x148] sm:$0x3]
        %v1892 = vld [vmem:[%s1849 + $0x150] sm:$0xff]
        %v1893 = vld [vmem:[%s1849 + $0x158] sm:$0xff]
        %v1894 = vld [vmem:[%s1849 + $0x160] sm:$0x3]
        %v1895 = vld [vmem:[%s1849 + $0x168] sm:$0xff]
        %v1896 = vld [vmem:[%s1849 + $0x170] sm:$0xff]
        %v1897 = vld [vmem:[%s1849 + $0x178] sm:$0x3]
        %v1946 = vrot.slane %v1850, 1
        %v1947 = vrot.slane %v1851, 1
        %v1948 = vsel %vm548, %v1946, %v1947
        %v1949 = vrot.slane %v1852, 1
        %v1950 = vsel %vm548, %v1947, %v1949
        %v1951 = vrot.slane %v1853, 1
        %v1952 = vrot.slane %v1854, 1
        %v1953 = vsel %vm548, %v1951, %v1952
        %v1954 = vrot.slane %v1855, 1
        %v1955 = vsel %vm548, %v1952, %v1954
        %v1956 = vrot.slane %v1856, 1
        %v1957 = vrot.slane %v1857, 1
        %v1958 = vsel %vm548, %v1956, %v1957
        %v1959 = vrot.slane %v1858, 1
        %v1960 = vsel %vm548, %v1957, %v1959
        %v1961 = vrot.slane %v1859, 1
        %v1962 = vrot.slane %v1860, 1
        %v1963 = vsel %vm548, %v1961, %v1962
        %v1964 = vrot.slane %v1861, 1
        %v1965 = vsel %vm548, %v1962, %v1964
        %v1966 = vrot.slane %v1862, 1
        %v1967 = vrot.slane %v1863, 1
        %v1968 = vsel %vm548, %v1966, %v1967
        %v1969 = vrot.slane %v1864, 1
        %v1970 = vsel %vm548, %v1967, %v1969
        %v1971 = vrot.slane %v1865, 1
        %v1972 = vrot.slane %v1866, 1
        %v1973 = vsel %vm548, %v1971, %v1972
        %v1974 = vrot.slane %v1867, 1
        %v1975 = vsel %vm548, %v1972, %v1974
        %v1976 = vrot.slane %v1868, 1
        %v1977 = vrot.slane %v1869, 1
        %v1978 = vsel %vm548, %v1976, %v1977
        %v1979 = vrot.slane %v1870, 1
        %v1980 = vsel %vm548, %v1977, %v1979
        %v1981 = vrot.slane %v1871, 1
        %v1982 = vrot.slane %v1872, 1
        %v1983 = vsel %vm548, %v1981, %v1982
        %v1984 = vrot.slane %v1873, 1
        %v1985 = vsel %vm548, %v1982, %v1984
        %v1986 = vrot.slane %v1874, 1
        %v1987 = vrot.slane %v1875, 1
        %v1988 = vsel %vm548, %v1986, %v1987
        %v1989 = vrot.slane %v1876, 1
        %v1990 = vsel %vm548, %v1987, %v1989
        %v1991 = vrot.slane %v1877, 1
        %v1992 = vrot.slane %v1878, 1
        %v1993 = vsel %vm548, %v1991, %v1992
        %v1994 = vrot.slane %v1879, 1
        %v1995 = vsel %vm548, %v1992, %v1994
        %v1996 = vrot.slane %v1880, 1
        %v1997 = vrot.slane %v1881, 1
        %v1998 = vsel %vm548, %v1996, %v1997
        %v1999 = vrot.slane %v1882, 1
        %v2000 = vsel %vm548, %v1997, %v1999
        %v2001 = vrot.slane %v1883, 1
        %v2002 = vrot.slane %v1884, 1
        %v2003 = vsel %vm548, %v2001, %v2002
        %v2004 = vrot.slane %v1885, 1
        %v2005 = vsel %vm548, %v2002, %v2004
        %v2006 = vrot.slane %v1886, 1
        %v2007 = vrot.slane %v1887, 1
        %v2008 = vsel %vm548, %v2006, %v2007
        %v2009 = vrot.slane %v1888, 1
        %v2010 = vsel %vm548, %v2007, %v2009
        %v2011 = vrot.slane %v1889, 1
        %v2012 = vrot.slane %v1890, 1
        %v2013 = vsel %vm548, %v2011, %v2012
        %v2014 = vrot.slane %v1891, 1
        %v2015 = vsel %vm548, %v2012, %v2014
        %v2016 = vrot.slane %v1892, 1
        %v2017 = vrot.slane %v1893, 1
        %v2018 = vsel %vm548, %v2016, %v2017
        %v2019 = vrot.slane %v1894, 1
        %v2020 = vsel %vm548, %v2017, %v2019
        %v2021 = vrot.slane %v1895, 1
        %v2022 = vrot.slane %v1896, 1
        %v2023 = vsel %vm548, %v2021, %v2022
        %v2024 = vrot.slane %v1897, 1
        %v2025 = vsel %vm548, %v2022, %v2024
        %2026 = vrot.lane.b32.xlu0 %v1948, 64
        %v2027 = vpop.permute.xlu0 %2026
        %2028 = vrot.lane.b32.xlu0 %v1950, 64
        %v2029 = vpop.permute.xlu0 %2028
        %2030 = vrot.lane.b32.xlu0 %v1953, 64
        %v2031 = vpop.permute.xlu0 %2030
        %2032 = vrot.lane.b32.xlu0 %v1955, 64
        %v2033 = vpop.permute.xlu0 %2032
        %2034 = vrot.lane.b32.xlu0 %v1958, 64
        %v2035 = vpop.permute.xlu0 %2034
        %2036 = vrot.lane.b32.xlu0 %v1960, 64
        %v2037 = vpop.permute.xlu0 %2036
        %2038 = vrot.lane.b32.xlu0 %v1963, 64
        %v2039 = vpop.permute.xlu0 %2038
        %2040 = vrot.lane.b32.xlu0 %v1965, 64
        %v2041 = vpop.permute.xlu0 %2040
        %2042 = vrot.lane.b32.xlu0 %v1968, 64
        %v2043 = vpop.permute.xlu0 %2042
        %2044 = vrot.lane.b32.xlu0 %v1970, 64
        %v2045 = vpop.permute.xlu0 %2044
        %2046 = vrot.lane.b32.xlu0 %v1973, 64
        %v2047 = vpop.permute.xlu0 %2046
        %2048 = vrot.lane.b32.xlu0 %v1975, 64
        %v2049 = vpop.permute.xlu0 %2048
        %2050 = vrot.lane.b32.xlu0 %v1978, 64
        %v2051 = vpop.permute.xlu0 %2050
        %2052 = vrot.lane.b32.xlu0 %v1980, 64
        %v2053 = vpop.permute.xlu0 %2052
        %2054 = vrot.lane.b32.xlu0 %v1983, 64
        %v2055 = vpop.permute.xlu0 %2054
        %2056 = vrot.lane.b32.xlu0 %v1985, 64
        %v2057 = vpop.permute.xlu0 %2056
        %2058 = vrot.lane.b32.xlu0 %v1988, 64
        %v2059 = vpop.permute.xlu0 %2058
        %2060 = vrot.lane.b32.xlu0 %v1990, 64
        %v2061 = vpop.permute.xlu0 %2060
        %2062 = vrot.lane.b32.xlu0 %v1993, 64
        %v2063 = vpop.permute.xlu0 %2062
        %2064 = vrot.lane.b32.xlu0 %v1995, 64
        %v2065 = vpop.permute.xlu0 %2064
        %2066 = vrot.lane.b32.xlu0 %v1998, 64
        %v2067 = vpop.permute.xlu0 %2066
        %2068 = vrot.lane.b32.xlu0 %v2000, 64
        %v2069 = vpop.permute.xlu0 %2068
        %2070 = vrot.lane.b32.xlu0 %v2003, 64
        %v2071 = vpop.permute.xlu0 %2070
        %2072 = vrot.lane.b32.xlu0 %v2005, 64
        %v2073 = vpop.permute.xlu0 %2072
        %2074 = vrot.lane.b32.xlu0 %v2008, 64
        %v2075 = vpop.permute.xlu0 %2074
        %2076 = vrot.lane.b32.xlu0 %v2010, 64
        %v2077 = vpop.permute.xlu0 %2076
        %2078 = vrot.lane.b32.xlu0 %v2013, 64
        %v2079 = vpop.permute.xlu0 %2078
        %2080 = vrot.lane.b32.xlu0 %v2015, 64
        %v2081 = vpop.permute.xlu0 %2080
        %2082 = vrot.lane.b32.xlu0 %v2018, 64
        %v2083 = vpop.permute.xlu0 %2082
        %2084 = vrot.lane.b32.xlu0 %v2020, 64
        %v2085 = vpop.permute.xlu0 %2084
        %2086 = vrot.lane.b32.xlu0 %v2023, 64
        %v2087 = vpop.permute.xlu0 %2086
        %2088 = vrot.lane.b32.xlu0 %v2025, 64
        %v2089 = vpop.permute.xlu0 %2088
        %v2122 = vrot.slane %v1850, 2
        %v2123 = vrot.slane %v1851, 2
        %v2124 = vsel %vm725, %v2122, %v2123
        %v2125 = vrot.slane %v1852, 2
        %v2126 = vsel %vm725, %v2123, %v2125
        %v2127 = vrot.slane %v1853, 2
        %v2128 = vrot.slane %v1854, 2
        %v2129 = vsel %vm725, %v2127, %v2128
        %v2130 = vrot.slane %v1855, 2
        %v2131 = vsel %vm725, %v2128, %v2130
        %v2132 = vrot.slane %v1856, 2
        %v2133 = vrot.slane %v1857, 2
        %v2134 = vsel %vm725, %v2132, %v2133
        %v2135 = vrot.slane %v1858, 2
        %v2136 = vsel %vm725, %v2133, %v2135
        %v2137 = vrot.slane %v1859, 2
        %v2138 = vrot.slane %v1860, 2
        %v2139 = vsel %vm725, %v2137, %v2138
        %v2140 = vrot.slane %v1861, 2
        %v2141 = vsel %vm725, %v2138, %v2140
        %v2142 = vrot.slane %v1862, 2
        %v2143 = vrot.slane %v1863, 2
        %v2144 = vsel %vm725, %v2142, %v2143
        %v2145 = vrot.slane %v1864, 2
        %v2146 = vsel %vm725, %v2143, %v2145
        %v2147 = vrot.slane %v1865, 2
        %v2148 = vrot.slane %v1866, 2
        %v2149 = vsel %vm725, %v2147, %v2148
        %v2150 = vrot.slane %v1867, 2
        %v2151 = vsel %vm725, %v2148, %v2150
        %v2152 = vrot.slane %v1868, 2
        %v2153 = vrot.slane %v1869, 2
        %v2154 = vsel %vm725, %v2152, %v2153
        %v2155 = vrot.slane %v1870, 2
        %v2156 = vsel %vm725, %v2153, %v2155
        %v2157 = vrot.slane %v1871, 2
        %v2158 = vrot.slane %v1872, 2
        %v2159 = vsel %vm725, %v2157, %v2158
        %v2160 = vrot.slane %v1873, 2
        %v2161 = vsel %vm725, %v2158, %v2160
        %v2162 = vrot.slane %v1874, 2
        %v2163 = vrot.slane %v1875, 2
        %v2164 = vsel %vm725, %v2162, %v2163
        %v2165 = vrot.slane %v1876, 2
        %v2166 = vsel %vm725, %v2163, %v2165
        %v2167 = vrot.slane %v1877, 2
        %v2168 = vrot.slane %v1878, 2
        %v2169 = vsel %vm725, %v2167, %v2168
        %v2170 = vrot.slane %v1879, 2
        %v2171 = vsel %vm725, %v2168, %v2170
        %v2172 = vrot.slane %v1880, 2
        %v2173 = vrot.slane %v1881, 2
        %v2174 = vsel %vm725, %v2172, %v2173
        %v2175 = vrot.slane %v1882, 2
        %v2176 = vsel %vm725, %v2173, %v2175
        %v2177 = vrot.slane %v1883, 2
        %v2178 = vrot.slane %v1884, 2
        %v2179 = vsel %vm725, %v2177, %v2178
        %v2180 = vrot.slane %v1885, 2
        %v2181 = vsel %vm725, %v2178, %v2180
        %v2182 = vrot.slane %v1886, 2
        %v2183 = vrot.slane %v1887, 2
        %v2184 = vsel %vm725, %v2182, %v2183
        %v2185 = vrot.slane %v1888, 2
        %v2186 = vsel %vm725, %v2183, %v2185
        %v2187 = vrot.slane %v1889, 2
        %v2188 = vrot.slane %v1890, 2
        %v2189 = vsel %vm725, %v2187, %v2188
        %v2190 = vrot.slane %v1891, 2
        %v2191 = vsel %vm725, %v2188, %v2190
        %v2192 = vrot.slane %v1892, 2
        %v2193 = vrot.slane %v1893, 2
        %v2194 = vsel %vm725, %v2192, %v2193
        %v2195 = vrot.slane %v1894, 2
        %v2196 = vsel %vm725, %v2193, %v2195
        %v2197 = vrot.slane %v1895, 2
        %v2198 = vrot.slane %v1896, 2
        %v2199 = vsel %vm725, %v2197, %v2198
        %v2200 = vrot.slane %v1897, 2
        %v2201 = vsel %vm725, %v2198, %v2200
        %v2202 = vsel %vm363, %v1850, %v2027
        %v2203 = vsel %vm363, %v1851, %v2029
        %v2204 = vsel %vm363, %v1853, %v2031
        %v2205 = vsel %vm363, %v1854, %v2033
        %v2206 = vsel %vm363, %v1856, %v2035
        %v2207 = vsel %vm363, %v1857, %v2037
        %v2208 = vsel %vm363, %v1859, %v2039
        %v2209 = vsel %vm363, %v1860, %v2041
        %v2210 = vsel %vm363, %v1862, %v2043
        %v2211 = vsel %vm363, %v1863, %v2045
        %v2212 = vsel %vm363, %v1865, %v2047
        %v2213 = vsel %vm363, %v1866, %v2049
        %v2214 = vsel %vm363, %v1868, %v2051
        %v2215 = vsel %vm363, %v1869, %v2053
        %v2216 = vsel %vm363, %v1871, %v2055
        %v2217 = vsel %vm363, %v1872, %v2057
        %v2218 = vsel %vm363, %v1874, %v2059
        %v2219 = vsel %vm363, %v1875, %v2061
        %v2220 = vsel %vm363, %v1877, %v2063
        %v2221 = vsel %vm363, %v1878, %v2065
        %v2222 = vsel %vm363, %v1880, %v2067
        %v2223 = vsel %vm363, %v1881, %v2069
        %v2224 = vsel %vm363, %v1883, %v2071
        %v2225 = vsel %vm363, %v1884, %v2073
        %v2226 = vsel %vm363, %v1886, %v2075
        %v2227 = vsel %vm363, %v1887, %v2077
        %v2228 = vsel %vm363, %v1889, %v2079
        %v2229 = vsel %vm363, %v1890, %v2081
        %v2230 = vsel %vm363, %v1892, %v2083
        %v2231 = vsel %vm363, %v1893, %v2085
        %v2232 = vsel %vm363, %v1895, %v2087
        %v2233 = vsel %vm363, %v1896, %v2089
        %s2234 = scalar_lea.vmem %s1, 384
        %v2235 = vld [vmem:[%s2234] sm:$0xff]
        %v2236 = vld [vmem:[%s2234 + $0x8] sm:$0xff]
        %v2237 = vld [vmem:[%s2234 + $0x10] sm:$0xff]
        %v2238 = vld [vmem:[%s2234 + $0x18] sm:$0xff]
        %v2239 = vld [vmem:[%s2234 + $0x20] sm:$0xff]
        %v2240 = vld [vmem:[%s2234 + $0x28] sm:$0xff]
        %v2241 = vld [vmem:[%s2234 + $0x30] sm:$0xff]
        %v2242 = vld [vmem:[%s2234 + $0x38] sm:$0xff]
        %v2243 = vld [vmem:[%s2234 + $0x40] sm:$0xff]
        %v2244 = vld [vmem:[%s2234 + $0x48] sm:$0xff]
        %v2245 = vld [vmem:[%s2234 + $0x50] sm:$0xff]
        %v2246 = vld [vmem:[%s2234 + $0x58] sm:$0xff]
        %v2247 = vld [vmem:[%s2234 + $0x60] sm:$0xff]
        %v2248 = vld [vmem:[%s2234 + $0x68] sm:$0xff]
        %v2249 = vld [vmem:[%s2234 + $0x70] sm:$0xff]
        %v2250 = vld [vmem:[%s2234 + $0x78] sm:$0xff]
        %v2251 = vld [vmem:[%s2234 + $0x80] sm:$0xff]
        %v2252 = vld [vmem:[%s2234 + $0x88] sm:$0xff]
        %v2253 = vld [vmem:[%s2234 + $0x90] sm:$0xff]
        %v2254 = vld [vmem:[%s2234 + $0x98] sm:$0xff]
        %v2255 = vld [vmem:[%s2234 + $0xa0] sm:$0xff]
        %v2256 = vld [vmem:[%s2234 + $0xa8] sm:$0xff]
        %v2257 = vld [vmem:[%s2234 + $0xb0] sm:$0xff]
        %v2258 = vld [vmem:[%s2234 + $0xb8] sm:$0xff]
        %v2259 = vsel %vm363, %v2124, 0
        %v2261 = vsel %vm363, %v2126, 0
        %v2263 = vsel %vm363, %v2129, 0
        %v2265 = vsel %vm363, %v2131, 0
        %v2267 = vsel %vm363, %v2134, 0
        %v2269 = vsel %vm363, %v2136, 0
        %v2271 = vsel %vm363, %v2139, 0
        %v2273 = vsel %vm363, %v2141, 0
        %v2275 = vsel %vm363, %v2144, 0
        %v2277 = vsel %vm363, %v2146, 0
        %v2279 = vsel %vm363, %v2149, 0
        %v2281 = vsel %vm363, %v2151, 0
        %v2283 = vsel %vm363, %v2154, 0
        %v2285 = vsel %vm363, %v2156, 0
        %v2287 = vsel %vm363, %v2159, 0
        %v2289 = vsel %vm363, %v2161, 0
        %v2291 = vsel %vm363, %v2164, 0
        %v2293 = vsel %vm363, %v2166, 0
        %v2295 = vsel %vm363, %v2169, 0
        %v2297 = vsel %vm363, %v2171, 0
        %v2299 = vsel %vm363, %v2174, 0
        %v2301 = vsel %vm363, %v2176, 0
        %v2303 = vsel %vm363, %v2179, 0
        %v2305 = vsel %vm363, %v2181, 0
        %v2307 = vsel %vm363, %v2184, 0
        %v2309 = vsel %vm363, %v2186, 0
        %v2311 = vsel %vm363, %v2189, 0
        %v2313 = vsel %vm363, %v2191, 0
        %v2315 = vsel %vm363, %v2194, 0
        %v2317 = vsel %vm363, %v2196, 0
        %v2319 = vsel %vm363, %v2199, 0
        %v2321 = vsel %vm363, %v2201, 0
        %2323 = vmatprep.subr.mxu0 0.0
        %2324 = vmatpush1.msra.mxu0 %v2235
        %2325 = vmatprep.subr.mxu0 0.0
        %2326 = vmatpush1.msra.mxu0 %v2236
        %2327 = vmatprep.subr.mxu0 0.0
        %2328 = vmatpush1.msra.mxu0 %v2237
        %2329 = vmatprep.subr.mxu0 0.0
        %2330 = vmatpush1.msra.mxu0 %v2238
        %2331 = vmatprep.subr.mxu0 0.0
        %2332 = vmatpush1.msra.mxu0 %v2239
        %2333 = vmatprep.subr.mxu0 0.0
        %2334 = vmatpush1.msra.mxu0 %v2240
        %2335 = vmatprep.subr.mxu0 0.0
        %2336 = vmatpush1.msra.mxu0 %v2241
        %2337 = vmatprep.subr.mxu0 0.0
        %2338 = vmatpush1.msra.mxu0 %v2242
        %2339 = vmatprep.subr.mxu0 0.0
        %2340 = vmatpush1.msra.mxu0 %v2243
        %2341 = vmatprep.subr.mxu0 0.0
        %2342 = vmatpush1.msra.mxu0 %v2244
        %2343 = vmatprep.subr.mxu0 0.0
        %2344 = vmatpush1.msra.mxu0 %v2245
        %2345 = vmatprep.subr.mxu0 0.0
        %2346 = vmatpush1.msra.mxu0 %v2246
        %2347 = vmatprep.subr.mxu0 0.0
        %2348 = vmatpush1.msra.mxu0 %v2247
        %2349 = vmatprep.subr.mxu0 0.0
        %2350 = vmatpush1.msra.mxu0 %v2248
        %2351 = vmatprep.subr.mxu0 0.0
        %2352 = vmatpush1.msra.mxu0 %v2249
        %2353 = vmatprep.subr.mxu0 0.0
        %2354 = vmatpush1.msra.mxu0 %v2250
        %2355 = vmatprep.subr.mxu0 0.0
        %2356 = vmatpush1.msra.mxu0 %v2251
        %2357 = vmatprep.subr.mxu0 0.0
        %2358 = vmatpush1.msra.mxu0 %v2252
        %2359 = vmatprep.subr.mxu0 0.0
        %2360 = vmatpush1.msra.mxu0 %v2253
        %2361 = vmatprep.subr.mxu0 0.0
        %2362 = vmatpush1.msra.mxu0 %v2254
        %2363 = vmatprep.subr.mxu0 0.0
        %2364 = vmatpush1.msra.mxu0 %v2255
        %2365 = vmatprep.subr.mxu0 0.0
        %2366 = vmatpush1.msra.mxu0 %v2256
        %2367 = vmatprep.subr.mxu0 0.0
        %2368 = vmatpush1.msra.mxu0 %v2257
        %2369 = vmatprep.subr.mxu0 0.0
        %2370 = vmatpush1.msra.mxu0 %v2258
        %2371 = vmatprep.subr.mxu0 0.0
        %2372 = vmatpush1.msra.mxu0 0.0
        %2373 = vmatprep.subr.mxu0 0.0
        %2374 = vmatpush1.msra.mxu0 0.0
        %2375 = vmatprep.subr.mxu0 0.0
        %2376 = vmatpush1.msra.mxu0 0.0
        %2377 = vmatprep.subr.mxu0 0.0
        %2378 = vmatpush1.msra.mxu0 0.0
        %2379 = vmatprep.subr.mxu0 0.0
        %2380 = vmatpush1.msra.mxu0 0.0
        %2381 = vmatprep.subr.mxu0 0.0
        %2382 = vmatpush1.msra.mxu0 0.0
        %2383 = vmatprep.subr.mxu0 0.0
        %2384 = vmatpush1.msra.mxu0 0.0
        %2385 = vmatprep.subr.mxu0 0.0
        %2386 = vmatpush1.msra.mxu0 0.0
        %2387 = vmatprep.mubr.f32.mxu0 %v2259
        %2388 = vmatmul.mubr.f32.gmra.mrb[0].mxu0 %v2202
        %v2389 = vpop.f32.mrb[0].mxu0
        %v2390 = vadd.f32 0.0, %v2389
        %v2391 = vpop.f32.mrb[0].mxu0
        %2392 = vmatprep.mubr.f32.mxu0 %v2261
        %2393 = vmatmul.mubr.f32.gmra.mrb[0].mxu0 %v2203
        %v2394 = vpop.f32.mrb[0].mxu0
        %v2395 = vadd.f32 0.0, %v2394
        %v2396 = vpop.f32.mrb[0].mxu0
        %2397 = vmatprep.mubr.f32.mxu0 %v2263
        %2398 = vmatmul.mubr.f32.gmra.mrb[0].mxu0 %v2204
        %v2399 = vpop.f32.mrb[0].mxu0
        %v2400 = vadd.f32 0.0, %v2399
        %v2401 = vpop.f32.mrb[0].mxu0
        %2402 = vmatprep.mubr.f32.mxu0 %v2265
        %2403 = vmatmul.mubr.f32.gmra.mrb[0].mxu0 %v2205
        %v2404 = vpop.f32.mrb[0].mxu0
        %v2405 = vadd.f32 0.0, %v2404
        %v2406 = vpop.f32.mrb[0].mxu0
        %2407 = vmatprep.mubr.f32.mxu0 %v2267
        %2408 = vmatmul.mubr.f32.gmra.mrb[0].mxu0 %v2206
        %v2409 = vpop.f32.mrb[0].mxu0
        %v2410 = vadd.f32 0.0, %v2409
        %v2411 = vpop.f32.mrb[0].mxu0
        %2412 = vmatprep.mubr.f32.mxu0 %v2269
        %2413 = vmatmul.mubr.f32.gmra.mrb[0].mxu0 %v2207
        %v2414 = vpop.f32.mrb[0].mxu0
        %v2415 = vadd.f32 0.0, %v2414
        %v2416 = vpop.f32.mrb[0].mxu0
        %2417 = vmatprep.mubr.f32.mxu0 %v2271
        %2418 = vmatmul.mubr.f32.gmra.mrb[0].mxu0 %v2208
        %v2419 = vpop.f32.mrb[0].mxu0
        %v2420 = vadd.f32 0.0, %v2419
        %v2421 = vpop.f32.mrb[0].mxu0
        %2422 = vmatprep.mubr.f32.mxu0 %v2273
        %2423 = vmatmul.mubr.f32.gmra.mrb[0].mxu0 %v2209
        %v2424 = vpop.f32.mrb[0].mxu0
        %v2425 = vadd.f32 0.0, %v2424
        %v2426 = vpop.f32.mrb[0].mxu0
        %2427 = vmatprep.mubr.f32.mxu0 %v2275
        %2428 = vmatmul.mubr.f32.gmra.mrb[0].mxu0 %v2210
        %v2429 = vpop.f32.mrb[0].mxu0
        %v2430 = vadd.f32 0.0, %v2429
        %v2431 = vpop.f32.mrb[0].mxu0
        %2432 = vmatprep.mubr.f32.mxu0 %v2277
        %2433 = vmatmul.mubr.f32.gmra.mrb[0].mxu0 %v2211
        %v2434 = vpop.f32.mrb[0].mxu0
        %v2435 = vadd.f32 0.0, %v2434
        %v2436 = vpop.f32.mrb[0].mxu0
        %2437 = vmatprep.mubr.f32.mxu0 %v2279
        %2438 = vmatmul.mubr.f32.gmra.mrb[0].mxu0 %v2212
        %v2439 = vpop.f32.mrb[0].mxu0
        %v2440 = vadd.f32 0.0, %v2439
        %v2441 = vpop.f32.mrb[0].mxu0
        %2442 = vmatprep.mubr.f32.mxu0 %v2281
        %2443 = vmatmul.mubr.f32.gmra.mrb[0].mxu0 %v2213
        %v2444 = vpop.f32.mrb[0].mxu0
        %v2445 = vadd.f32 0.0, %v2444
        %v2446 = vpop.f32.mrb[0].mxu0
        %2447 = vmatprep.mubr.f32.mxu0 %v2283
        %2448 = vmatmul.mubr.f32.gmra.mrb[0].mxu0 %v2214
        %v2449 = vpop.f32.mrb[0].mxu0
        %v2450 = vadd.f32 0.0, %v2449
        %v2451 = vpop.f32.mrb[0].mxu0
        %2452 = vmatprep.mubr.f32.mxu0 %v2285
        %2453 = vmatmul.mubr.f32.gmra.mrb[0].mxu0 %v2215
        %v2454 = vpop.f32.mrb[0].mxu0
        %v2455 = vadd.f32 0.0, %v2454
        %v2456 = vpop.f32.mrb[0].mxu0
        %2457 = vmatprep.mubr.f32.mxu0 %v2287
        %2458 = vmatmul.mubr.f32.gmra.mrb[0].mxu0 %v2216
        %v2459 = vpop.f32.mrb[0].mxu0
        %v2460 = vadd.f32 0.0, %v2459
        %v2461 = vpop.f32.mrb[0].mxu0
        %2462 = vmatprep.mubr.f32.mxu0 %v2289
        %2463 = vmatmul.mubr.f32.gmra.mrb[0].mxu0 %v2217
        %v2464 = vpop.f32.mrb[0].mxu0
        %v2465 = vadd.f32 0.0, %v2464
        %v2466 = vpop.f32.mrb[0].mxu0
        %2467 = vmatprep.mubr.f32.mxu0 %v2291
        %2468 = vmatmul.mubr.f32.gmra.mrb[0].mxu0 %v2218
        %v2469 = vpop.f32.mrb[0].mxu0
        %v2470 = vadd.f32 0.0, %v2469
        %v2471 = vpop.f32.mrb[0].mxu0
        %2472 = vmatprep.mubr.f32.mxu0 %v2293
        %2473 = vmatmul.mubr.f32.gmra.mrb[0].mxu0 %v2219
        %v2474 = vpop.f32.mrb[0].mxu0
        %v2475 = vadd.f32 0.0, %v2474
        %v2476 = vpop.f32.mrb[0].mxu0
        %2477 = vmatprep.mubr.f32.mxu0 %v2295
        %2478 = vmatmul.mubr.f32.gmra.mrb[0].mxu0 %v2220
        %v2479 = vpop.f32.mrb[0].mxu0
        %v2480 = vadd.f32 0.0, %v2479
        %v2481 = vpop.f32.mrb[0].mxu0
        %2482 = vmatprep.mubr.f32.mxu0 %v2297
        %2483 = vmatmul.mubr.f32.gmra.mrb[0].mxu0 %v2221
        %v2484 = vpop.f32.mrb[0].mxu0
        %v2485 = vadd.f32 0.0, %v2484
        %v2486 = vpop.f32.mrb[0].mxu0
        %2487 = vmatprep.mubr.f32.mxu0 %v2299
        %2488 = vmatmul.mubr.f32.gmra.mrb[0].mxu0 %v2222
        %v2489 = vpop.f32.mrb[0].mxu0
        %v2490 = vadd.f32 0.0, %v2489
        %v2491 = vpop.f32.mrb[0].mxu0
        %2492 = vmatprep.mubr.f32.mxu0 %v2301
        %2493 = vmatmul.mubr.f32.gmra.mrb[0].mxu0 %v2223
        %v2494 = vpop.f32.mrb[0].mxu0
        %v2495 = vadd.f32 0.0, %v2494
        %v2496 = vpop.f32.mrb[0].mxu0
        %2497 = vmatprep.mubr.f32.mxu0 %v2303
        %2498 = vmatmul.mubr.f32.gmra.mrb[0].mxu0 %v2224
        %v2499 = vpop.f32.mrb[0].mxu0
        %v2500 = vadd.f32 0.0, %v2499
        %v2501 = vpop.f32.mrb[0].mxu0
        %2502 = vmatprep.mubr.f32.mxu0 %v2305
        %2503 = vmatmul.mubr.f32.gmra.mrb[0].mxu0 %v2225
        %v2504 = vpop.f32.mrb[0].mxu0
        %v2505 = vadd.f32 0.0, %v2504
        %v2506 = vpop.f32.mrb[0].mxu0
        %2507 = vmatprep.mubr.f32.mxu0 %v2307
        %2508 = vmatmul.mubr.f32.gmra.mrb[0].mxu0 %v2226
        %v2509 = vpop.f32.mrb[0].mxu0
        %v2510 = vadd.f32 0.0, %v2509
        %v2511 = vpop.f32.mrb[0].mxu0
        %2512 = vmatprep.mubr.f32.mxu0 %v2309
        %2513 = vmatmul.mubr.f32.gmra.mrb[0].mxu0 %v2227
        %v2514 = vpop.f32.mrb[0].mxu0
        %v2515 = vadd.f32 0.0, %v2514
        %v2516 = vpop.f32.mrb[0].mxu0
        %2517 = vmatprep.mubr.f32.mxu0 %v2311
        %2518 = vmatmul.mubr.f32.gmra.mrb[0].mxu0 %v2228
        %v2519 = vpop.f32.mrb[0].mxu0
        %v2520 = vadd.f32 0.0, %v2519
        %v2521 = vpop.f32.mrb[0].mxu0
        %2522 = vmatprep.mubr.f32.mxu0 %v2313
        %2523 = vmatmul.mubr.f32.gmra.mrb[0].mxu0 %v2229
        %v2524 = vpop.f32.mrb[0].mxu0
        %v2525 = vadd.f32 0.0, %v2524
        %v2526 = vpop.f32.mrb[0].mxu0
        %2527 = vmatprep.mubr.f32.mxu0 %v2315
        %2528 = vmatmul.mubr.f32.gmra.mrb[0].mxu0 %v2230
        %v2529 = vpop.f32.mrb[0].mxu0
        %v2530 = vadd.f32 0.0, %v2529
        %v2531 = vpop.f32.mrb[0].mxu0
        %2532 = vmatprep.mubr.f32.mxu0 %v2317
        %2533 = vmatmul.mubr.f32.gmra.mrb[0].mxu0 %v2231
        %v2534 = vpop.f32.mrb[0].mxu0
        %v2535 = vadd.f32 0.0, %v2534
        %v2536 = vpop.f32.mrb[0].mxu0
        %2537 = vmatprep.mubr.f32.mxu0 %v2319
        %2538 = vmatmul.mubr.f32.gmra.mrb[0].mxu0 %v2232
        %v2539 = vpop.f32.mrb[0].mxu0
        %v2540 = vadd.f32 0.0, %v2539
        %v2541 = vpop.f32.mrb[0].mxu0
        %2542 = vmatprep.mubr.f32.mxu0 %v2321
        %2543 = vmatmul.mubr.f32.gmra.mrb[0].mxu0 %v2233
        %v2544 = vpop.f32.mrb[0].mxu0
        %v2545 = vadd.f32 0.0, %v2544
        %v2546 = vpop.f32.mrb[0].mxu0
        %2547 = vdwg.mxu0
        %v2548 = vadd.f32 %v1691, %v2390
        %v2549 = vadd.f32 %v1696, %v2395
        %v2550 = vadd.f32 %v1701, %v2400
        %v2551 = vadd.f32 %v1706, %v2405
        %v2552 = vadd.f32 %v1711, %v2410
        %v2553 = vadd.f32 %v1716, %v2415
        %v2554 = vadd.f32 %v1721, %v2420
        %v2555 = vadd.f32 %v1726, %v2425
        %v2556 = vadd.f32 %v1731, %v2430
        %v2557 = vadd.f32 %v1736, %v2435
        %v2558 = vadd.f32 %v1741, %v2440
        %v2559 = vadd.f32 %v1746, %v2445
        %v2560 = vadd.f32 %v1751, %v2450
        %v2561 = vadd.f32 %v1756, %v2455
        %v2562 = vadd.f32 %v1761, %v2460
        %v2563 = vadd.f32 %v1766, %v2465
        %v2564 = vadd.f32 %v1771, %v2470
        %v2565 = vadd.f32 %v1776, %v2475
        %v2566 = vadd.f32 %v1781, %v2480
        %v2567 = vadd.f32 %v1786, %v2485
        %v2568 = vadd.f32 %v1791, %v2490
        %v2569 = vadd.f32 %v1796, %v2495
        %v2570 = vadd.f32 %v1801, %v2500
        %v2571 = vadd.f32 %v1806, %v2505
        %v2572 = vadd.f32 %v1811, %v2510
        %v2573 = vadd.f32 %v1816, %v2515
        %v2574 = vadd.f32 %v1821, %v2520
        %v2575 = vadd.f32 %v1826, %v2525
        %v2576 = vadd.f32 %v1831, %v2530
        %v2577 = vadd.f32 %v1836, %v2535
        %v2578 = vadd.f32 %v1841, %v2540
        %v2579 = vadd.f32 %v1846, %v2545
        %v2580 = vld [vmem:[%s2] sm:$0x1]
        %v2582 = vlaneseq
        %v2583 = vshrl.u32 %v2582, 7
        %v2584 = vsub.s32 0, %v2583
        %v2585 = vrot.slane %v2580, %v2584
        %v2587 = vadd.f32 %v2548, %v2585
        %v2588 = vadd.f32 %v2549, %v2585
        %v2589 = vadd.f32 %v2550, %v2585
        %v2590 = vadd.f32 %v2551, %v2585
        %v2591 = vadd.f32 %v2552, %v2585
        %v2592 = vadd.f32 %v2553, %v2585
        %v2593 = vadd.f32 %v2554, %v2585
        %v2594 = vadd.f32 %v2555, %v2585
        %v2595 = vadd.f32 %v2556, %v2585
        %v2596 = vadd.f32 %v2557, %v2585
        %v2597 = vadd.f32 %v2558, %v2585
        %v2598 = vadd.f32 %v2559, %v2585
        %v2599 = vadd.f32 %v2560, %v2585
        %v2600 = vadd.f32 %v2561, %v2585
        %v2601 = vadd.f32 %v2562, %v2585
        %v2602 = vadd.f32 %v2563, %v2585
        %v2603 = vadd.f32 %v2564, %v2585
        %v2604 = vadd.f32 %v2565, %v2585
        %v2605 = vadd.f32 %v2566, %v2585
        %v2606 = vadd.f32 %v2567, %v2585
        %v2607 = vadd.f32 %v2568, %v2585
        %v2608 = vadd.f32 %v2569, %v2585
        %v2609 = vadd.f32 %v2570, %v2585
        %v2610 = vadd.f32 %v2571, %v2585
        %v2611 = vadd.f32 %v2572, %v2585
        %v2612 = vadd.f32 %v2573, %v2585
        %v2613 = vadd.f32 %v2574, %v2585
        %v2614 = vadd.f32 %v2575, %v2585
        %v2615 = vadd.f32 %v2576, %v2585
        %v2616 = vadd.f32 %v2577, %v2585
        %v2617 = vadd.f32 %v2578, %v2585
        %v2618 = vadd.f32 %v2579, %v2585
        %vm2619 = vcmp.ge.f32.partialorder %v2587, 0.0
        %vm2620 = vcmp.ge.f32.partialorder %v2588, 0.0
        %vm2621 = vcmp.ge.f32.partialorder %v2589, 0.0
        %vm2622 = vcmp.ge.f32.partialorder %v2590, 0.0
        %vm2623 = vcmp.ge.f32.partialorder %v2591, 0.0
        %vm2624 = vcmp.ge.f32.partialorder %v2592, 0.0
        %vm2625 = vcmp.ge.f32.partialorder %v2593, 0.0
        %vm2626 = vcmp.ge.f32.partialorder %v2594, 0.0
        %vm2627 = vcmp.ge.f32.partialorder %v2595, 0.0
        %vm2628 = vcmp.ge.f32.partialorder %v2596, 0.0
        %vm2629 = vcmp.ge.f32.partialorder %v2597, 0.0
        %vm2630 = vcmp.ge.f32.partialorder %v2598, 0.0
        %vm2631 = vcmp.ge.f32.partialorder %v2599, 0.0
        %vm2632 = vcmp.ge.f32.partialorder %v2600, 0.0
        %vm2633 = vcmp.ge.f32.partialorder %v2601, 0.0
        %vm2634 = vcmp.ge.f32.partialorder %v2602, 0.0
        %vm2635 = vcmp.ge.f32.partialorder %v2603, 0.0
        %vm2636 = vcmp.ge.f32.partialorder %v2604, 0.0
        %vm2637 = vcmp.ge.f32.partialorder %v2605, 0.0
        %vm2638 = vcmp.ge.f32.partialorder %v2606, 0.0
        %vm2639 = vcmp.ge.f32.partialorder %v2607, 0.0
        %vm2640 = vcmp.ge.f32.partialorder %v2608, 0.0
        %vm2641 = vcmp.ge.f32.partialorder %v2609, 0.0
        %vm2642 = vcmp.ge.f32.partialorder %v2610, 0.0
        %vm2643 = vcmp.ge.f32.partialorder %v2611, 0.0
        %vm2644 = vcmp.ge.f32.partialorder %v2612, 0.0
        %vm2645 = vcmp.ge.f32.partialorder %v2613, 0.0
        %vm2646 = vcmp.ge.f32.partialorder %v2614, 0.0
        %vm2647 = vcmp.ge.f32.partialorder %v2615, 0.0
        %vm2648 = vcmp.ge.f32.partialorder %v2616, 0.0
        %vm2649 = vcmp.ge.f32.partialorder %v2617, 0.0
        %vm2650 = vcmp.ge.f32.partialorder %v2618, 0.0
        %v2651 = vmul.f32 %v2587, 0.2
        %v2652 = vmul.f32 %v2588, 0.2
        %v2653 = vmul.f32 %v2589, 0.2
        %v2654 = vmul.f32 %v2590, 0.2
        %v2655 = vmul.f32 %v2591, 0.2
        %v2656 = vmul.f32 %v2592, 0.2
        %v2657 = vmul.f32 %v2593, 0.2
        %v2658 = vmul.f32 %v2594, 0.2
        %v2659 = vmul.f32 %v2595, 0.2
        %v2660 = vmul.f32 %v2596, 0.2
        %v2661 = vmul.f32 %v2597, 0.2
        %v2662 = vmul.f32 %v2598, 0.2
        %v2663 = vmul.f32 %v2599, 0.2
        %v2664 = vmul.f32 %v2600, 0.2
        %v2665 = vmul.f32 %v2601, 0.2
        %v2666 = vmul.f32 %v2602, 0.2
        %v2667 = vmul.f32 %v2603, 0.2
        %v2668 = vmul.f32 %v2604, 0.2
        %v2669 = vmul.f32 %v2605, 0.2
        %v2670 = vmul.f32 %v2606, 0.2
        %v2671 = vmul.f32 %v2607, 0.2
        %v2672 = vmul.f32 %v2608, 0.2
        %v2673 = vmul.f32 %v2609, 0.2
        %v2674 = vmul.f32 %v2610, 0.2
        %v2675 = vmul.f32 %v2611, 0.2
        %v2676 = vmul.f32 %v2612, 0.2
        %v2677 = vmul.f32 %v2613, 0.2
        %v2678 = vmul.f32 %v2614, 0.2
        %v2679 = vmul.f32 %v2615, 0.2
        %v2680 = vmul.f32 %v2616, 0.2
        %v2681 = vmul.f32 %v2617, 0.2
        %v2682 = vmul.f32 %v2618, 0.2
        %v2683 = vsel %vm2619, %v2587, %v2651
        %v2684 = vsel %vm2620, %v2588, %v2652
        %v2685 = vsel %vm2621, %v2589, %v2653
        %v2686 = vsel %vm2622, %v2590, %v2654
        %v2687 = vsel %vm2623, %v2591, %v2655
        %v2688 = vsel %vm2624, %v2592, %v2656
        %v2689 = vsel %vm2625, %v2593, %v2657
        %v2690 = vsel %vm2626, %v2594, %v2658
        %v2691 = vsel %vm2627, %v2595, %v2659
        %v2692 = vsel %vm2628, %v2596, %v2660
        %v2693 = vsel %vm2629, %v2597, %v2661
        %v2694 = vsel %vm2630, %v2598, %v2662
        %v2695 = vsel %vm2631, %v2599, %v2663
        %v2696 = vsel %vm2632, %v2600, %v2664
        %v2697 = vsel %vm2633, %v2601, %v2665
        %v2698 = vsel %vm2634, %v2602, %v2666
        %v2699 = vsel %vm2635, %v2603, %v2667
        %v2700 = vsel %vm2636, %v2604, %v2668
        %v2701 = vsel %vm2637, %v2605, %v2669
        %v2702 = vsel %vm2638, %v2606, %v2670
        %v2703 = vsel %vm2639, %v2607, %v2671
        %v2704 = vsel %vm2640, %v2608, %v2672
        %v2705 = vsel %vm2641, %v2609, %v2673
        %v2706 = vsel %vm2642, %v2610, %v2674
        %v2707 = vsel %vm2643, %v2611, %v2675
        %v2708 = vsel %vm2644, %v2612, %v2676
        %v2709 = vsel %vm2645, %v2613, %v2677
        %v2710 = vsel %vm2646, %v2614, %v2678
        %v2711 = vsel %vm2647, %v2615, %v2679
        %v2712 = vsel %vm2648, %v2616, %v2680
        %v2713 = vsel %vm2649, %v2617, %v2681
        %v2714 = vsel %vm2650, %v2618, %v2682
        %vm2715 = vcmp.ge.f32.partialorder %v2683, 0.0
        %vm2716 = vcmp.ge.f32.partialorder %v2684, 0.0
        %vm2717 = vcmp.ge.f32.partialorder %v2685, 0.0
        %vm2718 = vcmp.ge.f32.partialorder %v2686, 0.0
        %vm2719 = vcmp.ge.f32.partialorder %v2687, 0.0
        %vm2720 = vcmp.ge.f32.partialorder %v2688, 0.0
        %vm2721 = vcmp.ge.f32.partialorder %v2689, 0.0
        %vm2722 = vcmp.ge.f32.partialorder %v2690, 0.0
        %vm2723 = vcmp.ge.f32.partialorder %v2691, 0.0
        %vm2724 = vcmp.ge.f32.partialorder %v2692, 0.0
        %vm2725 = vcmp.ge.f32.partialorder %v2693, 0.0
        %vm2726 = vcmp.ge.f32.partialorder %v2694, 0.0
        %vm2727 = vcmp.ge.f32.partialorder %v2695, 0.0
        %vm2728 = vcmp.ge.f32.partialorder %v2696, 0.0
        %vm2729 = vcmp.ge.f32.partialorder %v2697, 0.0
        %vm2730 = vcmp.ge.f32.partialorder %v2698, 0.0
        %vm2731 = vcmp.ge.f32.partialorder %v2699, 0.0
        %vm2732 = vcmp.ge.f32.partialorder %v2700, 0.0
        %vm2733 = vcmp.ge.f32.partialorder %v2701, 0.0
        %vm2734 = vcmp.ge.f32.partialorder %v2702, 0.0
        %vm2735 = vcmp.ge.f32.partialorder %v2703, 0.0
        %vm2736 = vcmp.ge.f32.partialorder %v2704, 0.0
        %vm2737 = vcmp.ge.f32.partialorder %v2705, 0.0
        %vm2738 = vcmp.ge.f32.partialorder %v2706, 0.0
        %vm2739 = vcmp.ge.f32.partialorder %v2707, 0.0
        %vm2740 = vcmp.ge.f32.partialorder %v2708, 0.0
        %vm2741 = vcmp.ge.f32.partialorder %v2709, 0.0
        %vm2742 = vcmp.ge.f32.partialorder %v2710, 0.0
        %vm2743 = vcmp.ge.f32.partialorder %v2711, 0.0
        %vm2744 = vcmp.ge.f32.partialorder %v2712, 0.0
        %vm2745 = vcmp.ge.f32.partialorder %v2713, 0.0
        %vm2746 = vcmp.ge.f32.partialorder %v2714, 0.0
        %v2747 = vmul.f32 %v2683, 0.01
        %v2748 = vmul.f32 %v2684, 0.01
        %v2749 = vmul.f32 %v2685, 0.01
        %v2750 = vmul.f32 %v2686, 0.01
        %v2751 = vmul.f32 %v2687, 0.01
        %v2752 = vmul.f32 %v2688, 0.01
        %v2753 = vmul.f32 %v2689, 0.01
        %v2754 = vmul.f32 %v2690, 0.01
        %v2755 = vmul.f32 %v2691, 0.01
        %v2756 = vmul.f32 %v2692, 0.01
        %v2757 = vmul.f32 %v2693, 0.01
        %v2758 = vmul.f32 %v2694, 0.01
        %v2759 = vmul.f32 %v2695, 0.01
        %v2760 = vmul.f32 %v2696, 0.01
        %v2761 = vmul.f32 %v2697, 0.01
        %v2762 = vmul.f32 %v2698, 0.01
        %v2763 = vmul.f32 %v2699, 0.01
        %v2764 = vmul.f32 %v2700, 0.01
        %v2765 = vmul.f32 %v2701, 0.01
        %v2766 = vmul.f32 %v2702, 0.01
        %v2767 = vmul.f32 %v2703, 0.01
        %v2768 = vmul.f32 %v2704, 0.01
        %v2769 = vmul.f32 %v2705, 0.01
        %v2770 = vmul.f32 %v2706, 0.01
        %v2771 = vmul.f32 %v2707, 0.01
        %v2772 = vmul.f32 %v2708, 0.01
        %v2773 = vmul.f32 %v2709, 0.01
        %v2774 = vmul.f32 %v2710, 0.01
        %v2775 = vmul.f32 %v2711, 0.01
        %v2776 = vmul.f32 %v2712, 0.01
        %v2777 = vmul.f32 %v2713, 0.01
        %v2778 = vmul.f32 %v2714, 0.01
        %v2779 = vsel %vm2715, %v2683, %v2747
        %v2780 = vsel %vm2716, %v2684, %v2748
        %v2781 = vsel %vm2717, %v2685, %v2749
        %v2782 = vsel %vm2718, %v2686, %v2750
        %v2783 = vsel %vm2719, %v2687, %v2751
        %v2784 = vsel %vm2720, %v2688, %v2752
        %v2785 = vsel %vm2721, %v2689, %v2753
        %v2786 = vsel %vm2722, %v2690, %v2754
        %v2787 = vsel %vm2723, %v2691, %v2755
        %v2788 = vsel %vm2724, %v2692, %v2756
        %v2789 = vsel %vm2725, %v2693, %v2757
        %v2790 = vsel %vm2726, %v2694, %v2758
        %v2791 = vsel %vm2727, %v2695, %v2759
        %v2792 = vsel %vm2728, %v2696, %v2760
        %v2793 = vsel %vm2729, %v2697, %v2761
        %v2794 = vsel %vm2730, %v2698, %v2762
        %v2795 = vsel %vm2731, %v2699, %v2763
        %v2796 = vsel %vm2732, %v2700, %v2764
        %v2797 = vsel %vm2733, %v2701, %v2765
        %v2798 = vsel %vm2734, %v2702, %v2766
        %v2799 = vsel %vm2735, %v2703, %v2767
        %v2800 = vsel %vm2736, %v2704, %v2768
        %v2801 = vsel %vm2737, %v2705, %v2769
        %v2802 = vsel %vm2738, %v2706, %v2770
        %v2803 = vsel %vm2739, %v2707, %v2771
        %v2804 = vsel %vm2740, %v2708, %v2772
        %v2805 = vsel %vm2741, %v2709, %v2773
        %v2806 = vsel %vm2742, %v2710, %v2774
        %v2807 = vsel %vm2743, %v2711, %v2775
        %v2808 = vsel %vm2744, %v2712, %v2776
        %v2809 = vsel %vm2745, %v2713, %v2777
        %v2810 = vsel %vm2746, %v2714, %v2778
        %2811 = vst.msk [vmem:[%s419 + $0x1] sm:$0xff] %vm363, %v2779
        %2812 = vst.msk [vmem:[%s419 + $0x9] sm:$0xff] %vm363, %v2780
        %2813 = vst.msk [vmem:[%s419 + $0x19] sm:$0xff] %vm363, %v2781
        %2814 = vst.msk [vmem:[%s419 + $0x21] sm:$0xff] %vm363, %v2782
        %2815 = vst.msk [vmem:[%s419 + $0x31] sm:$0xff] %vm363, %v2783
        %2816 = vst.msk [vmem:[%s419 + $0x39] sm:$0xff] %vm363, %v2784
        %2817 = vst.msk [vmem:[%s419 + $0x49] sm:$0xff] %vm363, %v2785
        %2818 = vst.msk [vmem:[%s419 + $0x51] sm:$0xff] %vm363, %v2786
        %2819 = vst.msk [vmem:[%s419 + $0x61] sm:$0xff] %vm363, %v2787
        %2820 = vst.msk [vmem:[%s419 + $0x69] sm:$0xff] %vm363, %v2788
        %2821 = vst.msk [vmem:[%s419 + $0x79] sm:$0xff] %vm363, %v2789
        %2822 = vst.msk [vmem:[%s419 + $0x81] sm:$0xff] %vm363, %v2790
        %2823 = vst.msk [vmem:[%s419 + $0x91] sm:$0xff] %vm363, %v2791
        %2824 = vst.msk [vmem:[%s419 + $0x99] sm:$0xff] %vm363, %v2792
        %2825 = vst.msk [vmem:[%s419 + $0xa9] sm:$0xff] %vm363, %v2793
        %2826 = vst.msk [vmem:[%s419 + $0xb1] sm:$0xff] %vm363, %v2794
        %2827 = vst.msk [vmem:[%s419 + $0xc1] sm:$0xff] %vm363, %v2795
        %2828 = vst.msk [vmem:[%s419 + $0xc9] sm:$0xff] %vm363, %v2796
        %2829 = vst.msk [vmem:[%s419 + $0xd9] sm:$0xff] %vm363, %v2797
        %2830 = vst.msk [vmem:[%s419 + $0xe1] sm:$0xff] %vm363, %v2798
        %2831 = vst.msk [vmem:[%s419 + $0xf1] sm:$0xff] %vm363, %v2799
        %2832 = vst.msk [vmem:[%s419 + $0xf9] sm:$0xff] %vm363, %v2800
        %2833 = vst.msk [vmem:[%s419 + $0x109] sm:$0xff] %vm363, %v2801
        %2834 = vst.msk [vmem:[%s419 + $0x111] sm:$0xff] %vm363, %v2802
        %2835 = vst.msk [vmem:[%s419 + $0x121] sm:$0xff] %vm363, %v2803
        %2836 = vst.msk [vmem:[%s419 + $0x129] sm:$0xff] %vm363, %v2804
        %2837 = vst.msk [vmem:[%s419 + $0x139] sm:$0xff] %vm363, %v2805
        %2838 = vst.msk [vmem:[%s419 + $0x141] sm:$0xff] %vm363, %v2806
        %2839 = vst.msk [vmem:[%s419 + $0x151] sm:$0xff] %vm363, %v2807
        %2840 = vst.msk [vmem:[%s419 + $0x159] sm:$0xff] %vm363, %v2808
        %2841 = vst.msk [vmem:[%s419 + $0x169] sm:$0xff] %vm363, %v2809
        %2842 = vst.msk [vmem:[%s419 + $0x171] sm:$0xff] %vm363, %v2810
        %v2843 = vld [vmem:[#allocation2] sm:$0xff]
        %v2844 = vld [vmem:[#allocation2 + $0x8] sm:$0xff]
        %v2845 = vld [vmem:[#allocation2 + $0x10] sm:$0x3]
        %v2846 = vld [vmem:[#allocation2 + $0x18] sm:$0xff]
        %v2847 = vld [vmem:[#allocation2 + $0x20] sm:$0xff]
        %v2848 = vld [vmem:[#allocation2 + $0x28] sm:$0x3]
        %v2849 = vld [vmem:[#allocation2 + $0x30] sm:$0xff]
        %v2850 = vld [vmem:[#allocation2 + $0x38] sm:$0xff]
        %v2851 = vld [vmem:[#allocation2 + $0x40] sm:$0x3]
        %v2852 = vld [vmem:[#allocation2 + $0x48] sm:$0xff]
        %v2853 = vld [vmem:[#allocation2 + $0x50] sm:$0xff]
        %v2854 = vld [vmem:[#allocation2 + $0x58] sm:$0x3]
        %v2855 = vld [vmem:[#allocation2 + $0x60] sm:$0xff]
        %v2856 = vld [vmem:[#allocation2 + $0x68] sm:$0xff]
        %v2857 = vld [vmem:[#allocation2 + $0x70] sm:$0x3]
        %v2858 = vld [vmem:[#allocation2 + $0x78] sm:$0xff]
        %v2859 = vld [vmem:[#allocation2 + $0x80] sm:$0xff]
        %v2860 = vld [vmem:[#allocation2 + $0x88] sm:$0x3]
        %v2861 = vld [vmem:[#allocation2 + $0x90] sm:$0xff]
        %v2862 = vld [vmem:[#allocation2 + $0x98] sm:$0xff]
        %v2863 = vld [vmem:[#allocation2 + $0xa0] sm:$0x3]
        %v2864 = vld [vmem:[#allocation2 + $0xa8] sm:$0xff]
        %v2865 = vld [vmem:[#allocation2 + $0xb0] sm:$0xff]
        %v2866 = vld [vmem:[#allocation2 + $0xb8] sm:$0x3]
        %v2867 = vld [vmem:[#allocation2 + $0xc0] sm:$0xff]
        %v2868 = vld [vmem:[#allocation2 + $0xc8] sm:$0xff]
        %v2869 = vld [vmem:[#allocation2 + $0xd0] sm:$0x3]
        %v2870 = vld [vmem:[#allocation2 + $0xd8] sm:$0xff]
        %v2871 = vld [vmem:[#allocation2 + $0xe0] sm:$0xff]
        %v2872 = vld [vmem:[#allocation2 + $0xe8] sm:$0x3]
        %v2873 = vld [vmem:[#allocation2 + $0xf0] sm:$0xff]
        %v2874 = vld [vmem:[#allocation2 + $0xf8] sm:$0xff]
        %v2875 = vld [vmem:[#allocation2 + $0x100] sm:$0x3]
        %v2876 = vld [vmem:[#allocation2 + $0x108] sm:$0xff]
        %v2877 = vld [vmem:[#allocation2 + $0x110] sm:$0xff]
        %v2878 = vld [vmem:[#allocation2 + $0x118] sm:$0x3]
        %v2879 = vld [vmem:[#allocation2 + $0x120] sm:$0xff]
        %v2880 = vld [vmem:[#allocation2 + $0x128] sm:$0xff]
        %v2881 = vld [vmem:[#allocation2 + $0x130] sm:$0x3]
        %v2882 = vld [vmem:[#allocation2 + $0x138] sm:$0xff]
        %v2883 = vld [vmem:[#allocation2 + $0x140] sm:$0xff]
        %v2884 = vld [vmem:[#allocation2 + $0x148] sm:$0x3]
        %v2885 = vld [vmem:[#allocation2 + $0x150] sm:$0xff]
        %v2886 = vld [vmem:[#allocation2 + $0x158] sm:$0xff]
        %v2887 = vld [vmem:[#allocation2 + $0x160] sm:$0x3]
        %v2888 = vld [vmem:[#allocation2 + $0x168] sm:$0xff]
        %v2889 = vld [vmem:[#allocation2 + $0x170] sm:$0xff]
        %v2890 = vld [vmem:[#allocation2 + $0x178] sm:$0x3]
        %v2939 = vrot.slane %v2843, 1
        %v2940 = vrot.slane %v2844, 1
        %v2941 = vsel %vm548, %v2939, %v2940
        %v2942 = vrot.slane %v2845, 1
        %v2943 = vsel %vm548, %v2940, %v2942
        %v2944 = vrot.slane %v2846, 1
        %v2945 = vrot.slane %v2847, 1
        %v2946 = vsel %vm548, %v2944, %v2945
        %v2947 = vrot.slane %v2848, 1
        %v2948 = vsel %vm548, %v2945, %v2947
        %v2949 = vrot.slane %v2849, 1
        %v2950 = vrot.slane %v2850, 1
        %v2951 = vsel %vm548, %v2949, %v2950
        %v2952 = vrot.slane %v2851, 1
        %v2953 = vsel %vm548, %v2950, %v2952
        %v2954 = vrot.slane %v2852, 1
        %v2955 = vrot.slane %v2853, 1
        %v2956 = vsel %vm548, %v2954, %v2955
        %v2957 = vrot.slane %v2854, 1
        %v2958 = vsel %vm548, %v2955, %v2957
        %v2959 = vrot.slane %v2855, 1
        %v2960 = vrot.slane %v2856, 1
        %v2961 = vsel %vm548, %v2959, %v2960
        %v2962 = vrot.slane %v2857, 1
        %v2963 = vsel %vm548, %v2960, %v2962
        %v2964 = vrot.slane %v2858, 1
        %v2965 = vrot.slane %v2859, 1
        %v2966 = vsel %vm548, %v2964, %v2965
        %v2967 = vrot.slane %v2860, 1
        %v2968 = vsel %vm548, %v2965, %v2967
        %v2969 = vrot.slane %v2861, 1
        %v2970 = vrot.slane %v2862, 1
        %v2971 = vsel %vm548, %v2969, %v2970
        %v2972 = vrot.slane %v2863, 1
        %v2973 = vsel %vm548, %v2970, %v2972
        %v2974 = vrot.slane %v2864, 1
        %v2975 = vrot.slane %v2865, 1
        %v2976 = vsel %vm548, %v2974, %v2975
        %v2977 = vrot.slane %v2866, 1
        %v2978 = vsel %vm548, %v2975, %v2977
        %v2979 = vrot.slane %v2867, 1
        %v2980 = vrot.slane %v2868, 1
        %v2981 = vsel %vm548, %v2979, %v2980
        %v2982 = vrot.slane %v2869, 1
        %v2983 = vsel %vm548, %v2980, %v2982
        %v2984 = vrot.slane %v2870, 1
        %v2985 = vrot.slane %v2871, 1
        %v2986 = vsel %vm548, %v2984, %v2985
        %v2987 = vrot.slane %v2872, 1
        %v2988 = vsel %vm548, %v2985, %v2987
        %v2989 = vrot.slane %v2873, 1
        %v2990 = vrot.slane %v2874, 1
        %v2991 = vsel %vm548, %v2989, %v2990
        %v2992 = vrot.slane %v2875, 1
        %v2993 = vsel %vm548, %v2990, %v2992
        %v2994 = vrot.slane %v2876, 1
        %v2995 = vrot.slane %v2877, 1
        %v2996 = vsel %vm548, %v2994, %v2995
        %v2997 = vrot.slane %v2878, 1
        %v2998 = vsel %vm548, %v2995, %v2997
        %v2999 = vrot.slane %v2879, 1
        %v3000 = vrot.slane %v2880, 1
        %v3001 = vsel %vm548, %v2999, %v3000
        %v3002 = vrot.slane %v2881, 1
        %v3003 = vsel %vm548, %v3000, %v3002
        %v3004 = vrot.slane %v2882, 1
        %v3005 = vrot.slane %v2883, 1
        %v3006 = vsel %vm548, %v3004, %v3005
        %v3007 = vrot.slane %v2884, 1
        %v3008 = vsel %vm548, %v3005, %v3007
        %v3009 = vrot.slane %v2885, 1
        %v3010 = vrot.slane %v2886, 1
        %v3011 = vsel %vm548, %v3009, %v3010
        %v3012 = vrot.slane %v2887, 1
        %v3013 = vsel %vm548, %v3010, %v3012
        %v3014 = vrot.slane %v2888, 1
        %v3015 = vrot.slane %v2889, 1
        %v3016 = vsel %vm548, %v3014, %v3015
        %v3017 = vrot.slane %v2890, 1
        %v3018 = vsel %vm548, %v3015, %v3017
        %3019 = vrot.lane.b32.xlu0 %v2941, 64
        %v3020 = vpop.permute.xlu0 %3019
        %3021 = vrot.lane.b32.xlu0 %v2943, 64
        %v3022 = vpop.permute.xlu0 %3021
        %3023 = vrot.lane.b32.xlu0 %v2946, 64
        %v3024 = vpop.permute.xlu0 %3023
        %3025 = vrot.lane.b32.xlu0 %v2948, 64
        %v3026 = vpop.permute.xlu0 %3025
        %3027 = vrot.lane.b32.xlu0 %v2951, 64
        %v3028 = vpop.permute.xlu0 %3027
        %3029 = vrot.lane.b32.xlu0 %v2953, 64
        %v3030 = vpop.permute.xlu0 %3029
        %3031 = vrot.lane.b32.xlu0 %v2956, 64
        %v3032 = vpop.permute.xlu0 %3031
        %3033 = vrot.lane.b32.xlu0 %v2958, 64
        %v3034 = vpop.permute.xlu0 %3033
        %3035 = vrot.lane.b32.xlu0 %v2961, 64
        %v3036 = vpop.permute.xlu0 %3035
        %3037 = vrot.lane.b32.xlu0 %v2963, 64
        %v3038 = vpop.permute.xlu0 %3037
        %3039 = vrot.lane.b32.xlu0 %v2966, 64
        %v3040 = vpop.permute.xlu0 %3039
        %3041 = vrot.lane.b32.xlu0 %v2968, 64
        %v3042 = vpop.permute.xlu0 %3041
        %3043 = vrot.lane.b32.xlu0 %v2971, 64
        %v3044 = vpop.permute.xlu0 %3043
        %3045 = vrot.lane.b32.xlu0 %v2973, 64
        %v3046 = vpop.permute.xlu0 %3045
        %3047 = vrot.lane.b32.xlu0 %v2976, 64
        %v3048 = vpop.permute.xlu0 %3047
        %3049 = vrot.lane.b32.xlu0 %v2978, 64
        %v3050 = vpop.permute.xlu0 %3049
        %3051 = vrot.lane.b32.xlu0 %v2981, 64
        %v3052 = vpop.permute.xlu0 %3051
        %3053 = vrot.lane.b32.xlu0 %v2983, 64
        %v3054 = vpop.permute.xlu0 %3053
        %3055 = vrot.lane.b32.xlu0 %v2986, 64
        %v3056 = vpop.permute.xlu0 %3055
        %3057 = vrot.lane.b32.xlu0 %v2988, 64
        %v3058 = vpop.permute.xlu0 %3057
        %3059 = vrot.lane.b32.xlu0 %v2991, 64
        %v3060 = vpop.permute.xlu0 %3059
        %3061 = vrot.lane.b32.xlu0 %v2993, 64
        %v3062 = vpop.permute.xlu0 %3061
        %3063 = vrot.lane.b32.xlu0 %v2996, 64
        %v3064 = vpop.permute.xlu0 %3063
        %3065 = vrot.lane.b32.xlu0 %v2998, 64
        %v3066 = vpop.permute.xlu0 %3065
        %3067 = vrot.lane.b32.xlu0 %v3001, 64
        %v3068 = vpop.permute.xlu0 %3067
        %3069 = vrot.lane.b32.xlu0 %v3003, 64
        %v3070 = vpop.permute.xlu0 %3069
        %3071 = vrot.lane.b32.xlu0 %v3006, 64
        %v3072 = vpop.permute.xlu0 %3071
        %3073 = vrot.lane.b32.xlu0 %v3008, 64
        %v3074 = vpop.permute.xlu0 %3073
        %3075 = vrot.lane.b32.xlu0 %v3011, 64
        %v3076 = vpop.permute.xlu0 %3075
        %3077 = vrot.lane.b32.xlu0 %v3013, 64
        %v3078 = vpop.permute.xlu0 %3077
        %3079 = vrot.lane.b32.xlu0 %v3016, 64
        %v3080 = vpop.permute.xlu0 %3079
        %3081 = vrot.lane.b32.xlu0 %v3018, 64
        %v3082 = vpop.permute.xlu0 %3081
        %v3115 = vrot.slane %v2843, 2
        %v3116 = vrot.slane %v2844, 2
        %v3117 = vsel %vm725, %v3115, %v3116
        %v3118 = vrot.slane %v2845, 2
        %v3119 = vsel %vm725, %v3116, %v3118
        %v3120 = vrot.slane %v2846, 2
        %v3121 = vrot.slane %v2847, 2
        %v3122 = vsel %vm725, %v3120, %v3121
        %v3123 = vrot.slane %v2848, 2
        %v3124 = vsel %vm725, %v3121, %v3123
        %v3125 = vrot.slane %v2849, 2
        %v3126 = vrot.slane %v2850, 2
        %v3127 = vsel %vm725, %v3125, %v3126
        %v3128 = vrot.slane %v2851, 2
        %v3129 = vsel %vm725, %v3126, %v3128
        %v3130 = vrot.slane %v2852, 2
        %v3131 = vrot.slane %v2853, 2
        %v3132 = vsel %vm725, %v3130, %v3131
        %v3133 = vrot.slane %v2854, 2
        %v3134 = vsel %vm725, %v3131, %v3133
        %v3135 = vrot.slane %v2855, 2
        %v3136 = vrot.slane %v2856, 2
        %v3137 = vsel %vm725, %v3135, %v3136
        %v3138 = vrot.slane %v2857, 2
        %v3139 = vsel %vm725, %v3136, %v3138
        %v3140 = vrot.slane %v2858, 2
        %v3141 = vrot.slane %v2859, 2
        %v3142 = vsel %vm725, %v3140, %v3141
        %v3143 = vrot.slane %v2860, 2
        %v3144 = vsel %vm725, %v3141, %v3143
        %v3145 = vrot.slane %v2861, 2
        %v3146 = vrot.slane %v2862, 2
        %v3147 = vsel %vm725, %v3145, %v3146
        %v3148 = vrot.slane %v2863, 2
        %v3149 = vsel %vm725, %v3146, %v3148
        %v3150 = vrot.slane %v2864, 2
        %v3151 = vrot.slane %v2865, 2
        %v3152 = vsel %vm725, %v3150, %v3151
        %v3153 = vrot.slane %v2866, 2
        %v3154 = vsel %vm725, %v3151, %v3153
        %v3155 = vrot.slane %v2867, 2
        %v3156 = vrot.slane %v2868, 2
        %v3157 = vsel %vm725, %v3155, %v3156
        %v3158 = vrot.slane %v2869, 2
        %v3159 = vsel %vm725, %v3156, %v3158
        %v3160 = vrot.slane %v2870, 2
        %v3161 = vrot.slane %v2871, 2
        %v3162 = vsel %vm725, %v3160, %v3161
        %v3163 = vrot.slane %v2872, 2
        %v3164 = vsel %vm725, %v3161, %v3163
        %v3165 = vrot.slane %v2873, 2
        %v3166 = vrot.slane %v2874, 2
        %v3167 = vsel %vm725, %v3165, %v3166
        %v3168 = vrot.slane %v2875, 2
        %v3169 = vsel %vm725, %v3166, %v3168
        %v3170 = vrot.slane %v2876, 2
        %v3171 = vrot.slane %v2877, 2
        %v3172 = vsel %vm725, %v3170, %v3171
        %v3173 = vrot.slane %v2878, 2
        %v3174 = vsel %vm725, %v3171, %v3173
        %v3175 = vrot.slane %v2879, 2
        %v3176 = vrot.slane %v2880, 2
        %v3177 = vsel %vm725, %v3175, %v3176
        %v3178 = vrot.slane %v2881, 2
        %v3179 = vsel %vm725, %v3176, %v3178
        %v3180 = vrot.slane %v2882, 2
        %v3181 = vrot.slane %v2883, 2
        %v3182 = vsel %vm725, %v3180, %v3181
        %v3183 = vrot.slane %v2884, 2
        %v3184 = vsel %vm725, %v3181, %v3183
        %v3185 = vrot.slane %v2885, 2
        %v3186 = vrot.slane %v2886, 2
        %v3187 = vsel %vm725, %v3185, %v3186
        %v3188 = vrot.slane %v2887, 2
        %v3189 = vsel %vm725, %v3186, %v3188
        %v3190 = vrot.slane %v2888, 2
        %v3191 = vrot.slane %v2889, 2
        %v3192 = vsel %vm725, %v3190, %v3191
        %v3193 = vrot.slane %v2890, 2
        %v3194 = vsel %vm725, %v3191, %v3193
        %v3195 = vsel %vm363, %v2843, %v3020
        %v3196 = vsel %vm363, %v2844, %v3022
        %v3197 = vsel %vm363, %v2846, %v3024
        %v3198 = vsel %vm363, %v2847, %v3026
        %v3199 = vsel %vm363, %v2849, %v3028
        %v3200 = vsel %vm363, %v2850, %v3030
        %v3201 = vsel %vm363, %v2852, %v3032
        %v3202 = vsel %vm363, %v2853, %v3034
        %v3203 = vsel %vm363, %v2855, %v3036
        %v3204 = vsel %vm363, %v2856, %v3038
        %v3205 = vsel %vm363, %v2858, %v3040
        %v3206 = vsel %vm363, %v2859, %v3042
        %v3207 = vsel %vm363, %v2861, %v3044
        %v3208 = vsel %vm363, %v2862, %v3046
        %v3209 = vsel %vm363, %v2864, %v3048
        %v3210 = vsel %vm363, %v2865, %v3050
        %v3211 = vsel %vm363, %v2867, %v3052
        %v3212 = vsel %vm363, %v2868, %v3054
        %v3213 = vsel %vm363, %v2870, %v3056
        %v3214 = vsel %vm363, %v2871, %v3058
        %v3215 = vsel %vm363, %v2873, %v3060
        %v3216 = vsel %vm363, %v2874, %v3062
        %v3217 = vsel %vm363, %v2876, %v3064
        %v3218 = vsel %vm363, %v2877, %v3066
        %v3219 = vsel %vm363, %v2879, %v3068
        %v3220 = vsel %vm363, %v2880, %v3070
        %v3221 = vsel %vm363, %v2882, %v3072
        %v3222 = vsel %vm363, %v2883, %v3074
        %v3223 = vsel %vm363, %v2885, %v3076
        %v3224 = vsel %vm363, %v2886, %v3078
        %v3225 = vsel %vm363, %v2888, %v3080
        %v3226 = vsel %vm363, %v2889, %v3082
        %v3227 = vld [vmem:[%s3] sm:$0xff]
        %v3228 = vld [vmem:[%s3 + $0x8] sm:$0xff]
        %v3229 = vld [vmem:[%s3 + $0x10] sm:$0xff]
        %v3230 = vld [vmem:[%s3 + $0x18] sm:$0xff]
        %v3231 = vld [vmem:[%s3 + $0x20] sm:$0xff]
        %v3232 = vld [vmem:[%s3 + $0x28] sm:$0xff]
        %v3233 = vld [vmem:[%s3 + $0x30] sm:$0xff]
        %v3234 = vld [vmem:[%s3 + $0x38] sm:$0xff]
        %v3235 = vld [vmem:[%s3 + $0x40] sm:$0xff]
        %v3236 = vld [vmem:[%s3 + $0x48] sm:$0xff]
        %v3237 = vld [vmem:[%s3 + $0x50] sm:$0xff]
        %v3238 = vld [vmem:[%s3 + $0x58] sm:$0xff]
        %v3239 = vld [vmem:[%s3 + $0x60] sm:$0xff]
        %v3240 = vld [vmem:[%s3 + $0x68] sm:$0xff]
        %v3241 = vld [vmem:[%s3 + $0x70] sm:$0xff]
        %v3242 = vld [vmem:[%s3 + $0x78] sm:$0xff]
        %v3243 = vld [vmem:[%s3 + $0x80] sm:$0xff]
        %v3244 = vld [vmem:[%s3 + $0x88] sm:$0xff]
        %v3245 = vld [vmem:[%s3 + $0x90] sm:$0xff]
        %v3246 = vld [vmem:[%s3 + $0x98] sm:$0xff]
        %v3247 = vld [vmem:[%s3 + $0xa0] sm:$0xff]
        %v3248 = vld [vmem:[%s3 + $0xa8] sm:$0xff]
        %v3249 = vld [vmem:[%s3 + $0xb0] sm:$0xff]
        %v3250 = vld [vmem:[%s3 + $0xb8] sm:$0xff]
        %v3251 = vld [vmem:[%s419] sm:$0xff]
        %v3252 = vld [vmem:[%s419 + $0x8] sm:$0xff]
        %v3253 = vld [vmem:[%s419 + $0x10] sm:$0x3]
        %v3254 = vld [vmem:[%s419 + $0x18] sm:$0xff]
        %v3255 = vld [vmem:[%s419 + $0x20] sm:$0xff]
        %v3256 = vld [vmem:[%s419 + $0x28] sm:$0x3]
        %v3257 = vld [vmem:[%s419 + $0x30] sm:$0xff]
        %v3258 = vld [vmem:[%s419 + $0x38] sm:$0xff]
        %v3259 = vld [vmem:[%s419 + $0x40] sm:$0x3]
        %v3260 = vld [vmem:[%s419 + $0x48] sm:$0xff]
        %v3261 = vld [vmem:[%s419 + $0x50] sm:$0xff]
        %v3262 = vld [vmem:[%s419 + $0x58] sm:$0x3]
        %v3263 = vld [vmem:[%s419 + $0x60] sm:$0xff]
        %v3264 = vld [vmem:[%s419 + $0x68] sm:$0xff]
        %v3265 = vld [vmem:[%s419 + $0x70] sm:$0x3]
        %v3266 = vld [vmem:[%s419 + $0x78] sm:$0xff]
        %v3267 = vld [vmem:[%s419 + $0x80] sm:$0xff]
        %v3268 = vld [vmem:[%s419 + $0x88] sm:$0x3]
        %v3269 = vld [vmem:[%s419 + $0x90] sm:$0xff]
        %v3270 = vld [vmem:[%s419 + $0x98] sm:$0xff]
        %v3271 = vld [vmem:[%s419 + $0xa0] sm:$0x3]
        %v3272 = vld [vmem:[%s419 + $0xa8] sm:$0xff]
        %v3273 = vld [vmem:[%s419 + $0xb0] sm:$0xff]
        %v3274 = vld [vmem:[%s419 + $0xb8] sm:$0x3]
        %v3275 = vld [vmem:[%s419 + $0xc0] sm:$0xff]
        %v3276 = vld [vmem:[%s419 + $0xc8] sm:$0xff]
        %v3277 = vld [vmem:[%s419 + $0xd0] sm:$0x3]
        %v3278 = vld [vmem:[%s419 + $0xd8] sm:$0xff]
        %v3279 = vld [vmem:[%s419 + $0xe0] sm:$0xff]
        %v3280 = vld [vmem:[%s419 + $0xe8] sm:$0x3]
        %v3281 = vld [vmem:[%s419 + $0xf0] sm:$0xff]
        %v3282 = vld [vmem:[%s419 + $0xf8] sm:$0xff]
        %v3283 = vld [vmem:[%s419 + $0x100] sm:$0x3]
        %v3284 = vld [vmem:[%s419 + $0x108] sm:$0xff]
        %v3285 = vld [vmem:[%s419 + $0x110] sm:$0xff]
        %v3286 = vld [vmem:[%s419 + $0x118] sm:$0x3]
        %v3287 = vld [vmem:[%s419 + $0x120] sm:$0xff]
        %v3288 = vld [vmem:[%s419 + $0x128] sm:$0xff]
        %v3289 = vld [vmem:[%s419 + $0x130] sm:$0x3]
        %v3290 = vld [vmem:[%s419 + $0x138] sm:$0xff]
        %v3291 = vld [vmem:[%s419 + $0x140] sm:$0xff]
        %v3292 = vld [vmem:[%s419 + $0x148] sm:$0x3]
        %v3293 = vld [vmem:[%s419 + $0x150] sm:$0xff]
        %v3294 = vld [vmem:[%s419 + $0x158] sm:$0xff]
        %v3295 = vld [vmem:[%s419 + $0x160] sm:$0x3]
        %v3296 = vld [vmem:[%s419 + $0x168] sm:$0xff]
        %v3297 = vld [vmem:[%s419 + $0x170] sm:$0xff]
        %v3298 = vld [vmem:[%s419 + $0x178] sm:$0x3]
        %v3347 = vrot.slane %v3251, 1
        %v3348 = vrot.slane %v3252, 1
        %v3349 = vsel %vm548, %v3347, %v3348
        %v3350 = vrot.slane %v3253, 1
        %v3351 = vsel %vm548, %v3348, %v3350
        %v3352 = vrot.slane %v3254, 1
        %v3353 = vrot.slane %v3255, 1
        %v3354 = vsel %vm548, %v3352, %v3353
        %v3355 = vrot.slane %v3256, 1
        %v3356 = vsel %vm548, %v3353, %v3355
        %v3357 = vrot.slane %v3257, 1
        %v3358 = vrot.slane %v3258, 1
        %v3359 = vsel %vm548, %v3357, %v3358
        %v3360 = vrot.slane %v3259, 1
        %v3361 = vsel %vm548, %v3358, %v3360
        %v3362 = vrot.slane %v3260, 1
        %v3363 = vrot.slane %v3261, 1
        %v3364 = vsel %vm548, %v3362, %v3363
        %v3365 = vrot.slane %v3262, 1
        %v3366 = vsel %vm548, %v3363, %v3365
        %v3367 = vrot.slane %v3263, 1
        %v3368 = vrot.slane %v3264, 1
        %v3369 = vsel %vm548, %v3367, %v3368
        %v3370 = vrot.slane %v3265, 1
        %v3371 = vsel %vm548, %v3368, %v3370
        %v3372 = vrot.slane %v3266, 1
        %v3373 = vrot.slane %v3267, 1
        %v3374 = vsel %vm548, %v3372, %v3373
        %v3375 = vrot.slane %v3268, 1
        %v3376 = vsel %vm548, %v3373, %v3375
        %v3377 = vrot.slane %v3269, 1
        %v3378 = vrot.slane %v3270, 1
        %v3379 = vsel %vm548, %v3377, %v3378
        %v3380 = vrot.slane %v3271, 1
        %v3381 = vsel %vm548, %v3378, %v3380
        %v3382 = vrot.slane %v3272, 1
        %v3383 = vrot.slane %v3273, 1
        %v3384 = vsel %vm548, %v3382, %v3383
        %v3385 = vrot.slane %v3274, 1
        %v3386 = vsel %vm548, %v3383, %v3385
        %v3387 = vrot.slane %v3275, 1
        %v3388 = vrot.slane %v3276, 1
        %v3389 = vsel %vm548, %v3387, %v3388
        %v3390 = vrot.slane %v3277, 1
        %v3391 = vsel %vm548, %v3388, %v3390
        %v3392 = vrot.slane %v3278, 1
        %v3393 = vrot.slane %v3279, 1
        %v3394 = vsel %vm548, %v3392, %v3393
        %v3395 = vrot.slane %v3280, 1
        %v3396 = vsel %vm548, %v3393, %v3395
        %v3397 = vrot.slane %v3281, 1
        %v3398 = vrot.slane %v3282, 1
        %v3399 = vsel %vm548, %v3397, %v3398
        %v3400 = vrot.slane %v3283, 1
        %v3401 = vsel %vm548, %v3398, %v3400
        %v3402 = vrot.slane %v3284, 1
        %v3403 = vrot.slane %v3285, 1
        %v3404 = vsel %vm548, %v3402, %v3403
        %v3405 = vrot.slane %v3286, 1
        %v3406 = vsel %vm548, %v3403, %v3405
        %v3407 = vrot.slane %v3287, 1
        %v3408 = vrot.slane %v3288, 1
        %v3409 = vsel %vm548, %v3407, %v3408
        %v3410 = vrot.slane %v3289, 1
        %v3411 = vsel %vm548, %v3408, %v3410
        %v3412 = vrot.slane %v3290, 1
        %v3413 = vrot.slane %v3291, 1
        %v3414 = vsel %vm548, %v3412, %v3413
        %v3415 = vrot.slane %v3292, 1
        %v3416 = vsel %vm548, %v3413, %v3415
        %v3417 = vrot.slane %v3293, 1
        %v3418 = vrot.slane %v3294, 1
        %v3419 = vsel %vm548, %v3417, %v3418
        %v3420 = vrot.slane %v3295, 1
        %v3421 = vsel %vm548, %v3418, %v3420
        %v3422 = vrot.slane %v3296, 1
        %v3423 = vrot.slane %v3297, 1
        %v3424 = vsel %vm548, %v3422, %v3423
        %v3425 = vrot.slane %v3298, 1
        %v3426 = vsel %vm548, %v3423, %v3425
        %3427 = vrot.lane.b32.xlu0 %v3349, 64
        %v3428 = vpop.permute.xlu0 %3427
        %3429 = vrot.lane.b32.xlu0 %v3351, 64
        %v3430 = vpop.permute.xlu0 %3429
        %3431 = vrot.lane.b32.xlu0 %v3354, 64
        %v3432 = vpop.permute.xlu0 %3431
        %3433 = vrot.lane.b32.xlu0 %v3356, 64
        %v3434 = vpop.permute.xlu0 %3433
        %3435 = vrot.lane.b32.xlu0 %v3359, 64
        %v3436 = vpop.permute.xlu0 %3435
        %3437 = vrot.lane.b32.xlu0 %v3361, 64
        %v3438 = vpop.permute.xlu0 %3437
        %3439 = vrot.lane.b32.xlu0 %v3364, 64
        %v3440 = vpop.permute.xlu0 %3439
        %3441 = vrot.lane.b32.xlu0 %v3366, 64
        %v3442 = vpop.permute.xlu0 %3441
        %3443 = vrot.lane.b32.xlu0 %v3369, 64
        %v3444 = vpop.permute.xlu0 %3443
        %3445 = vrot.lane.b32.xlu0 %v3371, 64
        %v3446 = vpop.permute.xlu0 %3445
        %3447 = vrot.lane.b32.xlu0 %v3374, 64
        %v3448 = vpop.permute.xlu0 %3447
        %3449 = vrot.lane.b32.xlu0 %v3376, 64
        %v3450 = vpop.permute.xlu0 %3449
        %3451 = vrot.lane.b32.xlu0 %v3379, 64
        %v3452 = vpop.permute.xlu0 %3451
        %3453 = vrot.lane.b32.xlu0 %v3381, 64
        %v3454 = vpop.permute.xlu0 %3453
        %3455 = vrot.lane.b32.xlu0 %v3384, 64
        %v3456 = vpop.permute.xlu0 %3455
        %3457 = vrot.lane.b32.xlu0 %v3386, 64
        %v3458 = vpop.permute.xlu0 %3457
        %3459 = vrot.lane.b32.xlu0 %v3389, 64
        %v3460 = vpop.permute.xlu0 %3459
        %3461 = vrot.lane.b32.xlu0 %v3391, 64
        %v3462 = vpop.permute.xlu0 %3461
        %3463 = vrot.lane.b32.xlu0 %v3394, 64
        %v3464 = vpop.permute.xlu0 %3463
        %3465 = vrot.lane.b32.xlu0 %v3396, 64
        %v3466 = vpop.permute.xlu0 %3465
        %3467 = vrot.lane.b32.xlu0 %v3399, 64
        %v3468 = vpop.permute.xlu0 %3467
        %3469 = vrot.lane.b32.xlu0 %v3401, 64
        %v3470 = vpop.permute.xlu0 %3469
        %3471 = vrot.lane.b32.xlu0 %v3404, 64
        %v3472 = vpop.permute.xlu0 %3471
        %3473 = vrot.lane.b32.xlu0 %v3406, 64
        %v3474 = vpop.permute.xlu0 %3473
        %3475 = vrot.lane.b32.xlu0 %v3409, 64
        %v3476 = vpop.permute.xlu0 %3475
        %3477 = vrot.lane.b32.xlu0 %v3411, 64
        %v3478 = vpop.permute.xlu0 %3477
        %3479 = vrot.lane.b32.xlu0 %v3414, 64
        %v3480 = vpop.permute.xlu0 %3479
        %3481 = vrot.lane.b32.xlu0 %v3416, 64
        %v3482 = vpop.permute.xlu0 %3481
        %3483 = vrot.lane.b32.xlu0 %v3419, 64
        %v3484 = vpop.permute.xlu0 %3483
        %3485 = vrot.lane.b32.xlu0 %v3421, 64
        %v3486 = vpop.permute.xlu0 %3485
        %3487 = vrot.lane.b32.xlu0 %v3424, 64
        %v3488 = vpop.permute.xlu0 %3487
        %3489 = vrot.lane.b32.xlu0 %v3426, 64
        %v3490 = vpop.permute.xlu0 %3489
        %v3523 = vrot.slane %v3251, 2
        %v3524 = vrot.slane %v3252, 2
        %v3525 = vsel %vm725, %v3523, %v3524
        %v3526 = vrot.slane %v3253, 2
        %v3527 = vsel %vm725, %v3524, %v3526
        %v3528 = vrot.slane %v3254, 2
        %v3529 = vrot.slane %v3255, 2
        %v3530 = vsel %vm725, %v3528, %v3529
        %v3531 = vrot.slane %v3256, 2
        %v3532 = vsel %vm725, %v3529, %v3531
        %v3533 = vrot.slane %v3257, 2
        %v3534 = vrot.slane %v3258, 2
        %v3535 = vsel %vm725, %v3533, %v3534
        %v3536 = vrot.slane %v3259, 2
        %v3537 = vsel %vm725, %v3534, %v3536
        %v3538 = vrot.slane %v3260, 2
        %v3539 = vrot.slane %v3261, 2
        %v3540 = vsel %vm725, %v3538, %v3539
        %v3541 = vrot.slane %v3262, 2
        %v3542 = vsel %vm725, %v3539, %v3541
        %v3543 = vrot.slane %v3263, 2
        %v3544 = vrot.slane %v3264, 2
        %v3545 = vsel %vm725, %v3543, %v3544
        %v3546 = vrot.slane %v3265, 2
        %v3547 = vsel %vm725, %v3544, %v3546
        %v3548 = vrot.slane %v3266, 2
        %v3549 = vrot.slane %v3267, 2
        %v3550 = vsel %vm725, %v3548, %v3549
        %v3551 = vrot.slane %v3268, 2
        %v3552 = vsel %vm725, %v3549, %v3551
        %v3553 = vrot.slane %v3269, 2
        %v3554 = vrot.slane %v3270, 2
        %v3555 = vsel %vm725, %v3553, %v3554
        %v3556 = vrot.slane %v3271, 2
        %v3557 = vsel %vm725, %v3554, %v3556
        %v3558 = vrot.slane %v3272, 2
        %v3559 = vrot.slane %v3273, 2
        %v3560 = vsel %vm725, %v3558, %v3559
        %v3561 = vrot.slane %v3274, 2
        %v3562 = vsel %vm725, %v3559, %v3561
        %v3563 = vrot.slane %v3275, 2
        %v3564 = vrot.slane %v3276, 2
        %v3565 = vsel %vm725, %v3563, %v3564
        %v3566 = vrot.slane %v3277, 2
        %v3567 = vsel %vm725, %v3564, %v3566
        %v3568 = vrot.slane %v3278, 2
        %v3569 = vrot.slane %v3279, 2
        %v3570 = vsel %vm725, %v3568, %v3569
        %v3571 = vrot.slane %v3280, 2
        %v3572 = vsel %vm725, %v3569, %v3571
        %v3573 = vrot.slane %v3281, 2
        %v3574 = vrot.slane %v3282, 2
        %v3575 = vsel %vm725, %v3573, %v3574
        %v3576 = vrot.slane %v3283, 2
        %v3577 = vsel %vm725, %v3574, %v3576
        %v3578 = vrot.slane %v3284, 2
        %v3579 = vrot.slane %v3285, 2
        %v3580 = vsel %vm725, %v3578, %v3579
        %v3581 = vrot.slane %v3286, 2
        %v3582 = vsel %vm725, %v3579, %v3581
        %v3583 = vrot.slane %v3287, 2
        %v3584 = vrot.slane %v3288, 2
        %v3585 = vsel %vm725, %v3583, %v3584
        %v3586 = vrot.slane %v3289, 2
        %v3587 = vsel %vm725, %v3584, %v3586
        %v3588 = vrot.slane %v3290, 2
        %v3589 = vrot.slane %v3291, 2
        %v3590 = vsel %vm725, %v3588, %v3589
        %v3591 = vrot.slane %v3292, 2
        %v3592 = vsel %vm725, %v3589, %v3591
        %v3593 = vrot.slane %v3293, 2
        %v3594 = vrot.slane %v3294, 2
        %v3595 = vsel %vm725, %v3593, %v3594
        %v3596 = vrot.slane %v3295, 2
        %v3597 = vsel %vm725, %v3594, %v3596
        %v3598 = vrot.slane %v3296, 2
        %v3599 = vrot.slane %v3297, 2
        %v3600 = vsel %vm725, %v3598, %v3599
        %v3601 = vrot.slane %v3298, 2
        %v3602 = vsel %vm725, %v3599, %v3601
        %v3603 = vsel %vm363, %v3251, %v3428
        %v3604 = vsel %vm363, %v3252, %v3430
        %v3605 = vsel %vm363, %v3254, %v3432
        %v3606 = vsel %vm363, %v3255, %v3434
        %v3607 = vsel %vm363, %v3257, %v3436
        %v3608 = vsel %vm363, %v3258, %v3438
        %v3609 = vsel %vm363, %v3260, %v3440
        %v3610 = vsel %vm363, %v3261, %v3442
        %v3611 = vsel %vm363, %v3263, %v3444
        %v3612 = vsel %vm363, %v3264, %v3446
        %v3613 = vsel %vm363, %v3266, %v3448
        %v3614 = vsel %vm363, %v3267, %v3450
        %v3615 = vsel %vm363, %v3269, %v3452
        %v3616 = vsel %vm363, %v3270, %v3454
        %v3617 = vsel %vm363, %v3272, %v3456
        %v3618 = vsel %vm363, %v3273, %v3458
        %v3619 = vsel %vm363, %v3275, %v3460
        %v3620 = vsel %vm363, %v3276, %v3462
        %v3621 = vsel %vm363, %v3278, %v3464
        %v3622 = vsel %vm363, %v3279, %v3466
        %v3623 = vsel %vm363, %v3281, %v3468
        %v3624 = vsel %vm363, %v3282, %v3470
        %v3625 = vsel %vm363, %v3284, %v3472
        %v3626 = vsel %vm363, %v3285, %v3474
        %v3627 = vsel %vm363, %v3287, %v3476
        %v3628 = vsel %vm363, %v3288, %v3478
        %v3629 = vsel %vm363, %v3290, %v3480
        %v3630 = vsel %vm363, %v3291, %v3482
        %v3631 = vsel %vm363, %v3293, %v3484
        %v3632 = vsel %vm363, %v3294, %v3486
        %v3633 = vsel %vm363, %v3296, %v3488
        %v3634 = vsel %vm363, %v3297, %v3490
        %s3635 = scalar_lea.vmem %s3, 192
        %v3636 = vld [vmem:[%s3635] sm:$0xff]
        %v3637 = vld [vmem:[%s3635 + $0x8] sm:$0xff]
        %v3638 = vld [vmem:[%s3635 + $0x10] sm:$0xff]
        %v3639 = vld [vmem:[%s3635 + $0x18] sm:$0xff]
        %v3640 = vld [vmem:[%s3635 + $0x20] sm:$0xff]
        %v3641 = vld [vmem:[%s3635 + $0x28] sm:$0xff]
        %v3642 = vld [vmem:[%s3635 + $0x30] sm:$0xff]
        %v3643 = vld [vmem:[%s3635 + $0x38] sm:$0xff]
        %v3644 = vld [vmem:[%s3635 + $0x40] sm:$0xff]
        %v3645 = vld [vmem:[%s3635 + $0x48] sm:$0xff]
        %v3646 = vld [vmem:[%s3635 + $0x50] sm:$0xff]
        %v3647 = vld [vmem:[%s3635 + $0x58] sm:$0xff]
        %v3648 = vld [vmem:[%s3635 + $0x60] sm:$0xff]
        %v3649 = vld [vmem:[%s3635 + $0x68] sm:$0xff]
        %v3650 = vld [vmem:[%s3635 + $0x70] sm:$0xff]
        %v3651 = vld [vmem:[%s3635 + $0x78] sm:$0xff]
        %v3652 = vld [vmem:[%s3635 + $0x80] sm:$0xff]
        %v3653 = vld [vmem:[%s3635 + $0x88] sm:$0xff]
        %v3654 = vld [vmem:[%s3635 + $0x90] sm:$0xff]
        %v3655 = vld [vmem:[%s3635 + $0x98] sm:$0xff]
        %v3656 = vld [vmem:[%s3635 + $0xa0] sm:$0xff]
        %v3657 = vld [vmem:[%s3635 + $0xa8] sm:$0xff]
        %v3658 = vld [vmem:[%s3635 + $0xb0] sm:$0xff]
        %v3659 = vld [vmem:[%s3635 + $0xb8] sm:$0xff]
        %v3660 = vsel %vm363, %v3525, 0
        %v3662 = vsel %vm363, %v3527, 0
        %v3664 = vsel %vm363, %v3530, 0
        %v3666 = vsel %vm363, %v3532, 0
        %v3668 = vsel %vm363, %v3535, 0
        %v3670 = vsel %vm363, %v3537, 0
        %v3672 = vsel %vm363, %v3540, 0
        %v3674 = vsel %vm363, %v3542, 0
        %v3676 = vsel %vm363, %v3545, 0
        %v3678 = vsel %vm363, %v3547, 0
        %v3680 = vsel %vm363, %v3550, 0
        %v3682 = vsel %vm363, %v3552, 0
        %v3684 = vsel %vm363, %v3555, 0
        %v3686 = vsel %vm363, %v3557, 0
        %v3688 = vsel %vm363, %v3560, 0
        %v3690 = vsel %vm363, %v3562, 0
        %v3692 = vsel %vm363, %v3565, 0
        %v3694 = vsel %vm363, %v3567, 0
        %v3696 = vsel %vm363, %v3570, 0
        %v3698 = vsel %vm363, %v3572, 0
        %v3700 = vsel %vm363, %v3575, 0
        %v3702 = vsel %vm363, %v3577, 0
        %v3704 = vsel %vm363, %v3580, 0
        %v3706 = vsel %vm363, %v3582, 0
        %v3708 = vsel %vm363, %v3585, 0
        %v3710 = vsel %vm363, %v3587, 0
        %v3712 = vsel %vm363, %v3590, 0
        %v3714 = vsel %vm363, %v3592, 0
        %v3716 = vsel %vm363, %v3595, 0
        %v3718 = vsel %vm363, %v3597, 0
        %v3720 = vsel %vm363, %v3600, 0
        %v3722 = vsel %vm363, %v3602, 0
        %3724 = vmatprep.subr.mxu0 0.0
        %3725 = vmatpush1.msra.mxu0 %v3636
        %3726 = vmatprep.subr.mxu0 0.0
        %3727 = vmatpush1.msra.mxu0 %v3637
        %3728 = vmatprep.subr.mxu0 0.0
        %3729 = vmatpush1.msra.mxu0 %v3638
        %3730 = vmatprep.subr.mxu0 0.0
        %3731 = vmatpush1.msra.mxu0 %v3639
        %3732 = vmatprep.subr.mxu0 0.0
        %3733 = vmatpush1.msra.mxu0 %v3640
        %3734 = vmatprep.subr.mxu0 0.0
        %3735 = vmatpush1.msra.mxu0 %v3641
        %3736 = vmatprep.subr.mxu0 0.0
        %3737 = vmatpush1.msra.mxu0 %v3642
        %3738 = vmatprep.subr.mxu0 0.0
        %3739 = vmatpush1.msra.mxu0 %v3643
        %3740 = vmatprep.subr.mxu0 0.0
        %3741 = vmatpush1.msra.mxu0 %v3644
        %3742 = vmatprep.subr.mxu0 0.0
        %3743 = vmatpush1.msra.mxu0 %v3645
        %3744 = vmatprep.subr.mxu0 0.0
        %3745 = vmatpush1.msra.mxu0 %v3646
        %3746 = vmatprep.subr.mxu0 0.0
        %3747 = vmatpush1.msra.mxu0 %v3647
        %3748 = vmatprep.subr.mxu0 0.0
        %3749 = vmatpush1.msra.mxu0 %v3648
        %3750 = vmatprep.subr.mxu0 0.0
        %3751 = vmatpush1.msra.mxu0 %v3649
        %3752 = vmatprep.subr.mxu0 0.0
        %3753 = vmatpush1.msra.mxu0 %v3650
        %3754 = vmatprep.subr.mxu0 0.0
        %3755 = vmatpush1.msra.mxu0 %v3651
        %3756 = vmatprep.subr.mxu0 0.0
        %3757 = vmatpush1.msra.mxu0 %v3652
        %3758 = vmatprep.subr.mxu0 0.0
        %3759 = vmatpush1.msra.mxu0 %v3653
        %3760 = vmatprep.subr.mxu0 0.0
        %3761 = vmatpush1.msra.mxu0 %v3654
        %3762 = vmatprep.subr.mxu0 0.0
        %3763 = vmatpush1.msra.mxu0 %v3655
        %3764 = vmatprep.subr.mxu0 0.0
        %3765 = vmatpush1.msra.mxu0 %v3656
        %3766 = vmatprep.subr.mxu0 0.0
        %3767 = vmatpush1.msra.mxu0 %v3657
        %3768 = vmatprep.subr.mxu0 0.0
        %3769 = vmatpush1.msra.mxu0 %v3658
        %3770 = vmatprep.subr.mxu0 0.0
        %3771 = vmatpush1.msra.mxu0 %v3659
        %3772 = vmatprep.subr.mxu0 0.0
        %3773 = vmatpush1.msra.mxu0 0.0
        %3774 = vmatprep.subr.mxu0 0.0
        %3775 = vmatpush1.msra.mxu0 0.0
        %3776 = vmatprep.subr.mxu0 0.0
        %3777 = vmatpush1.msra.mxu0 0.0
        %3778 = vmatprep.subr.mxu0 0.0
        %3779 = vmatpush1.msra.mxu0 0.0
        %3780 = vmatprep.subr.mxu0 0.0
        %3781 = vmatpush1.msra.mxu0 0.0
        %3782 = vmatprep.subr.mxu0 0.0
        %3783 = vmatpush1.msra.mxu0 0.0
        %3784 = vmatprep.subr.mxu0 0.0
        %3785 = vmatpush1.msra.mxu0 0.0
        %3786 = vmatprep.subr.mxu0 0.0
        %3787 = vmatpush1.msra.mxu0 0.0
        %3788 = vmatprep.mubr.f32.mxu0 %v3660
        %3789 = vmatmul.mubr.f32.gmra.mrb[0].mxu0 %v3603
        %v3790 = vpop.f32.mrb[0].mxu0
        %v3791 = vadd.f32 0.0, %v3790
        %v3792 = vpop.f32.mrb[0].mxu0
        %3793 = vmatprep.mubr.f32.mxu0 %v3662
        %3794 = vmatmul.mubr.f32.gmra.mrb[0].mxu0 %v3604
        %v3795 = vpop.f32.mrb[0].mxu0
        %v3796 = vadd.f32 0.0, %v3795
        %v3797 = vpop.f32.mrb[0].mxu0
        %3798 = vmatprep.mubr.f32.mxu0 %v3664
        %3799 = vmatmul.mubr.f32.gmra.mrb[0].mxu0 %v3605
        %v3800 = vpop.f32.mrb[0].mxu0
        %v3801 = vadd.f32 0.0, %v3800
        %v3802 = vpop.f32.mrb[0].mxu0
        %3803 = vmatprep.mubr.f32.mxu0 %v3666
        %3804 = vmatmul.mubr.f32.gmra.mrb[0].mxu0 %v3606
        %v3805 = vpop.f32.mrb[0].mxu0
        %v3806 = vadd.f32 0.0, %v3805
        %v3807 = vpop.f32.mrb[0].mxu0
        %3808 = vmatprep.mubr.f32.mxu0 %v3668
        %3809 = vmatmul.mubr.f32.gmra.mrb[0].mxu0 %v3607
        %v3810 = vpop.f32.mrb[0].mxu0
        %v3811 = vadd.f32 0.0, %v3810
        %v3812 = vpop.f32.mrb[0].mxu0
        %3813 = vmatprep.mubr.f32.mxu0 %v3670
        %3814 = vmatmul.mubr.f32.gmra.mrb[0].mxu0 %v3608
        %v3815 = vpop.f32.mrb[0].mxu0
        %v3816 = vadd.f32 0.0, %v3815
        %v3817 = vpop.f32.mrb[0].mxu0
        %3818 = vmatprep.mubr.f32.mxu0 %v3672
        %3819 = vmatmul.mubr.f32.gmra.mrb[0].mxu0 %v3609
        %v3820 = vpop.f32.mrb[0].mxu0
        %v3821 = vadd.f32 0.0, %v3820
        %v3822 = vpop.f32.mrb[0].mxu0
        %3823 = vmatprep.mubr.f32.mxu0 %v3674
        %3824 = vmatmul.mubr.f32.gmra.mrb[0].mxu0 %v3610
        %v3825 = vpop.f32.mrb[0].mxu0
        %v3826 = vadd.f32 0.0, %v3825
        %v3827 = vpop.f32.mrb[0].mxu0
        %3828 = vmatprep.mubr.f32.mxu0 %v3676
        %3829 = vmatmul.mubr.f32.gmra.mrb[0].mxu0 %v3611
        %v3830 = vpop.f32.mrb[0].mxu0
        %v3831 = vadd.f32 0.0, %v3830
        %v3832 = vpop.f32.mrb[0].mxu0
        %3833 = vmatprep.mubr.f32.mxu0 %v3678
        %3834 = vmatmul.mubr.f32.gmra.mrb[0].mxu0 %v3612
        %v3835 = vpop.f32.mrb[0].mxu0
        %v3836 = vadd.f32 0.0, %v3835
        %v3837 = vpop.f32.mrb[0].mxu0
        %3838 = vmatprep.mubr.f32.mxu0 %v3680
        %3839 = vmatmul.mubr.f32.gmra.mrb[0].mxu0 %v3613
        %v3840 = vpop.f32.mrb[0].mxu0
        %v3841 = vadd.f32 0.0, %v3840
        %v3842 = vpop.f32.mrb[0].mxu0
        %3843 = vmatprep.mubr.f32.mxu0 %v3682
        %3844 = vmatmul.mubr.f32.gmra.mrb[0].mxu0 %v3614
        %v3845 = vpop.f32.mrb[0].mxu0
        %v3846 = vadd.f32 0.0, %v3845
        %v3847 = vpop.f32.mrb[0].mxu0
        %3848 = vmatprep.mubr.f32.mxu0 %v3684
        %3849 = vmatmul.mubr.f32.gmra.mrb[0].mxu0 %v3615
        %v3850 = vpop.f32.mrb[0].mxu0
        %v3851 = vadd.f32 0.0, %v3850
        %v3852 = vpop.f32.mrb[0].mxu0
        %3853 = vmatprep.mubr.f32.mxu0 %v3686
        %3854 = vmatmul.mubr.f32.gmra.mrb[0].mxu0 %v3616
        %v3855 = vpop.f32.mrb[0].mxu0
        %v3856 = vadd.f32 0.0, %v3855
        %v3857 = vpop.f32.mrb[0].mxu0
        %3858 = vmatprep.mubr.f32.mxu0 %v3688
        %3859 = vmatmul.mubr.f32.gmra.mrb[0].mxu0 %v3617
        %v3860 = vpop.f32.mrb[0].mxu0
        %v3861 = vadd.f32 0.0, %v3860
        %v3862 = vpop.f32.mrb[0].mxu0
        %3863 = vmatprep.mubr.f32.mxu0 %v3690
        %3864 = vmatmul.mubr.f32.gmra.mrb[0].mxu0 %v3618
        %v3865 = vpop.f32.mrb[0].mxu0
        %v3866 = vadd.f32 0.0, %v3865
        %v3867 = vpop.f32.mrb[0].mxu0
        %3868 = vmatprep.mubr.f32.mxu0 %v3692
        %3869 = vmatmul.mubr.f32.gmra.mrb[0].mxu0 %v3619
        %v3870 = vpop.f32.mrb[0].mxu0
        %v3871 = vadd.f32 0.0, %v3870
        %v3872 = vpop.f32.mrb[0].mxu0
        %3873 = vmatprep.mubr.f32.mxu0 %v3694
        %3874 = vmatmul.mubr.f32.gmra.mrb[0].mxu0 %v3620
        %v3875 = vpop.f32.mrb[0].mxu0
        %v3876 = vadd.f32 0.0, %v3875
        %v3877 = vpop.f32.mrb[0].mxu0
        %3878 = vmatprep.mubr.f32.mxu0 %v3696
        %3879 = vmatmul.mubr.f32.gmra.mrb[0].mxu0 %v3621
        %v3880 = vpop.f32.mrb[0].mxu0
        %v3881 = vadd.f32 0.0, %v3880
        %v3882 = vpop.f32.mrb[0].mxu0
        %3883 = vmatprep.mubr.f32.mxu0 %v3698
        %3884 = vmatmul.mubr.f32.gmra.mrb[0].mxu0 %v3622
        %v3885 = vpop.f32.mrb[0].mxu0
        %v3886 = vadd.f32 0.0, %v3885
        %v3887 = vpop.f32.mrb[0].mxu0
        %3888 = vmatprep.mubr.f32.mxu0 %v3700
        %3889 = vmatmul.mubr.f32.gmra.mrb[0].mxu0 %v3623
        %v3890 = vpop.f32.mrb[0].mxu0
        %v3891 = vadd.f32 0.0, %v3890
        %v3892 = vpop.f32.mrb[0].mxu0
        %3893 = vmatprep.mubr.f32.mxu0 %v3702
        %3894 = vmatmul.mubr.f32.gmra.mrb[0].mxu0 %v3624
        %v3895 = vpop.f32.mrb[0].mxu0
        %v3896 = vadd.f32 0.0, %v3895
        %v3897 = vpop.f32.mrb[0].mxu0
        %3898 = vmatprep.mubr.f32.mxu0 %v3704
        %3899 = vmatmul.mubr.f32.gmra.mrb[0].mxu0 %v3625
        %v3900 = vpop.f32.mrb[0].mxu0
        %v3901 = vadd.f32 0.0, %v3900
        %v3902 = vpop.f32.mrb[0].mxu0
        %3903 = vmatprep.mubr.f32.mxu0 %v3706
        %3904 = vmatmul.mubr.f32.gmra.mrb[0].mxu0 %v3626
        %v3905 = vpop.f32.mrb[0].mxu0
        %v3906 = vadd.f32 0.0, %v3905
        %v3907 = vpop.f32.mrb[0].mxu0
        %3908 = vmatprep.mubr.f32.mxu0 %v3708
        %3909 = vmatmul.mubr.f32.gmra.mrb[0].mxu0 %v3627
        %v3910 = vpop.f32.mrb[0].mxu0
        %v3911 = vadd.f32 0.0, %v3910
        %v3912 = vpop.f32.mrb[0].mxu0
        %3913 = vmatprep.mubr.f32.mxu0 %v3710
        %3914 = vmatmul.mubr.f32.gmra.mrb[0].mxu0 %v3628
        %v3915 = vpop.f32.mrb[0].mxu0
        %v3916 = vadd.f32 0.0, %v3915
        %v3917 = vpop.f32.mrb[0].mxu0
        %3918 = vmatprep.mubr.f32.mxu0 %v3712
        %3919 = vmatmul.mubr.f32.gmra.mrb[0].mxu0 %v3629
        %v3920 = vpop.f32.mrb[0].mxu0
        %v3921 = vadd.f32 0.0, %v3920
        %v3922 = vpop.f32.mrb[0].mxu0
        %3923 = vmatprep.mubr.f32.mxu0 %v3714
        %3924 = vmatmul.mubr.f32.gmra.mrb[0].mxu0 %v3630
        %v3925 = vpop.f32.mrb[0].mxu0
        %v3926 = vadd.f32 0.0, %v3925
        %v3927 = vpop.f32.mrb[0].mxu0
        %3928 = vmatprep.mubr.f32.mxu0 %v3716
        %3929 = vmatmul.mubr.f32.gmra.mrb[0].mxu0 %v3631
        %v3930 = vpop.f32.mrb[0].mxu0
        %v3931 = vadd.f32 0.0, %v3930
        %v3932 = vpop.f32.mrb[0].mxu0
        %3933 = vmatprep.mubr.f32.mxu0 %v3718
        %3934 = vmatmul.mubr.f32.gmra.mrb[0].mxu0 %v3632
        %v3935 = vpop.f32.mrb[0].mxu0
        %v3936 = vadd.f32 0.0, %v3935
        %v3937 = vpop.f32.mrb[0].mxu0
        %3938 = vmatprep.mubr.f32.mxu0 %v3720
        %3939 = vmatmul.mubr.f32.gmra.mrb[0].mxu0 %v3633
        %v3940 = vpop.f32.mrb[0].mxu0
        %v3941 = vadd.f32 0.0, %v3940
        %v3942 = vpop.f32.mrb[0].mxu0
        %3943 = vmatprep.mubr.f32.mxu0 %v3722
        %3944 = vmatmul.mubr.f32.gmra.mrb[0].mxu0 %v3634
        %v3945 = vpop.f32.mrb[0].mxu0
        %v3946 = vadd.f32 0.0, %v3945
        %v3947 = vpop.f32.mrb[0].mxu0
        %3948 = vdwg.mxu0
        %v3949 = vsel %vm363, %v3117, 0
        %v3951 = vsel %vm363, %v3119, 0
        %v3953 = vsel %vm363, %v3122, 0
        %v3955 = vsel %vm363, %v3124, 0
        %v3957 = vsel %vm363, %v3127, 0
        %v3959 = vsel %vm363, %v3129, 0
        %v3961 = vsel %vm363, %v3132, 0
        %v3963 = vsel %vm363, %v3134, 0
        %v3965 = vsel %vm363, %v3137, 0
        %v3967 = vsel %vm363, %v3139, 0
        %v3969 = vsel %vm363, %v3142, 0
        %v3971 = vsel %vm363, %v3144, 0
        %v3973 = vsel %vm363, %v3147, 0
        %v3975 = vsel %vm363, %v3149, 0
        %v3977 = vsel %vm363, %v3152, 0
        %v3979 = vsel %vm363, %v3154, 0
        %v3981 = vsel %vm363, %v3157, 0
        %v3983 = vsel %vm363, %v3159, 0
        %v3985 = vsel %vm363, %v3162, 0
        %v3987 = vsel %vm363, %v3164, 0
        %v3989 = vsel %vm363, %v3167, 0
        %v3991 = vsel %vm363, %v3169, 0
        %v3993 = vsel %vm363, %v3172, 0
        %v3995 = vsel %vm363, %v3174, 0
        %v3997 = vsel %vm363, %v3177, 0
        %v3999 = vsel %vm363, %v3179, 0
        %v4001 = vsel %vm363, %v3182, 0
        %v4003 = vsel %vm363, %v3184, 0
        %v4005 = vsel %vm363, %v3187, 0
        %v4007 = vsel %vm363, %v3189, 0
        %v4009 = vsel %vm363, %v3192, 0
        %v4011 = vsel %vm363, %v3194, 0
        %4013 = vmatprep.subr.mxu0 0.0
        %4014 = vmatpush1.msra.mxu0 %v3227
        %4015 = vmatprep.subr.mxu0 0.0
        %4016 = vmatpush1.msra.mxu0 %v3228
        %4017 = vmatprep.subr.mxu0 0.0
        %4018 = vmatpush1.msra.mxu0 %v3229
        %4019 = vmatprep.subr.mxu0 0.0
        %4020 = vmatpush1.msra.mxu0 %v3230
        %4021 = vmatprep.subr.mxu0 0.0
        %4022 = vmatpush1.msra.mxu0 %v3231
        %4023 = vmatprep.subr.mxu0 0.0
        %4024 = vmatpush1.msra.mxu0 %v3232
        %4025 = vmatprep.subr.mxu0 0.0
        %4026 = vmatpush1.msra.mxu0 %v3233
        %4027 = vmatprep.subr.mxu0 0.0
        %4028 = vmatpush1.msra.mxu0 %v3234
        %4029 = vmatprep.subr.mxu0 0.0
        %4030 = vmatpush1.msra.mxu0 %v3235
        %4031 = vmatprep.subr.mxu0 0.0
        %4032 = vmatpush1.msra.mxu0 %v3236
        %4033 = vmatprep.subr.mxu0 0.0
        %4034 = vmatpush1.msra.mxu0 %v3237
        %4035 = vmatprep.subr.mxu0 0.0
        %4036 = vmatpush1.msra.mxu0 %v3238
        %4037 = vmatprep.subr.mxu0 0.0
        %4038 = vmatpush1.msra.mxu0 %v3239
        %4039 = vmatprep.subr.mxu0 0.0
        %4040 = vmatpush1.msra.mxu0 %v3240
        %4041 = vmatprep.subr.mxu0 0.0
        %4042 = vmatpush1.msra.mxu0 %v3241
        %4043 = vmatprep.subr.mxu0 0.0
        %4044 = vmatpush1.msra.mxu0 %v3242
        %4045 = vmatprep.subr.mxu0 0.0
        %4046 = vmatpush1.msra.mxu0 %v3243
        %4047 = vmatprep.subr.mxu0 0.0
        %4048 = vmatpush1.msra.mxu0 %v3244
        %4049 = vmatprep.subr.mxu0 0.0
        %4050 = vmatpush1.msra.mxu0 %v3245
        %4051 = vmatprep.subr.mxu0 0.0
        %4052 = vmatpush1.msra.mxu0 %v3246
        %4053 = vmatprep.subr.mxu0 0.0
        %4054 = vmatpush1.msra.mxu0 %v3247
        %4055 = vmatprep.subr.mxu0 0.0
        %4056 = vmatpush1.msra.mxu0 %v3248
        %4057 = vmatprep.subr.mxu0 0.0
        %4058 = vmatpush1.msra.mxu0 %v3249
        %4059 = vmatprep.subr.mxu0 0.0
        %4060 = vmatpush1.msra.mxu0 %v3250
        %4061 = vmatprep.subr.mxu0 0.0
        %4062 = vmatpush1.msra.mxu0 0.0
        %4063 = vmatprep.subr.mxu0 0.0
        %4064 = vmatpush1.msra.mxu0 0.0
        %4065 = vmatprep.subr.mxu0 0.0
        %4066 = vmatpush1.msra.mxu0 0.0
        %4067 = vmatprep.subr.mxu0 0.0
        %4068 = vmatpush1.msra.mxu0 0.0
        %4069 = vmatprep.subr.mxu0 0.0
        %4070 = vmatpush1.msra.mxu0 0.0
        %4071 = vmatprep.subr.mxu0 0.0
        %4072 = vmatpush1.msra.mxu0 0.0
        %4073 = vmatprep.subr.mxu0 0.0
        %4074 = vmatpush1.msra.mxu0 0.0
        %4075 = vmatprep.subr.mxu0 0.0
        %4076 = vmatpush1.msra.mxu0 0.0
        %4077 = vmatprep.mubr.f32.mxu0 %v3949
        %4078 = vmatmul.mubr.f32.gmra.mrb[0].mxu0 %v3195
        %v4079 = vpop.f32.mrb[0].mxu0
        %v4080 = vadd.f32 %v3791, %v4079
        %v4081 = vpop.f32.mrb[0].mxu0
        %4082 = vmatprep.mubr.f32.mxu0 %v3951
        %4083 = vmatmul.mubr.f32.gmra.mrb[0].mxu0 %v3196
        %v4084 = vpop.f32.mrb[0].mxu0
        %v4085 = vadd.f32 %v3796, %v4084
        %v4086 = vpop.f32.mrb[0].mxu0
        %4087 = vmatprep.mubr.f32.mxu0 %v3953
        %4088 = vmatmul.mubr.f32.gmra.mrb[0].mxu0 %v3197
        %v4089 = vpop.f32.mrb[0].mxu0
        %v4090 = vadd.f32 %v3801, %v4089
        %v4091 = vpop.f32.mrb[0].mxu0
        %4092 = vmatprep.mubr.f32.mxu0 %v3955
        %4093 = vmatmul.mubr.f32.gmra.mrb[0].mxu0 %v3198
        %v4094 = vpop.f32.mrb[0].mxu0
        %v4095 = vadd.f32 %v3806, %v4094
        %v4096 = vpop.f32.mrb[0].mxu0
        %4097 = vmatprep.mubr.f32.mxu0 %v3957
        %4098 = vmatmul.mubr.f32.gmra.mrb[0].mxu0 %v3199
        %v4099 = vpop.f32.mrb[0].mxu0
        %v4100 = vadd.f32 %v3811, %v4099
        %v4101 = vpop.f32.mrb[0].mxu0
        %4102 = vmatprep.mubr.f32.mxu0 %v3959
        %4103 = vmatmul.mubr.f32.gmra.mrb[0].mxu0 %v3200
        %v4104 = vpop.f32.mrb[0].mxu0
        %v4105 = vadd.f32 %v3816, %v4104
        %v4106 = vpop.f32.mrb[0].mxu0
        %4107 = vmatprep.mubr.f32.mxu0 %v3961
        %4108 = vmatmul.mubr.f32.gmra.mrb[0].mxu0 %v3201
        %v4109 = vpop.f32.mrb[0].mxu0
        %v4110 = vadd.f32 %v3821, %v4109
        %v4111 = vpop.f32.mrb[0].mxu0
        %4112 = vmatprep.mubr.f32.mxu0 %v3963
        %4113 = vmatmul.mubr.f32.gmra.mrb[0].mxu0 %v3202
        %v4114 = vpop.f32.mrb[0].mxu0
        %v4115 = vadd.f32 %v3826, %v4114
        %v4116 = vpop.f32.mrb[0].mxu0
        %4117 = vmatprep.mubr.f32.mxu0 %v3965
        %4118 = vmatmul.mubr.f32.gmra.mrb[0].mxu0 %v3203
        %v4119 = vpop.f32.mrb[0].mxu0
        %v4120 = vadd.f32 %v3831, %v4119
        %v4121 = vpop.f32.mrb[0].mxu0
        %4122 = vmatprep.mubr.f32.mxu0 %v3967
        %4123 = vmatmul.mubr.f32.gmra.mrb[0].mxu0 %v3204
        %v4124 = vpop.f32.mrb[0].mxu0
        %v4125 = vadd.f32 %v3836, %v4124
        %v4126 = vpop.f32.mrb[0].mxu0
        %4127 = vmatprep.mubr.f32.mxu0 %v3969
        %4128 = vmatmul.mubr.f32.gmra.mrb[0].mxu0 %v3205
        %v4129 = vpop.f32.mrb[0].mxu0
        %v4130 = vadd.f32 %v3841, %v4129
        %v4131 = vpop.f32.mrb[0].mxu0
        %4132 = vmatprep.mubr.f32.mxu0 %v3971
        %4133 = vmatmul.mubr.f32.gmra.mrb[0].mxu0 %v3206
        %v4134 = vpop.f32.mrb[0].mxu0
        %v4135 = vadd.f32 %v3846, %v4134
        %v4136 = vpop.f32.mrb[0].mxu0
        %4137 = vmatprep.mubr.f32.mxu0 %v3973
        %4138 = vmatmul.mubr.f32.gmra.mrb[0].mxu0 %v3207
        %v4139 = vpop.f32.mrb[0].mxu0
        %v4140 = vadd.f32 %v3851, %v4139
        %v4141 = vpop.f32.mrb[0].mxu0
        %4142 = vmatprep.mubr.f32.mxu0 %v3975
        %4143 = vmatmul.mubr.f32.gmra.mrb[0].mxu0 %v3208
        %v4144 = vpop.f32.mrb[0].mxu0
        %v4145 = vadd.f32 %v3856, %v4144
        %v4146 = vpop.f32.mrb[0].mxu0
        %4147 = vmatprep.mubr.f32.mxu0 %v3977
        %4148 = vmatmul.mubr.f32.gmra.mrb[0].mxu0 %v3209
        %v4149 = vpop.f32.mrb[0].mxu0
        %v4150 = vadd.f32 %v3861, %v4149
        %v4151 = vpop.f32.mrb[0].mxu0
        %4152 = vmatprep.mubr.f32.mxu0 %v3979
        %4153 = vmatmul.mubr.f32.gmra.mrb[0].mxu0 %v3210
        %v4154 = vpop.f32.mrb[0].mxu0
        %v4155 = vadd.f32 %v3866, %v4154
        %v4156 = vpop.f32.mrb[0].mxu0
        %4157 = vmatprep.mubr.f32.mxu0 %v3981
        %4158 = vmatmul.mubr.f32.gmra.mrb[0].mxu0 %v3211
        %v4159 = vpop.f32.mrb[0].mxu0
        %v4160 = vadd.f32 %v3871, %v4159
        %v4161 = vpop.f32.mrb[0].mxu0
        %4162 = vmatprep.mubr.f32.mxu0 %v3983
        %4163 = vmatmul.mubr.f32.gmra.mrb[0].mxu0 %v3212
        %v4164 = vpop.f32.mrb[0].mxu0
        %v4165 = vadd.f32 %v3876, %v4164
        %v4166 = vpop.f32.mrb[0].mxu0
        %4167 = vmatprep.mubr.f32.mxu0 %v3985
        %4168 = vmatmul.mubr.f32.gmra.mrb[0].mxu0 %v3213
        %v4169 = vpop.f32.mrb[0].mxu0
        %v4170 = vadd.f32 %v3881, %v4169
        %v4171 = vpop.f32.mrb[0].mxu0
        %4172 = vmatprep.mubr.f32.mxu0 %v3987
        %4173 = vmatmul.mubr.f32.gmra.mrb[0].mxu0 %v3214
        %v4174 = vpop.f32.mrb[0].mxu0
        %v4175 = vadd.f32 %v3886, %v4174
        %v4176 = vpop.f32.mrb[0].mxu0
        %4177 = vmatprep.mubr.f32.mxu0 %v3989
        %4178 = vmatmul.mubr.f32.gmra.mrb[0].mxu0 %v3215
        %v4179 = vpop.f32.mrb[0].mxu0
        %v4180 = vadd.f32 %v3891, %v4179
        %v4181 = vpop.f32.mrb[0].mxu0
        %4182 = vmatprep.mubr.f32.mxu0 %v3991
        %4183 = vmatmul.mubr.f32.gmra.mrb[0].mxu0 %v3216
        %v4184 = vpop.f32.mrb[0].mxu0
        %v4185 = vadd.f32 %v3896, %v4184
        %v4186 = vpop.f32.mrb[0].mxu0
        %4187 = vmatprep.mubr.f32.mxu0 %v3993
        %4188 = vmatmul.mubr.f32.gmra.mrb[0].mxu0 %v3217
        %v4189 = vpop.f32.mrb[0].mxu0
        %v4190 = vadd.f32 %v3901, %v4189
        %v4191 = vpop.f32.mrb[0].mxu0
        %4192 = vmatprep.mubr.f32.mxu0 %v3995
        %4193 = vmatmul.mubr.f32.gmra.mrb[0].mxu0 %v3218
        %v4194 = vpop.f32.mrb[0].mxu0
        %v4195 = vadd.f32 %v3906, %v4194
        %v4196 = vpop.f32.mrb[0].mxu0
        %4197 = vmatprep.mubr.f32.mxu0 %v3997
        %4198 = vmatmul.mubr.f32.gmra.mrb[0].mxu0 %v3219
        %v4199 = vpop.f32.mrb[0].mxu0
        %v4200 = vadd.f32 %v3911, %v4199
        %v4201 = vpop.f32.mrb[0].mxu0
        %4202 = vmatprep.mubr.f32.mxu0 %v3999
        %4203 = vmatmul.mubr.f32.gmra.mrb[0].mxu0 %v3220
        %v4204 = vpop.f32.mrb[0].mxu0
        %v4205 = vadd.f32 %v3916, %v4204
        %v4206 = vpop.f32.mrb[0].mxu0
        %4207 = vmatprep.mubr.f32.mxu0 %v4001
        %4208 = vmatmul.mubr.f32.gmra.mrb[0].mxu0 %v3221
        %v4209 = vpop.f32.mrb[0].mxu0
        %v4210 = vadd.f32 %v3921, %v4209
        %v4211 = vpop.f32.mrb[0].mxu0
        %4212 = vmatprep.mubr.f32.mxu0 %v4003
        %4213 = vmatmul.mubr.f32.gmra.mrb[0].mxu0 %v3222
        %v4214 = vpop.f32.mrb[0].mxu0
        %v4215 = vadd.f32 %v3926, %v4214
        %v4216 = vpop.f32.mrb[0].mxu0
        %4217 = vmatprep.mubr.f32.mxu0 %v4005
        %4218 = vmatmul.mubr.f32.gmra.mrb[0].mxu0 %v3223
        %v4219 = vpop.f32.mrb[0].mxu0
        %v4220 = vadd.f32 %v3931, %v4219
        %v4221 = vpop.f32.mrb[0].mxu0
        %4222 = vmatprep.mubr.f32.mxu0 %v4007
        %4223 = vmatmul.mubr.f32.gmra.mrb[0].mxu0 %v3224
        %v4224 = vpop.f32.mrb[0].mxu0
        %v4225 = vadd.f32 %v3936, %v4224
        %v4226 = vpop.f32.mrb[0].mxu0
        %4227 = vmatprep.mubr.f32.mxu0 %v4009
        %4228 = vmatmul.mubr.f32.gmra.mrb[0].mxu0 %v3225
        %v4229 = vpop.f32.mrb[0].mxu0
        %v4230 = vadd.f32 %v3941, %v4229
        %v4231 = vpop.f32.mrb[0].mxu0
        %4232 = vmatprep.mubr.f32.mxu0 %v4011
        %4233 = vmatmul.mubr.f32.gmra.mrb[0].mxu0 %v3226
        %v4234 = vpop.f32.mrb[0].mxu0
        %v4235 = vadd.f32 %v3946, %v4234
        %v4236 = vpop.f32.mrb[0].mxu0
        %4237 = vdwg.mxu0
        %v4238 = vld [vmem:[%s1849] sm:$0xff]
        %v4239 = vld [vmem:[%s1849 + $0x8] sm:$0xff]
        %v4240 = vld [vmem:[%s1849 + $0x10] sm:$0x3]
        %v4241 = vld [vmem:[%s1849 + $0x18] sm:$0xff]
        %v4242 = vld [vmem:[%s1849 + $0x20] sm:$0xff]
        %v4243 = vld [vmem:[%s1849 + $0x28] sm:$0x3]
        %v4244 = vld [vmem:[%s1849 + $0x30] sm:$0xff]
        %v4245 = vld [vmem:[%s1849 + $0x38] sm:$0xff]
        %v4246 = vld [vmem:[%s1849 + $0x40] sm:$0x3]
        %v4247 = vld [vmem:[%s1849 + $0x48] sm:$0xff]
        %v4248 = vld [vmem:[%s1849 + $0x50] sm:$0xff]
        %v4249 = vld [vmem:[%s1849 + $0x58] sm:$0x3]
        %v4250 = vld [vmem:[%s1849 + $0x60] sm:$0xff]
        %v4251 = vld [vmem:[%s1849 + $0x68] sm:$0xff]
        %v4252 = vld [vmem:[%s1849 + $0x70] sm:$0x3]
        %v4253 = vld [vmem:[%s1849 + $0x78] sm:$0xff]
        %v4254 = vld [vmem:[%s1849 + $0x80] sm:$0xff]
        %v4255 = vld [vmem:[%s1849 + $0x88] sm:$0x3]
        %v4256 = vld [vmem:[%s1849 + $0x90] sm:$0xff]
        %v4257 = vld [vmem:[%s1849 + $0x98] sm:$0xff]
        %v4258 = vld [vmem:[%s1849 + $0xa0] sm:$0x3]
        %v4259 = vld [vmem:[%s1849 + $0xa8] sm:$0xff]
        %v4260 = vld [vmem:[%s1849 + $0xb0] sm:$0xff]
        %v4261 = vld [vmem:[%s1849 + $0xb8] sm:$0x3]
        %v4262 = vld [vmem:[%s1849 + $0xc0] sm:$0xff]
        %v4263 = vld [vmem:[%s1849 + $0xc8] sm:$0xff]
        %v4264 = vld [vmem:[%s1849 + $0xd0] sm:$0x3]
        %v4265 = vld [vmem:[%s1849 + $0xd8] sm:$0xff]
        %v4266 = vld [vmem:[%s1849 + $0xe0] sm:$0xff]
        %v4267 = vld [vmem:[%s1849 + $0xe8] sm:$0x3]
        %v4268 = vld [vmem:[%s1849 + $0xf0] sm:$0xff]
        %v4269 = vld [vmem:[%s1849 + $0xf8] sm:$0xff]
        %v4270 = vld [vmem:[%s1849 + $0x100] sm:$0x3]
        %v4271 = vld [vmem:[%s1849 + $0x108] sm:$0xff]
        %v4272 = vld [vmem:[%s1849 + $0x110] sm:$0xff]
        %v4273 = vld [vmem:[%s1849 + $0x118] sm:$0x3]
        %v4274 = vld [vmem:[%s1849 + $0x120] sm:$0xff]
        %v4275 = vld [vmem:[%s1849 + $0x128] sm:$0xff]
        %v4276 = vld [vmem:[%s1849 + $0x130] sm:$0x3]
        %v4277 = vld [vmem:[%s1849 + $0x138] sm:$0xff]
        %v4278 = vld [vmem:[%s1849 + $0x140] sm:$0xff]
        %v4279 = vld [vmem:[%s1849 + $0x148] sm:$0x3]
        %v4280 = vld [vmem:[%s1849 + $0x150] sm:$0xff]
        %v4281 = vld [vmem:[%s1849 + $0x158] sm:$0xff]
        %v4282 = vld [vmem:[%s1849 + $0x160] sm:$0x3]
        %v4283 = vld [vmem:[%s1849 + $0x168] sm:$0xff]
        %v4284 = vld [vmem:[%s1849 + $0x170] sm:$0xff]
        %v4285 = vld [vmem:[%s1849 + $0x178] sm:$0x3]
        %v4334 = vrot.slane %v4238, 1
        %v4335 = vrot.slane %v4239, 1
        %v4336 = vsel %vm548, %v4334, %v4335
        %v4337 = vrot.slane %v4240, 1
        %v4338 = vsel %vm548, %v4335, %v4337
        %v4339 = vrot.slane %v4241, 1
        %v4340 = vrot.slane %v4242, 1
        %v4341 = vsel %vm548, %v4339, %v4340
        %v4342 = vrot.slane %v4243, 1
        %v4343 = vsel %vm548, %v4340, %v4342
        %v4344 = vrot.slane %v4244, 1
        %v4345 = vrot.slane %v4245, 1
        %v4346 = vsel %vm548, %v4344, %v4345
        %v4347 = vrot.slane %v4246, 1
        %v4348 = vsel %vm548, %v4345, %v4347
        %v4349 = vrot.slane %v4247, 1
        %v4350 = vrot.slane %v4248, 1
        %v4351 = vsel %vm548, %v4349, %v4350
        %v4352 = vrot.slane %v4249, 1
        %v4353 = vsel %vm548, %v4350, %v4352
        %v4354 = vrot.slane %v4250, 1
        %v4355 = vrot.slane %v4251, 1
        %v4356 = vsel %vm548, %v4354, %v4355
        %v4357 = vrot.slane %v4252, 1
        %v4358 = vsel %vm548, %v4355, %v4357
        %v4359 = vrot.slane %v4253, 1
        %v4360 = vrot.slane %v4254, 1
        %v4361 = vsel %vm548, %v4359, %v4360
        %v4362 = vrot.slane %v4255, 1
        %v4363 = vsel %vm548, %v4360, %v4362
        %v4364 = vrot.slane %v4256, 1
        %v4365 = vrot.slane %v4257, 1
        %v4366 = vsel %vm548, %v4364, %v4365
        %v4367 = vrot.slane %v4258, 1
        %v4368 = vsel %vm548, %v4365, %v4367
        %v4369 = vrot.slane %v4259, 1
        %v4370 = vrot.slane %v4260, 1
        %v4371 = vsel %vm548, %v4369, %v4370
        %v4372 = vrot.slane %v4261, 1
        %v4373 = vsel %vm548, %v4370, %v4372
        %v4374 = vrot.slane %v4262, 1
        %v4375 = vrot.slane %v4263, 1
        %v4376 = vsel %vm548, %v4374, %v4375
        %v4377 = vrot.slane %v4264, 1
        %v4378 = vsel %vm548, %v4375, %v4377
        %v4379 = vrot.slane %v4265, 1
        %v4380 = vrot.slane %v4266, 1
        %v4381 = vsel %vm548, %v4379, %v4380
        %v4382 = vrot.slane %v4267, 1
        %v4383 = vsel %vm548, %v4380, %v4382
        %v4384 = vrot.slane %v4268, 1
        %v4385 = vrot.slane %v4269, 1
        %v4386 = vsel %vm548, %v4384, %v4385
        %v4387 = vrot.slane %v4270, 1
        %v4388 = vsel %vm548, %v4385, %v4387
        %v4389 = vrot.slane %v4271, 1
        %v4390 = vrot.slane %v4272, 1
        %v4391 = vsel %vm548, %v4389, %v4390
        %v4392 = vrot.slane %v4273, 1
        %v4393 = vsel %vm548, %v4390, %v4392
        %v4394 = vrot.slane %v4274, 1
        %v4395 = vrot.slane %v4275, 1
        %v4396 = vsel %vm548, %v4394, %v4395
        %v4397 = vrot.slane %v4276, 1
        %v4398 = vsel %vm548, %v4395, %v4397
        %v4399 = vrot.slane %v4277, 1
        %v4400 = vrot.slane %v4278, 1
        %v4401 = vsel %vm548, %v4399, %v4400
        %v4402 = vrot.slane %v4279, 1
        %v4403 = vsel %vm548, %v4400, %v4402
        %v4404 = vrot.slane %v4280, 1
        %v4405 = vrot.slane %v4281, 1
        %v4406 = vsel %vm548, %v4404, %v4405
        %v4407 = vrot.slane %v4282, 1
        %v4408 = vsel %vm548, %v4405, %v4407
        %v4409 = vrot.slane %v4283, 1
        %v4410 = vrot.slane %v4284, 1
        %v4411 = vsel %vm548, %v4409, %v4410
        %v4412 = vrot.slane %v4285, 1
        %v4413 = vsel %vm548, %v4410, %v4412
        %4414 = vrot.lane.b32.xlu0 %v4336, 64
        %v4415 = vpop.permute.xlu0 %4414
        %4416 = vrot.lane.b32.xlu0 %v4338, 64
        %v4417 = vpop.permute.xlu0 %4416
        %4418 = vrot.lane.b32.xlu0 %v4341, 64
        %v4419 = vpop.permute.xlu0 %4418
        %4420 = vrot.lane.b32.xlu0 %v4343, 64
        %v4421 = vpop.permute.xlu0 %4420
        %4422 = vrot.lane.b32.xlu0 %v4346, 64
        %v4423 = vpop.permute.xlu0 %4422
        %4424 = vrot.lane.b32.xlu0 %v4348, 64
        %v4425 = vpop.permute.xlu0 %4424
        %4426 = vrot.lane.b32.xlu0 %v4351, 64
        %v4427 = vpop.permute.xlu0 %4426
        %4428 = vrot.lane.b32.xlu0 %v4353, 64
        %v4429 = vpop.permute.xlu0 %4428
        %4430 = vrot.lane.b32.xlu0 %v4356, 64
        %v4431 = vpop.permute.xlu0 %4430
        %4432 = vrot.lane.b32.xlu0 %v4358, 64
        %v4433 = vpop.permute.xlu0 %4432
        %4434 = vrot.lane.b32.xlu0 %v4361, 64
        %v4435 = vpop.permute.xlu0 %4434
        %4436 = vrot.lane.b32.xlu0 %v4363, 64
        %v4437 = vpop.permute.xlu0 %4436
        %4438 = vrot.lane.b32.xlu0 %v4366, 64
        %v4439 = vpop.permute.xlu0 %4438
        %4440 = vrot.lane.b32.xlu0 %v4368, 64
        %v4441 = vpop.permute.xlu0 %4440
        %4442 = vrot.lane.b32.xlu0 %v4371, 64
        %v4443 = vpop.permute.xlu0 %4442
        %4444 = vrot.lane.b32.xlu0 %v4373, 64
        %v4445 = vpop.permute.xlu0 %4444
        %4446 = vrot.lane.b32.xlu0 %v4376, 64
        %v4447 = vpop.permute.xlu0 %4446
        %4448 = vrot.lane.b32.xlu0 %v4378, 64
        %v4449 = vpop.permute.xlu0 %4448
        %4450 = vrot.lane.b32.xlu0 %v4381, 64
        %v4451 = vpop.permute.xlu0 %4450
        %4452 = vrot.lane.b32.xlu0 %v4383, 64
        %v4453 = vpop.permute.xlu0 %4452
        %4454 = vrot.lane.b32.xlu0 %v4386, 64
        %v4455 = vpop.permute.xlu0 %4454
        %4456 = vrot.lane.b32.xlu0 %v4388, 64
        %v4457 = vpop.permute.xlu0 %4456
        %4458 = vrot.lane.b32.xlu0 %v4391, 64
        %v4459 = vpop.permute.xlu0 %4458
        %4460 = vrot.lane.b32.xlu0 %v4393, 64
        %v4461 = vpop.permute.xlu0 %4460
        %4462 = vrot.lane.b32.xlu0 %v4396, 64
        %v4463 = vpop.permute.xlu0 %4462
        %4464 = vrot.lane.b32.xlu0 %v4398, 64
        %v4465 = vpop.permute.xlu0 %4464
        %4466 = vrot.lane.b32.xlu0 %v4401, 64
        %v4467 = vpop.permute.xlu0 %4466
        %4468 = vrot.lane.b32.xlu0 %v4403, 64
        %v4469 = vpop.permute.xlu0 %4468
        %4470 = vrot.lane.b32.xlu0 %v4406, 64
        %v4471 = vpop.permute.xlu0 %4470
        %4472 = vrot.lane.b32.xlu0 %v4408, 64
        %v4473 = vpop.permute.xlu0 %4472
        %4474 = vrot.lane.b32.xlu0 %v4411, 64
        %v4475 = vpop.permute.xlu0 %4474
        %4476 = vrot.lane.b32.xlu0 %v4413, 64
        %v4477 = vpop.permute.xlu0 %4476
        %v4510 = vrot.slane %v4238, 2
        %v4511 = vrot.slane %v4239, 2
        %v4512 = vsel %vm725, %v4510, %v4511
        %v4513 = vrot.slane %v4240, 2
        %v4514 = vsel %vm725, %v4511, %v4513
        %v4515 = vrot.slane %v4241, 2
        %v4516 = vrot.slane %v4242, 2
        %v4517 = vsel %vm725, %v4515, %v4516
        %v4518 = vrot.slane %v4243, 2
        %v4519 = vsel %vm725, %v4516, %v4518
        %v4520 = vrot.slane %v4244, 2
        %v4521 = vrot.slane %v4245, 2
        %v4522 = vsel %vm725, %v4520, %v4521
        %v4523 = vrot.slane %v4246, 2
        %v4524 = vsel %vm725, %v4521, %v4523
        %v4525 = vrot.slane %v4247, 2
        %v4526 = vrot.slane %v4248, 2
        %v4527 = vsel %vm725, %v4525, %v4526
        %v4528 = vrot.slane %v4249, 2
        %v4529 = vsel %vm725, %v4526, %v4528
        %v4530 = vrot.slane %v4250, 2
        %v4531 = vrot.slane %v4251, 2
        %v4532 = vsel %vm725, %v4530, %v4531
        %v4533 = vrot.slane %v4252, 2
        %v4534 = vsel %vm725, %v4531, %v4533
        %v4535 = vrot.slane %v4253, 2
        %v4536 = vrot.slane %v4254, 2
        %v4537 = vsel %vm725, %v4535, %v4536
        %v4538 = vrot.slane %v4255, 2
        %v4539 = vsel %vm725, %v4536, %v4538
        %v4540 = vrot.slane %v4256, 2
        %v4541 = vrot.slane %v4257, 2
        %v4542 = vsel %vm725, %v4540, %v4541
        %v4543 = vrot.slane %v4258, 2
        %v4544 = vsel %vm725, %v4541, %v4543
        %v4545 = vrot.slane %v4259, 2
        %v4546 = vrot.slane %v4260, 2
        %v4547 = vsel %vm725, %v4545, %v4546
        %v4548 = vrot.slane %v4261, 2
        %v4549 = vsel %vm725, %v4546, %v4548
        %v4550 = vrot.slane %v4262, 2
        %v4551 = vrot.slane %v4263, 2
        %v4552 = vsel %vm725, %v4550, %v4551
        %v4553 = vrot.slane %v4264, 2
        %v4554 = vsel %vm725, %v4551, %v4553
        %v4555 = vrot.slane %v4265, 2
        %v4556 = vrot.slane %v4266, 2
        %v4557 = vsel %vm725, %v4555, %v4556
        %v4558 = vrot.slane %v4267, 2
        %v4559 = vsel %vm725, %v4556, %v4558
        %v4560 = vrot.slane %v4268, 2
        %v4561 = vrot.slane %v4269, 2
        %v4562 = vsel %vm725, %v4560, %v4561
        %v4563 = vrot.slane %v4270, 2
        %v4564 = vsel %vm725, %v4561, %v4563
        %v4565 = vrot.slane %v4271, 2
        %v4566 = vrot.slane %v4272, 2
        %v4567 = vsel %vm725, %v4565, %v4566
        %v4568 = vrot.slane %v4273, 2
        %v4569 = vsel %vm725, %v4566, %v4568
        %v4570 = vrot.slane %v4274, 2
        %v4571 = vrot.slane %v4275, 2
        %v4572 = vsel %vm725, %v4570, %v4571
        %v4573 = vrot.slane %v4276, 2
        %v4574 = vsel %vm725, %v4571, %v4573
        %v4575 = vrot.slane %v4277, 2
        %v4576 = vrot.slane %v4278, 2
        %v4577 = vsel %vm725, %v4575, %v4576
        %v4578 = vrot.slane %v4279, 2
        %v4579 = vsel %vm725, %v4576, %v4578
        %v4580 = vrot.slane %v4280, 2
        %v4581 = vrot.slane %v4281, 2
        %v4582 = vsel %vm725, %v4580, %v4581
        %v4583 = vrot.slane %v4282, 2
        %v4584 = vsel %vm725, %v4581, %v4583
        %v4585 = vrot.slane %v4283, 2
        %v4586 = vrot.slane %v4284, 2
        %v4587 = vsel %vm725, %v4585, %v4586
        %v4588 = vrot.slane %v4285, 2
        %v4589 = vsel %vm725, %v4586, %v4588
        %v4590 = vsel %vm363, %v4238, %v4415
        %v4591 = vsel %vm363, %v4239, %v4417
        %v4592 = vsel %vm363, %v4241, %v4419
        %v4593 = vsel %vm363, %v4242, %v4421
        %v4594 = vsel %vm363, %v4244, %v4423
        %v4595 = vsel %vm363, %v4245, %v4425
        %v4596 = vsel %vm363, %v4247, %v4427
        %v4597 = vsel %vm363, %v4248, %v4429
        %v4598 = vsel %vm363, %v4250, %v4431
        %v4599 = vsel %vm363, %v4251, %v4433
        %v4600 = vsel %vm363, %v4253, %v4435
        %v4601 = vsel %vm363, %v4254, %v4437
        %v4602 = vsel %vm363, %v4256, %v4439
        %v4603 = vsel %vm363, %v4257, %v4441
        %v4604 = vsel %vm363, %v4259, %v4443
        %v4605 = vsel %vm363, %v4260, %v4445
        %v4606 = vsel %vm363, %v4262, %v4447
        %v4607 = vsel %vm363, %v4263, %v4449
        %v4608 = vsel %vm363, %v4265, %v4451
        %v4609 = vsel %vm363, %v4266, %v4453
        %v4610 = vsel %vm363, %v4268, %v4455
        %v4611 = vsel %vm363, %v4269, %v4457
        %v4612 = vsel %vm363, %v4271, %v4459
        %v4613 = vsel %vm363, %v4272, %v4461
        %v4614 = vsel %vm363, %v4274, %v4463
        %v4615 = vsel %vm363, %v4275, %v4465
        %v4616 = vsel %vm363, %v4277, %v4467
        %v4617 = vsel %vm363, %v4278, %v4469
        %v4618 = vsel %vm363, %v4280, %v4471
        %v4619 = vsel %vm363, %v4281, %v4473
        %v4620 = vsel %vm363, %v4283, %v4475
        %v4621 = vsel %vm363, %v4284, %v4477
        %s4622 = scalar_lea.vmem %s3, 384
        %v4623 = vld [vmem:[%s4622] sm:$0xff]
        %v4624 = vld [vmem:[%s4622 + $0x8] sm:$0xff]
        %v4625 = vld [vmem:[%s4622 + $0x10] sm:$0xff]
        %v4626 = vld [vmem:[%s4622 + $0x18] sm:$0xff]
        %v4627 = vld [vmem:[%s4622 + $0x20] sm:$0xff]
        %v4628 = vld [vmem:[%s4622 + $0x28] sm:$0xff]
        %v4629 = vld [vmem:[%s4622 + $0x30] sm:$0xff]
        %v4630 = vld [vmem:[%s4622 + $0x38] sm:$0xff]
        %v4631 = vld [vmem:[%s4622 + $0x40] sm:$0xff]
        %v4632 = vld [vmem:[%s4622 + $0x48] sm:$0xff]
        %v4633 = vld [vmem:[%s4622 + $0x50] sm:$0xff]
        %v4634 = vld [vmem:[%s4622 + $0x58] sm:$0xff]
        %v4635 = vld [vmem:[%s4622 + $0x60] sm:$0xff]
        %v4636 = vld [vmem:[%s4622 + $0x68] sm:$0xff]
        %v4637 = vld [vmem:[%s4622 + $0x70] sm:$0xff]
        %v4638 = vld [vmem:[%s4622 + $0x78] sm:$0xff]
        %v4639 = vld [vmem:[%s4622 + $0x80] sm:$0xff]
        %v4640 = vld [vmem:[%s4622 + $0x88] sm:$0xff]
        %v4641 = vld [vmem:[%s4622 + $0x90] sm:$0xff]
        %v4642 = vld [vmem:[%s4622 + $0x98] sm:$0xff]
        %v4643 = vld [vmem:[%s4622 + $0xa0] sm:$0xff]
        %v4644 = vld [vmem:[%s4622 + $0xa8] sm:$0xff]
        %v4645 = vld [vmem:[%s4622 + $0xb0] sm:$0xff]
        %v4646 = vld [vmem:[%s4622 + $0xb8] sm:$0xff]
        %v4647 = vsel %vm363, %v4512, 0
        %v4649 = vsel %vm363, %v4514, 0
        %v4651 = vsel %vm363, %v4517, 0
        %v4653 = vsel %vm363, %v4519, 0
        %v4655 = vsel %vm363, %v4522, 0
        %v4657 = vsel %vm363, %v4524, 0
        %v4659 = vsel %vm363, %v4527, 0
        %v4661 = vsel %vm363, %v4529, 0
        %v4663 = vsel %vm363, %v4532, 0
        %v4665 = vsel %vm363, %v4534, 0
        %v4667 = vsel %vm363, %v4537, 0
        %v4669 = vsel %vm363, %v4539, 0
        %v4671 = vsel %vm363, %v4542, 0
        %v4673 = vsel %vm363, %v4544, 0
        %v4675 = vsel %vm363, %v4547, 0
        %v4677 = vsel %vm363, %v4549, 0
        %v4679 = vsel %vm363, %v4552, 0
        %v4681 = vsel %vm363, %v4554, 0
        %v4683 = vsel %vm363, %v4557, 0
        %v4685 = vsel %vm363, %v4559, 0
        %v4687 = vsel %vm363, %v4562, 0
        %v4689 = vsel %vm363, %v4564, 0
        %v4691 = vsel %vm363, %v4567, 0
        %v4693 = vsel %vm363, %v4569, 0
        %v4695 = vsel %vm363, %v4572, 0
        %v4697 = vsel %vm363, %v4574, 0
        %v4699 = vsel %vm363, %v4577, 0
        %v4701 = vsel %vm363, %v4579, 0
        %v4703 = vsel %vm363, %v4582, 0
        %v4705 = vsel %vm363, %v4584, 0
        %v4707 = vsel %vm363, %v4587, 0
        %v4709 = vsel %vm363, %v4589, 0
        %4711 = vmatprep.subr.mxu0 0.0
        %4712 = vmatpush1.msra.mxu0 %v4623
        %4713 = vmatprep.subr.mxu0 0.0
        %4714 = vmatpush1.msra.mxu0 %v4624
        %4715 = vmatprep.subr.mxu0 0.0
        %4716 = vmatpush1.msra.mxu0 %v4625
        %4717 = vmatprep.subr.mxu0 0.0
        %4718 = vmatpush1.msra.mxu0 %v4626
        %4719 = vmatprep.subr.mxu0 0.0
        %4720 = vmatpush1.msra.mxu0 %v4627
        %4721 = vmatprep.subr.mxu0 0.0
        %4722 = vmatpush1.msra.mxu0 %v4628
        %4723 = vmatprep.subr.mxu0 0.0
        %4724 = vmatpush1.msra.mxu0 %v4629
        %4725 = vmatprep.subr.mxu0 0.0
        %4726 = vmatpush1.msra.mxu0 %v4630
        %4727 = vmatprep.subr.mxu0 0.0
        %4728 = vmatpush1.msra.mxu0 %v4631
        %4729 = vmatprep.subr.mxu0 0.0
        %4730 = vmatpush1.msra.mxu0 %v4632
        %4731 = vmatprep.subr.mxu0 0.0
        %4732 = vmatpush1.msra.mxu0 %v4633
        %4733 = vmatprep.subr.mxu0 0.0
        %4734 = vmatpush1.msra.mxu0 %v4634
        %4735 = vmatprep.subr.mxu0 0.0
        %4736 = vmatpush1.msra.mxu0 %v4635
        %4737 = vmatprep.subr.mxu0 0.0
        %4738 = vmatpush1.msra.mxu0 %v4636
        %4739 = vmatprep.subr.mxu0 0.0
        %4740 = vmatpush1.msra.mxu0 %v4637
        %4741 = vmatprep.subr.mxu0 0.0
        %4742 = vmatpush1.msra.mxu0 %v4638
        %4743 = vmatprep.subr.mxu0 0.0
        %4744 = vmatpush1.msra.mxu0 %v4639
        %4745 = vmatprep.subr.mxu0 0.0
        %4746 = vmatpush1.msra.mxu0 %v4640
        %4747 = vmatprep.subr.mxu0 0.0
        %4748 = vmatpush1.msra.mxu0 %v4641
        %4749 = vmatprep.subr.mxu0 0.0
        %4750 = vmatpush1.msra.mxu0 %v4642
        %4751 = vmatprep.subr.mxu0 0.0
        %4752 = vmatpush1.msra.mxu0 %v4643
        %4753 = vmatprep.subr.mxu0 0.0
        %4754 = vmatpush1.msra.mxu0 %v4644
        %4755 = vmatprep.subr.mxu0 0.0
        %4756 = vmatpush1.msra.mxu0 %v4645
        %4757 = vmatprep.subr.mxu0 0.0
        %4758 = vmatpush1.msra.mxu0 %v4646
        %4759 = vmatprep.subr.mxu0 0.0
        %4760 = vmatpush1.msra.mxu0 0.0
        %4761 = vmatprep.subr.mxu0 0.0
        %4762 = vmatpush1.msra.mxu0 0.0
        %4763 = vmatprep.subr.mxu0 0.0
        %4764 = vmatpush1.msra.mxu0 0.0
        %4765 = vmatprep.subr.mxu0 0.0
        %4766 = vmatpush1.msra.mxu0 0.0
        %4767 = vmatprep.subr.mxu0 0.0
        %4768 = vmatpush1.msra.mxu0 0.0
        %4769 = vmatprep.subr.mxu0 0.0
        %4770 = vmatpush1.msra.mxu0 0.0
        %4771 = vmatprep.subr.mxu0 0.0
        %4772 = vmatpush1.msra.mxu0 0.0
        %4773 = vmatprep.subr.mxu0 0.0
        %4774 = vmatpush1.msra.mxu0 0.0
        %4775 = vmatprep.mubr.f32.mxu0 %v4647
        %4776 = vmatmul.mubr.f32.gmra.mrb[0].mxu0 %v4590
        %v4777 = vpop.f32.mrb[0].mxu0
        %v4778 = vadd.f32 0.0, %v4777
        %v4779 = vpop.f32.mrb[0].mxu0
        %4780 = vmatprep.mubr.f32.mxu0 %v4649
        %4781 = vmatmul.mubr.f32.gmra.mrb[0].mxu0 %v4591
        %v4782 = vpop.f32.mrb[0].mxu0
        %v4783 = vadd.f32 0.0, %v4782
        %v4784 = vpop.f32.mrb[0].mxu0
        %4785 = vmatprep.mubr.f32.mxu0 %v4651
        %4786 = vmatmul.mubr.f32.gmra.mrb[0].mxu0 %v4592
        %v4787 = vpop.f32.mrb[0].mxu0
        %v4788 = vadd.f32 0.0, %v4787
        %v4789 = vpop.f32.mrb[0].mxu0
        %4790 = vmatprep.mubr.f32.mxu0 %v4653
        %4791 = vmatmul.mubr.f32.gmra.mrb[0].mxu0 %v4593
        %v4792 = vpop.f32.mrb[0].mxu0
        %v4793 = vadd.f32 0.0, %v4792
        %v4794 = vpop.f32.mrb[0].mxu0
        %4795 = vmatprep.mubr.f32.mxu0 %v4655
        %4796 = vmatmul.mubr.f32.gmra.mrb[0].mxu0 %v4594
        %v4797 = vpop.f32.mrb[0].mxu0
        %v4798 = vadd.f32 0.0, %v4797
        %v4799 = vpop.f32.mrb[0].mxu0
        %4800 = vmatprep.mubr.f32.mxu0 %v4657
        %4801 = vmatmul.mubr.f32.gmra.mrb[0].mxu0 %v4595
        %v4802 = vpop.f32.mrb[0].mxu0
        %v4803 = vadd.f32 0.0, %v4802
        %v4804 = vpop.f32.mrb[0].mxu0
        %4805 = vmatprep.mubr.f32.mxu0 %v4659
        %4806 = vmatmul.mubr.f32.gmra.mrb[0].mxu0 %v4596
        %v4807 = vpop.f32.mrb[0].mxu0
        %v4808 = vadd.f32 0.0, %v4807
        %v4809 = vpop.f32.mrb[0].mxu0
        %4810 = vmatprep.mubr.f32.mxu0 %v4661
        %4811 = vmatmul.mubr.f32.gmra.mrb[0].mxu0 %v4597
        %v4812 = vpop.f32.mrb[0].mxu0
        %v4813 = vadd.f32 0.0, %v4812
        %v4814 = vpop.f32.mrb[0].mxu0
        %4815 = vmatprep.mubr.f32.mxu0 %v4663
        %4816 = vmatmul.mubr.f32.gmra.mrb[0].mxu0 %v4598
        %v4817 = vpop.f32.mrb[0].mxu0
        %v4818 = vadd.f32 0.0, %v4817
        %v4819 = vpop.f32.mrb[0].mxu0
        %4820 = vmatprep.mubr.f32.mxu0 %v4665
        %4821 = vmatmul.mubr.f32.gmra.mrb[0].mxu0 %v4599
        %v4822 = vpop.f32.mrb[0].mxu0
        %v4823 = vadd.f32 0.0, %v4822
        %v4824 = vpop.f32.mrb[0].mxu0
        %4825 = vmatprep.mubr.f32.mxu0 %v4667
        %4826 = vmatmul.mubr.f32.gmra.mrb[0].mxu0 %v4600
        %v4827 = vpop.f32.mrb[0].mxu0
        %v4828 = vadd.f32 0.0, %v4827
        %v4829 = vpop.f32.mrb[0].mxu0
        %4830 = vmatprep.mubr.f32.mxu0 %v4669
        %4831 = vmatmul.mubr.f32.gmra.mrb[0].mxu0 %v4601
        %v4832 = vpop.f32.mrb[0].mxu0
        %v4833 = vadd.f32 0.0, %v4832
        %v4834 = vpop.f32.mrb[0].mxu0
        %4835 = vmatprep.mubr.f32.mxu0 %v4671
        %4836 = vmatmul.mubr.f32.gmra.mrb[0].mxu0 %v4602
        %v4837 = vpop.f32.mrb[0].mxu0
        %v4838 = vadd.f32 0.0, %v4837
        %v4839 = vpop.f32.mrb[0].mxu0
        %4840 = vmatprep.mubr.f32.mxu0 %v4673
        %4841 = vmatmul.mubr.f32.gmra.mrb[0].mxu0 %v4603
        %v4842 = vpop.f32.mrb[0].mxu0
        %v4843 = vadd.f32 0.0, %v4842
        %v4844 = vpop.f32.mrb[0].mxu0
        %4845 = vmatprep.mubr.f32.mxu0 %v4675
        %4846 = vmatmul.mubr.f32.gmra.mrb[0].mxu0 %v4604
        %v4847 = vpop.f32.mrb[0].mxu0
        %v4848 = vadd.f32 0.0, %v4847
        %v4849 = vpop.f32.mrb[0].mxu0
        %4850 = vmatprep.mubr.f32.mxu0 %v4677
        %4851 = vmatmul.mubr.f32.gmra.mrb[0].mxu0 %v4605
        %v4852 = vpop.f32.mrb[0].mxu0
        %v4853 = vadd.f32 0.0, %v4852
        %v4854 = vpop.f32.mrb[0].mxu0
        %4855 = vmatprep.mubr.f32.mxu0 %v4679
        %4856 = vmatmul.mubr.f32.gmra.mrb[0].mxu0 %v4606
        %v4857 = vpop.f32.mrb[0].mxu0
        %v4858 = vadd.f32 0.0, %v4857
        %v4859 = vpop.f32.mrb[0].mxu0
        %4860 = vmatprep.mubr.f32.mxu0 %v4681
        %4861 = vmatmul.mubr.f32.gmra.mrb[0].mxu0 %v4607
        %v4862 = vpop.f32.mrb[0].mxu0
        %v4863 = vadd.f32 0.0, %v4862
        %v4864 = vpop.f32.mrb[0].mxu0
        %4865 = vmatprep.mubr.f32.mxu0 %v4683
        %4866 = vmatmul.mubr.f32.gmra.mrb[0].mxu0 %v4608
        %v4867 = vpop.f32.mrb[0].mxu0
        %v4868 = vadd.f32 0.0, %v4867
        %v4869 = vpop.f32.mrb[0].mxu0
        %4870 = vmatprep.mubr.f32.mxu0 %v4685
        %4871 = vmatmul.mubr.f32.gmra.mrb[0].mxu0 %v4609
        %v4872 = vpop.f32.mrb[0].mxu0
        %v4873 = vadd.f32 0.0, %v4872
        %v4874 = vpop.f32.mrb[0].mxu0
        %4875 = vmatprep.mubr.f32.mxu0 %v4687
        %4876 = vmatmul.mubr.f32.gmra.mrb[0].mxu0 %v4610
        %v4877 = vpop.f32.mrb[0].mxu0
        %v4878 = vadd.f32 0.0, %v4877
        %v4879 = vpop.f32.mrb[0].mxu0
        %4880 = vmatprep.mubr.f32.mxu0 %v4689
        %4881 = vmatmul.mubr.f32.gmra.mrb[0].mxu0 %v4611
        %v4882 = vpop.f32.mrb[0].mxu0
        %v4883 = vadd.f32 0.0, %v4882
        %v4884 = vpop.f32.mrb[0].mxu0
        %4885 = vmatprep.mubr.f32.mxu0 %v4691
        %4886 = vmatmul.mubr.f32.gmra.mrb[0].mxu0 %v4612
        %v4887 = vpop.f32.mrb[0].mxu0
        %v4888 = vadd.f32 0.0, %v4887
        %v4889 = vpop.f32.mrb[0].mxu0
        %4890 = vmatprep.mubr.f32.mxu0 %v4693
        %4891 = vmatmul.mubr.f32.gmra.mrb[0].mxu0 %v4613
        %v4892 = vpop.f32.mrb[0].mxu0
        %v4893 = vadd.f32 0.0, %v4892
        %v4894 = vpop.f32.mrb[0].mxu0
        %4895 = vmatprep.mubr.f32.mxu0 %v4695
        %4896 = vmatmul.mubr.f32.gmra.mrb[0].mxu0 %v4614
        %v4897 = vpop.f32.mrb[0].mxu0
        %v4898 = vadd.f32 0.0, %v4897
        %v4899 = vpop.f32.mrb[0].mxu0
        %4900 = vmatprep.mubr.f32.mxu0 %v4697
        %4901 = vmatmul.mubr.f32.gmra.mrb[0].mxu0 %v4615
        %v4902 = vpop.f32.mrb[0].mxu0
        %v4903 = vadd.f32 0.0, %v4902
        %v4904 = vpop.f32.mrb[0].mxu0
        %4905 = vmatprep.mubr.f32.mxu0 %v4699
        %4906 = vmatmul.mubr.f32.gmra.mrb[0].mxu0 %v4616
        %v4907 = vpop.f32.mrb[0].mxu0
        %v4908 = vadd.f32 0.0, %v4907
        %v4909 = vpop.f32.mrb[0].mxu0
        %4910 = vmatprep.mubr.f32.mxu0 %v4701
        %4911 = vmatmul.mubr.f32.gmra.mrb[0].mxu0 %v4617
        %v4912 = vpop.f32.mrb[0].mxu0
        %v4913 = vadd.f32 0.0, %v4912
        %v4914 = vpop.f32.mrb[0].mxu0
        %4915 = vmatprep.mubr.f32.mxu0 %v4703
        %4916 = vmatmul.mubr.f32.gmra.mrb[0].mxu0 %v4618
        %v4917 = vpop.f32.mrb[0].mxu0
        %v4918 = vadd.f32 0.0, %v4917
        %v4919 = vpop.f32.mrb[0].mxu0
        %4920 = vmatprep.mubr.f32.mxu0 %v4705
        %4921 = vmatmul.mubr.f32.gmra.mrb[0].mxu0 %v4619
        %v4922 = vpop.f32.mrb[0].mxu0
        %v4923 = vadd.f32 0.0, %v4922
        %v4924 = vpop.f32.mrb[0].mxu0
        %4925 = vmatprep.mubr.f32.mxu0 %v4707
        %4926 = vmatmul.mubr.f32.gmra.mrb[0].mxu0 %v4620
        %v4927 = vpop.f32.mrb[0].mxu0
        %v4928 = vadd.f32 0.0, %v4927
        %v4929 = vpop.f32.mrb[0].mxu0
        %4930 = vmatprep.mubr.f32.mxu0 %v4709
        %4931 = vmatmul.mubr.f32.gmra.mrb[0].mxu0 %v4621
        %v4932 = vpop.f32.mrb[0].mxu0
        %v4933 = vadd.f32 0.0, %v4932
        %v4934 = vpop.f32.mrb[0].mxu0
        %4935 = vdwg.mxu0
        %v4936 = vadd.f32 %v4080, %v4778
        %v4937 = vadd.f32 %v4085, %v4783
        %v4938 = vadd.f32 %v4090, %v4788
        %v4939 = vadd.f32 %v4095, %v4793
        %v4940 = vadd.f32 %v4100, %v4798
        %v4941 = vadd.f32 %v4105, %v4803
        %v4942 = vadd.f32 %v4110, %v4808
        %v4943 = vadd.f32 %v4115, %v4813
        %v4944 = vadd.f32 %v4120, %v4818
        %v4945 = vadd.f32 %v4125, %v4823
        %v4946 = vadd.f32 %v4130, %v4828
        %v4947 = vadd.f32 %v4135, %v4833
        %v4948 = vadd.f32 %v4140, %v4838
        %v4949 = vadd.f32 %v4145, %v4843
        %v4950 = vadd.f32 %v4150, %v4848
        %v4951 = vadd.f32 %v4155, %v4853
        %v4952 = vadd.f32 %v4160, %v4858
        %v4953 = vadd.f32 %v4165, %v4863
        %v4954 = vadd.f32 %v4170, %v4868
        %v4955 = vadd.f32 %v4175, %v4873
        %v4956 = vadd.f32 %v4180, %v4878
        %v4957 = vadd.f32 %v4185, %v4883
        %v4958 = vadd.f32 %v4190, %v4888
        %v4959 = vadd.f32 %v4195, %v4893
        %v4960 = vadd.f32 %v4200, %v4898
        %v4961 = vadd.f32 %v4205, %v4903
        %v4962 = vadd.f32 %v4210, %v4908
        %v4963 = vadd.f32 %v4215, %v4913
        %v4964 = vadd.f32 %v4220, %v4918
        %v4965 = vadd.f32 %v4225, %v4923
        %v4966 = vadd.f32 %v4230, %v4928
        %v4967 = vadd.f32 %v4235, %v4933
        %v4968 = vld [vmem:[%s4] sm:$0x1]
        %v4970 = vlaneseq
        %v4971 = vshrl.u32 %v4970, 7
        %v4972 = vsub.s32 0, %v4971
        %v4973 = vrot.slane %v4968, %v4972
        %v4975 = vadd.f32 %v4936, %v4973
        %v4976 = vadd.f32 %v4937, %v4973
        %v4977 = vadd.f32 %v4938, %v4973
        %v4978 = vadd.f32 %v4939, %v4973
        %v4979 = vadd.f32 %v4940, %v4973
        %v4980 = vadd.f32 %v4941, %v4973
        %v4981 = vadd.f32 %v4942, %v4973
        %v4982 = vadd.f32 %v4943, %v4973
        %v4983 = vadd.f32 %v4944, %v4973
        %v4984 = vadd.f32 %v4945, %v4973
        %v4985 = vadd.f32 %v4946, %v4973
        %v4986 = vadd.f32 %v4947, %v4973
        %v4987 = vadd.f32 %v4948, %v4973
        %v4988 = vadd.f32 %v4949, %v4973
        %v4989 = vadd.f32 %v4950, %v4973
        %v4990 = vadd.f32 %v4951, %v4973
        %v4991 = vadd.f32 %v4952, %v4973
        %v4992 = vadd.f32 %v4953, %v4973
        %v4993 = vadd.f32 %v4954, %v4973
        %v4994 = vadd.f32 %v4955, %v4973
        %v4995 = vadd.f32 %v4956, %v4973
        %v4996 = vadd.f32 %v4957, %v4973
        %v4997 = vadd.f32 %v4958, %v4973
        %v4998 = vadd.f32 %v4959, %v4973
        %v4999 = vadd.f32 %v4960, %v4973
        %v5000 = vadd.f32 %v4961, %v4973
        %v5001 = vadd.f32 %v4962, %v4973
        %v5002 = vadd.f32 %v4963, %v4973
        %v5003 = vadd.f32 %v4964, %v4973
        %v5004 = vadd.f32 %v4965, %v4973
        %v5005 = vadd.f32 %v4966, %v4973
        %v5006 = vadd.f32 %v4967, %v4973
        %vm5007 = vcmp.ge.f32.partialorder %v4975, 0.0
        %vm5008 = vcmp.ge.f32.partialorder %v4976, 0.0
        %vm5009 = vcmp.ge.f32.partialorder %v4977, 0.0
        %vm5010 = vcmp.ge.f32.partialorder %v4978, 0.0
        %vm5011 = vcmp.ge.f32.partialorder %v4979, 0.0
        %vm5012 = vcmp.ge.f32.partialorder %v4980, 0.0
        %vm5013 = vcmp.ge.f32.partialorder %v4981, 0.0
        %vm5014 = vcmp.ge.f32.partialorder %v4982, 0.0
        %vm5015 = vcmp.ge.f32.partialorder %v4983, 0.0
        %vm5016 = vcmp.ge.f32.partialorder %v4984, 0.0
        %vm5017 = vcmp.ge.f32.partialorder %v4985, 0.0
        %vm5018 = vcmp.ge.f32.partialorder %v4986, 0.0
        %vm5019 = vcmp.ge.f32.partialorder %v4987, 0.0
        %vm5020 = vcmp.ge.f32.partialorder %v4988, 0.0
        %vm5021 = vcmp.ge.f32.partialorder %v4989, 0.0
        %vm5022 = vcmp.ge.f32.partialorder %v4990, 0.0
        %vm5023 = vcmp.ge.f32.partialorder %v4991, 0.0
        %vm5024 = vcmp.ge.f32.partialorder %v4992, 0.0
        %vm5025 = vcmp.ge.f32.partialorder %v4993, 0.0
        %vm5026 = vcmp.ge.f32.partialorder %v4994, 0.0
        %vm5027 = vcmp.ge.f32.partialorder %v4995, 0.0
        %vm5028 = vcmp.ge.f32.partialorder %v4996, 0.0
        %vm5029 = vcmp.ge.f32.partialorder %v4997, 0.0
        %vm5030 = vcmp.ge.f32.partialorder %v4998, 0.0
        %vm5031 = vcmp.ge.f32.partialorder %v4999, 0.0
        %vm5032 = vcmp.ge.f32.partialorder %v5000, 0.0
        %vm5033 = vcmp.ge.f32.partialorder %v5001, 0.0
        %vm5034 = vcmp.ge.f32.partialorder %v5002, 0.0
        %vm5035 = vcmp.ge.f32.partialorder %v5003, 0.0
        %vm5036 = vcmp.ge.f32.partialorder %v5004, 0.0
        %vm5037 = vcmp.ge.f32.partialorder %v5005, 0.0
        %vm5038 = vcmp.ge.f32.partialorder %v5006, 0.0
        %v5039 = vmul.f32 %v4975, 0.2
        %v5040 = vmul.f32 %v4976, 0.2
        %v5041 = vmul.f32 %v4977, 0.2
        %v5042 = vmul.f32 %v4978, 0.2
        %v5043 = vmul.f32 %v4979, 0.2
        %v5044 = vmul.f32 %v4980, 0.2
        %v5045 = vmul.f32 %v4981, 0.2
        %v5046 = vmul.f32 %v4982, 0.2
        %v5047 = vmul.f32 %v4983, 0.2
        %v5048 = vmul.f32 %v4984, 0.2
        %v5049 = vmul.f32 %v4985, 0.2
        %v5050 = vmul.f32 %v4986, 0.2
        %v5051 = vmul.f32 %v4987, 0.2
        %v5052 = vmul.f32 %v4988, 0.2
        %v5053 = vmul.f32 %v4989, 0.2
        %v5054 = vmul.f32 %v4990, 0.2
        %v5055 = vmul.f32 %v4991, 0.2
        %v5056 = vmul.f32 %v4992, 0.2
        %v5057 = vmul.f32 %v4993, 0.2
        %v5058 = vmul.f32 %v4994, 0.2
        %v5059 = vmul.f32 %v4995, 0.2
        %v5060 = vmul.f32 %v4996, 0.2
        %v5061 = vmul.f32 %v4997, 0.2
        %v5062 = vmul.f32 %v4998, 0.2
        %v5063 = vmul.f32 %v4999, 0.2
        %v5064 = vmul.f32 %v5000, 0.2
        %v5065 = vmul.f32 %v5001, 0.2
        %v5066 = vmul.f32 %v5002, 0.2
        %v5067 = vmul.f32 %v5003, 0.2
        %v5068 = vmul.f32 %v5004, 0.2
        %v5069 = vmul.f32 %v5005, 0.2
        %v5070 = vmul.f32 %v5006, 0.2
        %v5071 = vsel %vm5007, %v4975, %v5039
        %v5072 = vsel %vm5008, %v4976, %v5040
        %v5073 = vsel %vm5009, %v4977, %v5041
        %v5074 = vsel %vm5010, %v4978, %v5042
        %v5075 = vsel %vm5011, %v4979, %v5043
        %v5076 = vsel %vm5012, %v4980, %v5044
        %v5077 = vsel %vm5013, %v4981, %v5045
        %v5078 = vsel %vm5014, %v4982, %v5046
        %v5079 = vsel %vm5015, %v4983, %v5047
        %v5080 = vsel %vm5016, %v4984, %v5048
        %v5081 = vsel %vm5017, %v4985, %v5049
        %v5082 = vsel %vm5018, %v4986, %v5050
        %v5083 = vsel %vm5019, %v4987, %v5051
        %v5084 = vsel %vm5020, %v4988, %v5052
        %v5085 = vsel %vm5021, %v4989, %v5053
        %v5086 = vsel %vm5022, %v4990, %v5054
        %v5087 = vsel %vm5023, %v4991, %v5055
        %v5088 = vsel %vm5024, %v4992, %v5056
        %v5089 = vsel %vm5025, %v4993, %v5057
        %v5090 = vsel %vm5026, %v4994, %v5058
        %v5091 = vsel %vm5027, %v4995, %v5059
        %v5092 = vsel %vm5028, %v4996, %v5060
        %v5093 = vsel %vm5029, %v4997, %v5061
        %v5094 = vsel %vm5030, %v4998, %v5062
        %v5095 = vsel %vm5031, %v4999, %v5063
        %v5096 = vsel %vm5032, %v5000, %v5064
        %v5097 = vsel %vm5033, %v5001, %v5065
        %v5098 = vsel %vm5034, %v5002, %v5066
        %v5099 = vsel %vm5035, %v5003, %v5067
        %v5100 = vsel %vm5036, %v5004, %v5068
        %v5101 = vsel %vm5037, %v5005, %v5069
        %v5102 = vsel %vm5038, %v5006, %v5070
        %v5103 = vsel %vm363, %v5071, 0.0
        %v5104 = vsel %vm363, %v5072, 0.0
        %v5105 = vadd.f32 %v5103, %v5104
        %v5106 = vsel %vm363, %v5073, 0.0
        %v5107 = vadd.f32 %v5105, %v5106
        %v5108 = vsel %vm363, %v5074, 0.0
        %v5109 = vadd.f32 %v5107, %v5108
        %v5110 = vsel %vm363, %v5075, 0.0
        %v5111 = vadd.f32 %v5109, %v5110
        %v5112 = vsel %vm363, %v5076, 0.0
        %v5113 = vadd.f32 %v5111, %v5112
        %v5114 = vsel %vm363, %v5077, 0.0
        %v5115 = vadd.f32 %v5113, %v5114
        %v5116 = vsel %vm363, %v5078, 0.0
        %v5117 = vadd.f32 %v5115, %v5116
        %v5118 = vsel %vm363, %v5079, 0.0
        %v5119 = vadd.f32 %v5117, %v5118
        %v5120 = vsel %vm363, %v5080, 0.0
        %v5121 = vadd.f32 %v5119, %v5120
        %v5122 = vsel %vm363, %v5081, 0.0
        %v5123 = vadd.f32 %v5121, %v5122
        %v5124 = vsel %vm363, %v5082, 0.0
        %v5125 = vadd.f32 %v5123, %v5124
        %v5126 = vsel %vm363, %v5083, 0.0
        %v5127 = vadd.f32 %v5125, %v5126
        %v5128 = vsel %vm363, %v5084, 0.0
        %v5129 = vadd.f32 %v5127, %v5128
        %v5130 = vsel %vm363, %v5085, 0.0
        %v5131 = vadd.f32 %v5129, %v5130
        %v5132 = vsel %vm363, %v5086, 0.0
        %v5133 = vadd.f32 %v5131, %v5132
        %v5134 = vsel %vm363, %v5087, 0.0
        %v5135 = vadd.f32 %v5133, %v5134
        %v5136 = vsel %vm363, %v5088, 0.0
        %v5137 = vadd.f32 %v5135, %v5136
        %v5138 = vsel %vm363, %v5089, 0.0
        %v5139 = vadd.f32 %v5137, %v5138
        %v5140 = vsel %vm363, %v5090, 0.0
        %v5141 = vadd.f32 %v5139, %v5140
        %v5142 = vsel %vm363, %v5091, 0.0
        %v5143 = vadd.f32 %v5141, %v5142
        %v5144 = vsel %vm363, %v5092, 0.0
        %v5145 = vadd.f32 %v5143, %v5144
        %v5146 = vsel %vm363, %v5093, 0.0
        %v5147 = vadd.f32 %v5145, %v5146
        %v5148 = vsel %vm363, %v5094, 0.0
        %v5149 = vadd.f32 %v5147, %v5148
        %v5150 = vsel %vm363, %v5095, 0.0
        %v5151 = vadd.f32 %v5149, %v5150
        %v5152 = vsel %vm363, %v5096, 0.0
        %v5153 = vadd.f32 %v5151, %v5152
        %v5154 = vsel %vm363, %v5097, 0.0
        %v5155 = vadd.f32 %v5153, %v5154
        %v5156 = vsel %vm363, %v5098, 0.0
        %v5157 = vadd.f32 %v5155, %v5156
        %v5158 = vsel %vm363, %v5099, 0.0
        %v5159 = vadd.f32 %v5157, %v5158
        %v5160 = vsel %vm363, %v5100, 0.0
        %v5161 = vadd.f32 %v5159, %v5160
        %v5162 = vsel %vm363, %v5101, 0.0
        %v5163 = vadd.f32 %v5161, %v5162
        %v5164 = vsel %vm363, %v5102, 0.0
        %v5165 = vadd.f32 %v5163, %v5164
        %v5166 = vrot.slane %v5165, 4
        %v5167 = vadd.f32 %v5165, %v5166
        %v5168 = vrot.slane %v5167, 2
        %v5169 = vadd.f32 %v5167, %v5168
        %v5170 = vrot.slane %v5169, 1
        %v5171 = vadd.f32 %v5169, %v5170
        %v5172 = vrcp.pop 256.0
        %v5173 = vmul.f32 %v5171, %v5172
        %v5174 = vld [vmem:[%s5] sm:$0xff]
        %v5175 = vld [vmem:[%s5 + $0x8] sm:$0xff]
        %v5176 = vld [vmem:[%s5 + $0x10] sm:$0xff]
        %v5177 = vld [vmem:[%s5 + $0x18] sm:$0xff]
        %v5178 = vld [vmem:[%s5 + $0x20] sm:$0xff]
        %v5179 = vld [vmem:[%s5 + $0x28] sm:$0xff]
        %v5180 = vld [vmem:[%s5 + $0x30] sm:$0xff]
        %v5181 = vld [vmem:[%s5 + $0x38] sm:$0xff]
        %v5182 = vld [vmem:[%s6] sm:$0x1]
        %v5184 = vsel %vm363, %v5173, 0
        %5186 = vmatprep.subr.mxu0 0.0
        %5187 = vmatpush1.msra.mxu0 %v5174
        %5188 = vmatprep.subr.mxu0 0.0
        %5189 = vmatpush1.msra.mxu0 %v5175
        %5190 = vmatprep.subr.mxu0 0.0
        %5191 = vmatpush1.msra.mxu0 %v5176
        %5192 = vmatprep.subr.mxu0 0.0
        %5193 = vmatpush1.msra.mxu0 %v5177
        %5194 = vmatprep.subr.mxu0 0.0
        %5195 = vmatpush1.msra.mxu0 %v5178
        %5196 = vmatprep.subr.mxu0 0.0
        %5197 = vmatpush1.msra.mxu0 %v5179
        %5198 = vmatprep.subr.mxu0 0.0
        %5199 = vmatpush1.msra.mxu0 %v5180
        %5200 = vmatprep.subr.mxu0 0.0
        %5201 = vmatpush1.msra.mxu0 %v5181
        %5202 = vmatprep.subr.mxu0 0.0
        %5203 = vmatpush1.msra.mxu0 0.0
        %5204 = vmatprep.subr.mxu0 0.0
        %5205 = vmatpush1.msra.mxu0 0.0
        %5206 = vmatprep.subr.mxu0 0.0
        %5207 = vmatpush1.msra.mxu0 0.0
        %5208 = vmatprep.subr.mxu0 0.0
        %5209 = vmatpush1.msra.mxu0 0.0
        %5210 = vmatprep.subr.mxu0 0.0
        %5211 = vmatpush1.msra.mxu0 0.0
        %5212 = vmatprep.subr.mxu0 0.0
        %5213 = vmatpush1.msra.mxu0 0.0
        %5214 = vmatprep.subr.mxu0 0.0
        %5215 = vmatpush1.msra.mxu0 0.0
        %5216 = vmatprep.subr.mxu0 0.0
        %5217 = vmatpush1.msra.mxu0 0.0
        %5218 = vmatprep.subr.mxu0 0.0
        %5219 = vmatpush1.msra.mxu0 0.0
        %5220 = vmatprep.subr.mxu0 0.0
        %5221 = vmatpush1.msra.mxu0 0.0
        %5222 = vmatprep.subr.mxu0 0.0
        %5223 = vmatpush1.msra.mxu0 0.0
        %5224 = vmatprep.subr.mxu0 0.0
        %5225 = vmatpush1.msra.mxu0 0.0
        %5226 = vmatprep.subr.mxu0 0.0
        %5227 = vmatpush1.msra.mxu0 0.0
        %5228 = vmatprep.subr.mxu0 0.0
        %5229 = vmatpush1.msra.mxu0 0.0
        %5230 = vmatprep.subr.mxu0 0.0
        %5231 = vmatpush1.msra.mxu0 0.0
        %5232 = vmatprep.subr.mxu0 0.0
        %5233 = vmatpush1.msra.mxu0 0.0
        %5234 = vmatprep.subr.mxu0 0.0
        %5235 = vmatpush1.msra.mxu0 0.0
        %5236 = vmatprep.subr.mxu0 0.0
        %5237 = vmatpush1.msra.mxu0 0.0
        %5238 = vmatprep.subr.mxu0 0.0
        %5239 = vmatpush1.msra.mxu0 0.0
        %5240 = vmatprep.subr.mxu0 0.0
        %5241 = vmatpush1.msra.mxu0 0.0
        %5242 = vmatprep.subr.mxu0 0.0
        %5243 = vmatpush1.msra.mxu0 0.0
        %5244 = vmatprep.subr.mxu0 0.0
        %5245 = vmatpush1.msra.mxu0 0.0
        %5246 = vmatprep.subr.mxu0 0.0
        %5247 = vmatpush1.msra.mxu0 0.0
        %5248 = vmatprep.subr.mxu0 0.0
        %5249 = vmatpush1.msra.mxu0 0.0
        %5250 = vmatprep.mubr.f32.mxu0 0.0
        %5251 = vmatmul.mubr.f32.gmra.mrb[0].mxu0 %v5184
        %v5252 = vpop.f32.mrb[0].mxu0
        %v5253 = vadd.f32 %v5182, %v5252
        %v5254 = vpop.f32.mrb[0].mxu0
        %5255 = vdwg.mxu0
        %v5256 = vmax.f32 %v5253, 0.0
        %v5257 = vld [vmem:[%s7] sm:$0xf]
        %v5258 = vld [vmem:[%s8] sm:$0x1]
        %vm5259 = vcmask 31744
        %v5261 = vsel %vm5259, %v5256, 0
        %vm5263 = vcmask 1043456
        %v5265 = vsel %vm5263, %v5257, 0
        %5267 = vmatprep.subr.mxu0 0.0
        %5268 = vmatpush1.msra.mxu0 %v5265
        %5269 = vmatprep.subr.mxu0 0.0
        %5270 = vmatpush1.msra.mxu0 0.0
        %5271 = vmatprep.subr.mxu0 0.0
        %5272 = vmatpush1.msra.mxu0 0.0
        %5273 = vmatprep.subr.mxu0 0.0
        %5274 = vmatpush1.msra.mxu0 0.0
        %5275 = vmatprep.subr.mxu0 0.0
        %5276 = vmatpush1.msra.mxu0 0.0
        %5277 = vmatprep.subr.mxu0 0.0
        %5278 = vmatpush1.msra.mxu0 0.0
        %5279 = vmatprep.subr.mxu0 0.0
        %5280 = vmatpush1.msra.mxu0 0.0
        %5281 = vmatprep.subr.mxu0 0.0
        %5282 = vmatpush1.msra.mxu0 0.0
        %5283 = vmatprep.subr.mxu0 0.0
        %5284 = vmatpush1.msra.mxu0 0.0
        %5285 = vmatprep.subr.mxu0 0.0
        %5286 = vmatpush1.msra.mxu0 0.0
        %5287 = vmatprep.subr.mxu0 0.0
        %5288 = vmatpush1.msra.mxu0 0.0
        %5289 = vmatprep.subr.mxu0 0.0
        %5290 = vmatpush1.msra.mxu0 0.0
        %5291 = vmatprep.subr.mxu0 0.0
        %5292 = vmatpush1.msra.mxu0 0.0
        %5293 = vmatprep.subr.mxu0 0.0
        %5294 = vmatpush1.msra.mxu0 0.0
        %5295 = vmatprep.subr.mxu0 0.0
        %5296 = vmatpush1.msra.mxu0 0.0
        %5297 = vmatprep.subr.mxu0 0.0
        %5298 = vmatpush1.msra.mxu0 0.0
        %5299 = vmatprep.subr.mxu0 0.0
        %5300 = vmatpush1.msra.mxu0 0.0
        %5301 = vmatprep.subr.mxu0 0.0
        %5302 = vmatpush1.msra.mxu0 0.0
        %5303 = vmatprep.subr.mxu0 0.0
        %5304 = vmatpush1.msra.mxu0 0.0
        %5305 = vmatprep.subr.mxu0 0.0
        %5306 = vmatpush1.msra.mxu0 0.0
        %5307 = vmatprep.subr.mxu0 0.0
        %5308 = vmatpush1.msra.mxu0 0.0
        %5309 = vmatprep.subr.mxu0 0.0
        %5310 = vmatpush1.msra.mxu0 0.0
        %5311 = vmatprep.subr.mxu0 0.0
        %5312 = vmatpush1.msra.mxu0 0.0
        %5313 = vmatprep.subr.mxu0 0.0
        %5314 = vmatpush1.msra.mxu0 0.0
        %5315 = vmatprep.subr.mxu0 0.0
        %5316 = vmatpush1.msra.mxu0 0.0
        %5317 = vmatprep.subr.mxu0 0.0
        %5318 = vmatpush1.msra.mxu0 0.0
        %5319 = vmatprep.subr.mxu0 0.0
        %5320 = vmatpush1.msra.mxu0 0.0
        %5321 = vmatprep.subr.mxu0 0.0
        %5322 = vmatpush1.msra.mxu0 0.0
        %5323 = vmatprep.subr.mxu0 0.0
        %5324 = vmatpush1.msra.mxu0 0.0
        %5325 = vmatprep.subr.mxu0 0.0
        %5326 = vmatpush1.msra.mxu0 0.0
        %5327 = vmatprep.subr.mxu0 0.0
        %5328 = vmatpush1.msra.mxu0 0.0
        %5329 = vmatprep.subr.mxu0 0.0
        %5330 = vmatpush1.msra.mxu0 0.0
        %5331 = vmatprep.mubr.f32.mxu0 0.0
        %5332 = vmatmul.mubr.f32.gmra.mrb[0].mxu0 %v5261
        %v5333 = vpop.f32.mrb[0].mxu0
        %v5334 = vadd.f32 %v5258, %v5333
        %v5335 = vpop.f32.mrb[0].mxu0
        %5336 = vdwg.mxu0
        %v5337 = vxor.u32 %v5334, 2147483648
        %v5338 = vmul.f32 %v5337, 1.442695
        %v5339 = vpow.pop %v5338
        %v5340 = vadd.f32 %v5339, 1.0
        %v5341 = vrcp.pop %v5340
        %v5342 = vmul.f32 1.0, %v5341
        %v5343 = vlaneseq
        %v5344 = vshrl.u32 %v5343, 7
        %v5345 = vsub.s32 0, %v5344
        %v5346 = vrot.slane %v5342, %v5345
        %v5347 = vmul.f32 %v5071, %v5346
        %v5348 = vmul.f32 %v5072, %v5346
        %v5349 = vmul.f32 %v5073, %v5346
        %v5350 = vmul.f32 %v5074, %v5346
        %v5351 = vmul.f32 %v5075, %v5346
        %v5352 = vmul.f32 %v5076, %v5346
        %v5353 = vmul.f32 %v5077, %v5346
        %v5354 = vmul.f32 %v5078, %v5346
        %v5355 = vmul.f32 %v5079, %v5346
        %v5356 = vmul.f32 %v5080, %v5346
        %v5357 = vmul.f32 %v5081, %v5346
        %v5358 = vmul.f32 %v5082, %v5346
        %v5359 = vmul.f32 %v5083, %v5346
        %v5360 = vmul.f32 %v5084, %v5346
        %v5361 = vmul.f32 %v5085, %v5346
        %v5362 = vmul.f32 %v5086, %v5346
        %v5363 = vmul.f32 %v5087, %v5346
        %v5364 = vmul.f32 %v5088, %v5346
        %v5365 = vmul.f32 %v5089, %v5346
        %v5366 = vmul.f32 %v5090, %v5346
        %v5367 = vmul.f32 %v5091, %v5346
        %v5368 = vmul.f32 %v5092, %v5346
        %v5369 = vmul.f32 %v5093, %v5346
        %v5370 = vmul.f32 %v5094, %v5346
        %v5371 = vmul.f32 %v5095, %v5346
        %v5372 = vmul.f32 %v5096, %v5346
        %v5373 = vmul.f32 %v5097, %v5346
        %v5374 = vmul.f32 %v5098, %v5346
        %v5375 = vmul.f32 %v5099, %v5346
        %v5376 = vmul.f32 %v5100, %v5346
        %v5377 = vmul.f32 %v5101, %v5346
        %v5378 = vmul.f32 %v5102, %v5346
        %v5379 = vadd.f32 %v5347, %v331
        %v5380 = vadd.f32 %v5348, %v332
        %v5381 = vadd.f32 %v5349, %v333
        %v5382 = vadd.f32 %v5350, %v334
        %v5383 = vadd.f32 %v5351, %v335
        %v5384 = vadd.f32 %v5352, %v336
        %v5385 = vadd.f32 %v5353, %v337
        %v5386 = vadd.f32 %v5354, %v338
        %v5387 = vadd.f32 %v5355, %v339
        %v5388 = vadd.f32 %v5356, %v340
        %v5389 = vadd.f32 %v5357, %v341
        %v5390 = vadd.f32 %v5358, %v342
        %v5391 = vadd.f32 %v5359, %v343
        %v5392 = vadd.f32 %v5360, %v344
        %v5393 = vadd.f32 %v5361, %v345
        %v5394 = vadd.f32 %v5362, %v346
        %v5395 = vadd.f32 %v5363, %v347
        %v5396 = vadd.f32 %v5364, %v348
        %v5397 = vadd.f32 %v5365, %v349
        %v5398 = vadd.f32 %v5366, %v350
        %v5399 = vadd.f32 %v5367, %v351
        %v5400 = vadd.f32 %v5368, %v352
        %v5401 = vadd.f32 %v5369, %v353
        %v5402 = vadd.f32 %v5370, %v354
        %v5403 = vadd.f32 %v5371, %v355
        %v5404 = vadd.f32 %v5372, %v356
        %v5405 = vadd.f32 %v5373, %v357
        %v5406 = vadd.f32 %v5374, %v358
        %v5407 = vadd.f32 %v5375, %v359
        %v5408 = vadd.f32 %v5376, %v360
        %v5409 = vadd.f32 %v5377, %v361
        %v5410 = vadd.f32 %v5378, %v362
        %5411 = vst.msk [vmem:[%s325] sm:$0xff] %vm363, %v5379
        %5412 = vst.msk [vmem:[%s325 + $0x8] sm:$0xff] %vm363, %v5380
        %5413 = vst.msk [vmem:[%s325 + $0x10] sm:$0xff] %vm363, %v5381
        %5414 = vst.msk [vmem:[%s325 + $0x18] sm:$0xff] %vm363, %v5382
        %5415 = vst.msk [vmem:[%s325 + $0x20] sm:$0xff] %vm363, %v5383
        %5416 = vst.msk [vmem:[%s325 + $0x28] sm:$0xff] %vm363, %v5384
        %5417 = vst.msk [vmem:[%s325 + $0x30] sm:$0xff] %vm363, %v5385
        %5418 = vst.msk [vmem:[%s325 + $0x38] sm:$0xff] %vm363, %v5386
        %5419 = vst.msk [vmem:[%s325 + $0x40] sm:$0xff] %vm363, %v5387
        %5420 = vst.msk [vmem:[%s325 + $0x48] sm:$0xff] %vm363, %v5388
        %5421 = vst.msk [vmem:[%s325 + $0x50] sm:$0xff] %vm363, %v5389
        %5422 = vst.msk [vmem:[%s325 + $0x58] sm:$0xff] %vm363, %v5390
        %5423 = vst.msk [vmem:[%s325 + $0x60] sm:$0xff] %vm363, %v5391
        %5424 = vst.msk [vmem:[%s325 + $0x68] sm:$0xff] %vm363, %v5392
        %5425 = vst.msk [vmem:[%s325 + $0x70] sm:$0xff] %vm363, %v5393
        %5426 = vst.msk [vmem:[%s325 + $0x78] sm:$0xff] %vm363, %v5394
        %5427 = vst.msk [vmem:[%s325 + $0x80] sm:$0xff] %vm363, %v5395
        %5428 = vst.msk [vmem:[%s325 + $0x88] sm:$0xff] %vm363, %v5396
        %5429 = vst.msk [vmem:[%s325 + $0x90] sm:$0xff] %vm363, %v5397
        %5430 = vst.msk [vmem:[%s325 + $0x98] sm:$0xff] %vm363, %v5398
        %5431 = vst.msk [vmem:[%s325 + $0xa0] sm:$0xff] %vm363, %v5399
        %5432 = vst.msk [vmem:[%s325 + $0xa8] sm:$0xff] %vm363, %v5400
        %5433 = vst.msk [vmem:[%s325 + $0xb0] sm:$0xff] %vm363, %v5401
        %5434 = vst.msk [vmem:[%s325 + $0xb8] sm:$0xff] %vm363, %v5402
        %5435 = vst.msk [vmem:[%s325 + $0xc0] sm:$0xff] %vm363, %v5403
        %5436 = vst.msk [vmem:[%s325 + $0xc8] sm:$0xff] %vm363, %v5404
        %5437 = vst.msk [vmem:[%s325 + $0xd0] sm:$0xff] %vm363, %v5405
        %5438 = vst.msk [vmem:[%s325 + $0xd8] sm:$0xff] %vm363, %v5406
        %5439 = vst.msk [vmem:[%s325 + $0xe0] sm:$0xff] %vm363, %v5407
        %5440 = vst.msk [vmem:[%s325 + $0xe8] sm:$0xff] %vm363, %v5408
        %5441 = vst.msk [vmem:[%s325 + $0xf0] sm:$0xff] %vm363, %v5409
        %5442 = vst.msk [vmem:[%s325 + $0xf8] sm:$0xff] %vm363, %v5410
        %s5443 = sand.u32 %s225, 1
        %s5444 = scalar_lea.sflag [#allocation4], %s5443
        %s5445 = sand.u32 %s225, 1
        %s5446 = smul.addr %s5445, 256
        %s5447 = scalar_lea.vmem [#allocation3], %s5446
        // Predicated region
        $region57: #{rcab_forward.1} parent=55 // pred_check
          %p5448 = pneg %p235
        $region58: #{rcab_forward.1} parent=55 // pred_check_branch
          %5450 = sbr.rel (%p5448) target = $region60
        $region59: #{rcab_forward.1} parent=55 // pred_region
          %s5452 = ssub.s32 4096, 4096
          %5453 = vsyncadd %s5444, %s5452
          %s5454 = smul.addr %s23, 32
          %s5455 = smul.addr %s5454, 128
          %s5456 = scalar_lea.hbm %s9, %s5455
          %s5457 = sshll.u32 %s5447, 4
          %s5458 = int_to_ptr.vmem [resolvable:$true] %s5457
          %5463 = dma.vmem_to_hbm [thread:$0]  %s5458, 4096, %s5456, %s5444, 128, 128, 8
        $region60: #{rcab_forward.1} parent=55 // pred_fallthru
          _
      $region56: #{rcab_forward.1} parent=5 // pred_fallthru
        _
      %p5464 = scmp.le.s32.totalorder 2, %s18
      // Predicated region
      $region61: #{rcab_forward.1} parent=5 // pred_check
        %p5465 = pneg %p5464
      $region62: #{rcab_forward.1} parent=5 // pred_check_branch
        %5467 = sbr.rel (%p5465) target = $region64
      $region63: #{rcab_forward.1} parent=5 // pred_region
        %s5468 = ssub.s32 %s18, 2
        // Predicated region
        $region65: #{rcab_forward.1} parent=63 // pred_check
          %p5469 = pneg %p241
        $region66: #{rcab_forward.1} parent=63 // pred_check_branch
          %5471 = sbr.rel (%p5469) target = $region68
        $region67: #{rcab_forward.1} parent=63 // pred_region
          %s5472 = sand.u32 %s226, 1
          %s5473 = scalar_lea.sflag [#allocation4], %s5472
          %s5474 = sand.u32 %s226, 1
          %s5475 = smul.addr %s5474, 256
          %s5476 = scalar_lea.vmem [#allocation3], %s5475
          %5477 = dma.done %s5473, 4096
        $region68: #{rcab_forward.1} parent=63 // pred_fallthru
          _
      $region64: #{rcab_forward.1} parent=5 // pred_fallthru
        _
    $region6: #{rcab_forward.1} parent=1 // loop_footer
      %s22 = sadd.s32 1, %s18
    $region7: #{rcab_forward.1} parent=1 // loop_footer_branch
      %17 = sbr.rel target = $region3
    $region8: #{rcab_forward.1} parent=1 // loop_exit
      _
    %5478 = vsyncpa [#allocation4], 1
    %s5479 = scalar_lea.sflag [#allocation4], 1
    %5480 = vsyncpa %s5479, 1

</llo_original>
